<compile_context>
chip_gen: v6e
topology: v6e:2x2x1
jax: 0.10.0
libtpu: 0.0.40
codegen_flags: <defaults>
</compile_context>

<pallas_src>
import functools

import jax
import jax.numpy as jnp
from jax import lax
from jax.experimental import pallas as pl
from jax.experimental.pallas import tpu as pltpu

N_BLOCKS = 10  # block_type='basic' -> 10 BasicBlocks


def basic_module_kernel(x_ref, w_ref, b_ref, m_ref, o_ref, *,
                        n_layers, lanes, shifts, compute_dtype):
    # x_ref: (1, C, lanes)           input activations (f32)
    # w_ref: (L, 9*C, C)             fused per-tap weights, compute_dtype
    # b_ref: (L, C, 1)               biases, f32
    # m_ref: (9, C, lanes)           per-tap zero-padding validity masks, f32
    # o_ref: (1, C, lanes)           output
    C = x_ref.shape[1]

    x0 = x_ref[0].astype(jnp.float32)      # computed once; reused for residual
    act = x0

    # Fully unrolled layer loop: static w_ref[l]/b_ref[l] indexing, scheduler
    # can hoist the next layer's weight load under this layer's MXU drain.
    for l in range(n_layers):
        act_c = act.astype(compute_dtype)  # cast ONCE per layer (C rows only)

        # Single fused MXU matmul per layer: (9C, C) @ (C, lanes) -> f32.
        y = jnp.dot(w_ref[l], act_c, preferred_element_type=jnp.float32)

        # Tap recombination on the output side (f32 VPU + XLU rolls).
        acc = None
        for t, s in enumerate(shifts):     # 9 taps, unrolled
            y_t = y[t * C:(t + 1) * C, :]
            if s == 0:
                contrib = y_t              # center tap: no shift, always valid
            else:
                contrib = pltpu.roll(y_t, shift=(lanes - s) % lanes,
                                     axis=1) * m_ref[t]
            acc = contrib if acc is None else acc + contrib

        act = jnp.maximum(acc + b_ref[l], 0.0)   # bias + ReLU in f32

    o_ref[0] = (act + x0).astype(o_ref.dtype)    # residual connection


def basic_module(x_nchw, w, b, *, compute_dtype=jnp.bfloat16,
                 images_per_step=None):
    """x_nchw: (N, C, H, W); w: (L, 3, 3, Cin, Cout); b: (L, Cout)."""
    N, C, H, W = x_nchw.shape
    L = w.shape[0]
    HW = H * W

    if images_per_step is None:
        # Lane-batch the latency-bound kernel, but keep >= 2 parallel grid
        # steps when N >= 2 so both TensorCores of a v7x chip get work.
        images_per_step = N // 2 if (N % 2 == 0 and N >= 2) else 1
    G = images_per_step
    assert N % G == 0, "images_per_step must divide the batch"
    steps = N // G
    lanes = G * HW

    # Lane-dense activations: (steps, C, G*HW) — all pixels of the group's G
    # images on the lane axis (multiple of 128 -> unmasked stores).
    x_g = (x_nchw.reshape(steps, G, C, HW)
                 .transpose(0, 2, 1, 3)
                 .reshape(steps, C, lanes))

    # Per-layer fused weights for  y[t*C + co] = sum_ci w[l,kh,kw,ci,co]*act[ci]
    # with t = kh*3 + kw.
    w_stack = (w.reshape(L, 9, C, C)
                 .transpose(0, 1, 3, 2)
                 .reshape(L, 9 * C, C)
                 .astype(compute_dtype))
    b_in = b.reshape(L, C, 1).astype(jnp.float32)

    # Precomputed 3x3 zero-padding validity masks (review item: no iota /
    # div / mod / broadcast chain inside the kernel), tiled across the G
    # images of a step and pre-broadcast over channels.
    pix = jnp.arange(HW)
    hh, ww = pix // W, pix % W
    shifts, masks = [], []
    for dy in (-1, 0, 1):
        for dx in (-1, 0, 1):
            shifts.append(dy * W + dx)
            valid = ((hh + dy >= 0) & (hh + dy < H) &
                     (ww + dx >= 0) & (ww + dx < W))
            masks.append(valid)
    m = jnp.stack(masks).astype(jnp.float32)              # (9, HW)
    m = jnp.tile(m, (1, G))                               # (9, lanes)
    m = jnp.broadcast_to(m[:, None, :], (9, C, lanes))    # (9, C, lanes)

    kernel = functools.partial(basic_module_kernel, n_layers=L, lanes=lanes,
                               shifts=tuple(shifts), compute_dtype=compute_dtype)

    # TODO(synk): for production sizes (large H*W / n_feat), add a "parallel"
    # row-tiled spatial grid axis with a 1-row halo; budget the double-buffered
    # activation blocks against v7x's 64 MiB physical / 32 MiB scoped-default
    # VMEM (set vmem_limit_bytes explicitly) and keep tile_rows*W >= 512 lanes
    # so the ~600-cycle per-step overhead stays small.
    out_g = pl.pallas_call(
        kernel,
        out_shape=jax.ShapeDtypeStruct((steps, C, lanes), x_nchw.dtype),
        grid_spec=pltpu.PrefetchScalarGridSpec(
            num_scalar_prefetch=0,
            grid=(steps,),
            in_specs=[
                pl.BlockSpec((1, C, lanes), lambda n: (n, 0, 0)),
                pl.BlockSpec((L, 9 * C, C), lambda n: (0, 0, 0)),
                pl.BlockSpec((L, C, 1), lambda n: (0, 0, 0)),
                pl.BlockSpec((9, C, lanes), lambda n: (0, 0, 0)),
            ],
            out_specs=pl.BlockSpec((1, C, lanes), lambda n: (n, 0, 0)),
        ),
        compiler_params=pltpu.CompilerParams(
            dimension_semantics=("parallel",)),
    )(x_g, w_stack, b_in, m)

    return (out_g.reshape(steps, C, G, HW)
                 .transpose(0, 2, 1, 3)
                 .reshape(N, C, H, W))


def basic_module_ref(x_nchw, w, b):
    """Pure-JAX reference (XLA conv), matching PyTorch Conv2d semantics."""
    act = x_nchw
    for l in range(w.shape[0]):
        rhs = jnp.transpose(w[l], (3, 2, 0, 1))  # (Cout, Cin, kh, kw)
        act = lax.conv_general_dilated(
            act, rhs, window_strides=(1, 1), padding=((1, 1), (1, 1)),
            dimension_numbers=("NCHW", "OIHW", "NCHW"))
        act = jnp.maximum(act + b[l].reshape(1, -1, 1, 1), 0.0)
    return act + x_nchw


if __name__ == "__main__":
    key = jax.random.PRNGKey(0)
    N, C, H, W = 2, 8, 16, 16          # batch=2, n_feat=8, spatial=16
    L = N_BLOCKS
    kx, kw, kb = jax.random.split(key, 3)

    x = jax.random.normal(kx, (N, C, H, W), jnp.float32)
    w = jax.random.normal(kw, (L, 3, 3, C, C), jnp.float32) / jnp.sqrt(9.0 * C)
    b = 0.01 * jax.random.normal(kb, (L, C), jnp.float32)

    ref = basic_module_ref(x, w, b)

    # 1) f32 MXU operands, one image per grid step: exact-semantics check.
    out_f32 = jax.block_until_ready(
        basic_module(x, w, b, compute_dtype=jnp.float32, images_per_step=1))
    assert out_f32.shape == x.shape
    assert bool(jnp.allclose(out_f32, ref, atol=2e-3, rtol=2e-3)), \
        float(jnp.max(jnp.abs(out_f32 - ref)))

    # 2) f32, lane-batched (both images in one grid step): validates the
    #    cross-image roll/mask semantics flagged in the perf review.
    out_f32_lb = jax.block_until_ready(
        basic_module(x, w, b, compute_dtype=jnp.float32, images_per_step=2))
    assert bool(jnp.allclose(out_f32_lb, ref, atol=2e-3, rtol=2e-3)), \
        float(jnp.max(jnp.abs(out_f32_lb - ref)))

    # 3) default bf16 fast path (2 parallel grid steps -> both v7x TCs busy);
    #    looser tolerance: rounding accumulates over 10 chained convs.
    out_bf16 = jax.block_until_ready(basic_module(x, w, b))
    assert bool(jnp.allclose(out_bf16, ref, atol=5e-2, rtol=5e-2)), \
        float(jnp.max(jnp.abs(out_bf16 - ref)))

    print("KERNEL_OK")
</pallas_src>

<mosaic_0001>
module attributes {stable_mosaic.version = 11 : i64} {
  func.func @basic_module_kernel(%arg0: i32, %arg1: memref<1x8x256xf32, #tpu.memory_space<vmem>>, %arg2: memref<10x72x8xf32, #tpu.memory_space<vmem>>, %arg3: memref<10x8x1xf32, #tpu.memory_space<vmem>>, %arg4: memref<9x8x256xf32, #tpu.memory_space<vmem>>, %arg5: memref<1x8x256xf32, #tpu.memory_space<vmem>>) attributes {dimension_semantics = [#tpu.dimension_semantics<parallel>], iteration_bounds = array<i64: 2>, scalar_prefetch = 0 : i64, scratch_operands = 0 : i64, tpu.core_type = #tpu.core_type<tc>, window_params = [{transform_indices = @transform_0, window_bounds = array<i64: 1, 8, 256>}, {pipeline_mode = #tpu.pipeline_mode<synchronous>, transform_indices = @transform_1, window_bounds = array<i64: 10, 72, 8>}, {pipeline_mode = #tpu.pipeline_mode<synchronous>, transform_indices = @transform_2, window_bounds = array<i64: 10, 8, 1>}, {pipeline_mode = #tpu.pipeline_mode<synchronous>, transform_indices = @transform_3, window_bounds = array<i64: 9, 8, 256>}, {transform_indices = @transform_4, window_bounds = array<i64: 1, 8, 256>}]} {
    %c0 = arith.constant 0 : index
    %c0_0 = arith.constant 0 : index
    %c0_1 = arith.constant 0 : index
    %0 = vector.load %arg1[%c0, %c0_0, %c0_1] : memref<1x8x256xf32, #tpu.memory_space<vmem>>, vector<1x8x256xf32>
    %1 = vector.shape_cast %0 : vector<1x8x256xf32> to vector<8x256xf32>
    %c0_2 = arith.constant 0 : index
    %c0_3 = arith.constant 0 : index
    %c0_4 = arith.constant 0 : index
    %2 = vector.load %arg2[%c0_2, %c0_3, %c0_4] : memref<10x72x8xf32, #tpu.memory_space<vmem>>, vector<1x72x8xf32>
    %3 = vector.shape_cast %2 : vector<1x72x8xf32> to vector<72x8xf32>
    %cst = arith.constant dense<0.000000e+00> : vector<72x256xf32>
    %4 = tpu.matmul %3, %1, %cst {dimension_numbers = #tpu.dot_dimension_numbers<[1], [0], [0], [1], [0, 0, 1, 1], [], []>} : vector<72x8xf32>, vector<8x256xf32>, vector<72x256xf32> -> vector<72x256xf32>
    %5 = vector.extract_strided_slice %4 {offsets = [0, 0], sizes = [8, 256], strides = [1, 1]} : vector<72x256xf32> to vector<8x256xf32>
    %c17_i32 = arith.constant 17 : i32
    %6 = tpu.dynamic_rotate %5 by %c17_i32 dim 1 : vector<8x256xf32>, i32 -> vector<8x256xf32>
    %c0_5 = arith.constant 0 : index
    %c0_6 = arith.constant 0 : index
    %c0_7 = arith.constant 0 : index
    %7 = vector.load %arg4[%c0_5, %c0_6, %c0_7] : memref<9x8x256xf32, #tpu.memory_space<vmem>>, vector<1x8x256xf32>
    %8 = vector.shape_cast %7 : vector<1x8x256xf32> to vector<8x256xf32>
    %9 = arith.mulf %6, %8 : vector<8x256xf32>
    %10 = vector.extract_strided_slice %4 {offsets = [8, 0], sizes = [8, 256], strides = [1, 1]} : vector<72x256xf32> to vector<8x256xf32>
    %c16_i32 = arith.constant 16 : i32
    %11 = tpu.dynamic_rotate %10 by %c16_i32 dim 1 : vector<8x256xf32>, i32 -> vector<8x256xf32>
    %c1 = arith.constant 1 : index
    %c0_8 = arith.constant 0 : index
    %c0_9 = arith.constant 0 : index
    %12 = vector.load %arg4[%c1, %c0_8, %c0_9] : memref<9x8x256xf32, #tpu.memory_space<vmem>>, vector<1x8x256xf32>
    %13 = vector.shape_cast %12 : vector<1x8x256xf32> to vector<8x256xf32>
    %14 = arith.mulf %11, %13 : vector<8x256xf32>
    %15 = arith.addf %9, %14 : vector<8x256xf32>
    %16 = vector.extract_strided_slice %4 {offsets = [16, 0], sizes = [8, 256], strides = [1, 1]} : vector<72x256xf32> to vector<8x256xf32>
    %c15_i32 = arith.constant 15 : i32
    %17 = tpu.dynamic_rotate %16 by %c15_i32 dim 1 : vector<8x256xf32>, i32 -> vector<8x256xf32>
    %c2 = arith.constant 2 : index
    %c0_10 = arith.constant 0 : index
    %c0_11 = arith.constant 0 : index
    %18 = vector.load %arg4[%c2, %c0_10, %c0_11] : memref<9x8x256xf32, #tpu.memory_space<vmem>>, vector<1x8x256xf32>
    %19 = vector.shape_cast %18 : vector<1x8x256xf32> to vector<8x256xf32>
    %20 = arith.mulf %17, %19 : vector<8x256xf32>
    %21 = arith.addf %15, %20 : vector<8x256xf32>
    %22 = vector.extract_strided_slice %4 {offsets = [24, 0], sizes = [8, 256], strides = [1, 1]} : vector<72x256xf32> to vector<8x256xf32>
    %c1_i32 = arith.constant 1 : i32
    %23 = tpu.dynamic_rotate %22 by %c1_i32 dim 1 : vector<8x256xf32>, i32 -> vector<8x256xf32>
    %c3 = arith.constant 3 : index
    %c0_12 = arith.constant 0 : index
    %c0_13 = arith.constant 0 : index
    %24 = vector.load %arg4[%c3, %c0_12, %c0_13] : memref<9x8x256xf32, #tpu.memory_space<vmem>>, vector<1x8x256xf32>
    %25 = vector.shape_cast %24 : vector<1x8x256xf32> to vector<8x256xf32>
    %26 = arith.mulf %23, %25 : vector<8x256xf32>
    %27 = arith.addf %21, %26 : vector<8x256xf32>
    %28 = vector.extract_strided_slice %4 {offsets = [32, 0], sizes = [8, 256], strides = [1, 1]} : vector<72x256xf32> to vector<8x256xf32>
    %29 = arith.addf %27, %28 : vector<8x256xf32>
    %30 = vector.extract_strided_slice %4 {offsets = [40, 0], sizes = [8, 256], strides = [1, 1]} : vector<72x256xf32> to vector<8x256xf32>
    %c255_i32 = arith.constant 255 : i32
    %31 = tpu.dynamic_rotate %30 by %c255_i32 dim 1 : vector<8x256xf32>, i32 -> vector<8x256xf32>
    %c5 = arith.constant 5 : index
    %c0_14 = arith.constant 0 : index
    %c0_15 = arith.constant 0 : index
    %32 = vector.load %arg4[%c5, %c0_14, %c0_15] : memref<9x8x256xf32, #tpu.memory_space<vmem>>, vector<1x8x256xf32>
    %33 = vector.shape_cast %32 : vector<1x8x256xf32> to vector<8x256xf32>
    %34 = arith.mulf %31, %33 : vector<8x256xf32>
    %35 = arith.addf %29, %34 : vector<8x256xf32>
    %36 = vector.extract_strided_slice %4 {offsets = [48, 0], sizes = [8, 256], strides = [1, 1]} : vector<72x256xf32> to vector<8x256xf32>
    %c241_i32 = arith.constant 241 : i32
    %37 = tpu.dynamic_rotate %36 by %c241_i32 dim 1 : vector<8x256xf32>, i32 -> vector<8x256xf32>
    %c6 = arith.constant 6 : index
    %c0_16 = arith.constant 0 : index
    %c0_17 = arith.constant 0 : index
    %38 = vector.load %arg4[%c6, %c0_16, %c0_17] : memref<9x8x256xf32, #tpu.memory_space<vmem>>, vector<1x8x256xf32>
    %39 = vector.shape_cast %38 : vector<1x8x256xf32> to vector<8x256xf32>
    %40 = arith.mulf %37, %39 : vector<8x256xf32>
    %41 = arith.addf %35, %40 : vector<8x256xf32>
    %42 = vector.extract_strided_slice %4 {offsets = [56, 0], sizes = [8, 256], strides = [1, 1]} : vector<72x256xf32> to vector<8x256xf32>
    %c240_i32 = arith.constant 240 : i32
    %43 = tpu.dynamic_rotate %42 by %c240_i32 dim 1 : vector<8x256xf32>, i32 -> vector<8x256xf32>
    %c7 = arith.constant 7 : index
    %c0_18 = arith.constant 0 : index
    %c0_19 = arith.constant 0 : index
    %44 = vector.load %arg4[%c7, %c0_18, %c0_19] : memref<9x8x256xf32, #tpu.memory_space<vmem>>, vector<1x8x256xf32>
    %45 = vector.shape_cast %44 : vector<1x8x256xf32> to vector<8x256xf32>
    %46 = arith.mulf %43, %45 : vector<8x256xf32>
    %47 = arith.addf %41, %46 : vector<8x256xf32>
    %48 = vector.extract_strided_slice %4 {offsets = [64, 0], sizes = [8, 256], strides = [1, 1]} : vector<72x256xf32> to vector<8x256xf32>
    %c239_i32 = arith.constant 239 : i32
    %49 = tpu.dynamic_rotate %48 by %c239_i32 dim 1 : vector<8x256xf32>, i32 -> vector<8x256xf32>
    %c8 = arith.constant 8 : index
    %c0_20 = arith.constant 0 : index
    %c0_21 = arith.constant 0 : index
    %50 = vector.load %arg4[%c8, %c0_20, %c0_21] : memref<9x8x256xf32, #tpu.memory_space<vmem>>, vector<1x8x256xf32>
    %51 = vector.shape_cast %50 : vector<1x8x256xf32> to vector<8x256xf32>
    %52 = arith.mulf %49, %51 : vector<8x256xf32>
    %53 = arith.addf %47, %52 : vector<8x256xf32>
    %c0_22 = arith.constant 0 : index
    %c0_23 = arith.constant 0 : index
    %c0_24 = arith.constant 0 : index
    %54 = vector.load %arg3[%c0_22, %c0_23, %c0_24] : memref<10x8x1xf32, #tpu.memory_space<vmem>>, vector<1x8x1xf32>
    %55 = vector.shape_cast %54 : vector<1x8x1xf32> to vector<8x1xf32>
    %56 = vector.broadcast %55 : vector<8x1xf32> to vector<8x256xf32>
    %57 = arith.addf %53, %56 : vector<8x256xf32>
    %cst_25 = arith.constant 0.000000e+00 : f32
    %58 = vector.broadcast %cst_25 : f32 to vector<8x256xf32>
    %59 = arith.maximumf %57, %58 : vector<8x256xf32>
    %c1_26 = arith.constant 1 : index
    %c0_27 = arith.constant 0 : index
    %c0_28 = arith.constant 0 : index
    %60 = vector.load %arg2[%c1_26, %c0_27, %c0_28] : memref<10x72x8xf32, #tpu.memory_space<vmem>>, vector<1x72x8xf32>
    %61 = vector.shape_cast %60 : vector<1x72x8xf32> to vector<72x8xf32>
    %cst_29 = arith.constant dense<0.000000e+00> : vector<72x256xf32>
    %62 = tpu.matmul %61, %59, %cst_29 {dimension_numbers = #tpu.dot_dimension_numbers<[1], [0], [0], [1], [0, 0, 1, 1], [], []>} : vector<72x8xf32>, vector<8x256xf32>, vector<72x256xf32> -> vector<72x256xf32>
    %63 = vector.extract_strided_slice %62 {offsets = [0, 0], sizes = [8, 256], strides = [1, 1]} : vector<72x256xf32> to vector<8x256xf32>
    %c17_i32_30 = arith.constant 17 : i32
    %64 = tpu.dynamic_rotate %63 by %c17_i32_30 dim 1 : vector<8x256xf32>, i32 -> vector<8x256xf32>
    %c0_31 = arith.constant 0 : index
    %c0_32 = arith.constant 0 : index
    %c0_33 = arith.constant 0 : index
    %65 = vector.load %arg4[%c0_31, %c0_32, %c0_33] : memref<9x8x256xf32, #tpu.memory_space<vmem>>, vector<1x8x256xf32>
    %66 = vector.shape_cast %65 : vector<1x8x256xf32> to vector<8x256xf32>
    %67 = arith.mulf %64, %66 : vector<8x256xf32>
    %68 = vector.extract_strided_slice %62 {offsets = [8, 0], sizes = [8, 256], strides = [1, 1]} : vector<72x256xf32> to vector<8x256xf32>
    %c16_i32_34 = arith.constant 16 : i32
    %69 = tpu.dynamic_rotate %68 by %c16_i32_34 dim 1 : vector<8x256xf32>, i32 -> vector<8x256xf32>
    %c1_35 = arith.constant 1 : index
    %c0_36 = arith.constant 0 : index
    %c0_37 = arith.constant 0 : index
    %70 = vector.load %arg4[%c1_35, %c0_36, %c0_37] : memref<9x8x256xf32, #tpu.memory_space<vmem>>, vector<1x8x256xf32>
    %71 = vector.shape_cast %70 : vector<1x8x256xf32> to vector<8x256xf32>
    %72 = arith.mulf %69, %71 : vector<8x256xf32>
    %73 = arith.addf %67, %72 : vector<8x256xf32>
    %74 = vector.extract_strided_slice %62 {offsets = [16, 0], sizes = [8, 256], strides = [1, 1]} : vector<72x256xf32> to vector<8x256xf32>
    %c15_i32_38 = arith.constant 15 : i32
    %75 = tpu.dynamic_rotate %74 by %c15_i32_38 dim 1 : vector<8x256xf32>, i32 -> vector<8x256xf32>
    %c2_39 = arith.constant 2 : index
    %c0_40 = arith.constant 0 : index
    %c0_41 = arith.constant 0 : index
    %76 = vector.load %arg4[%c2_39, %c0_40, %c0_41] : memref<9x8x256xf32, #tpu.memory_space<vmem>>, vector<1x8x256xf32>
    %77 = vector.shape_cast %76 : vector<1x8x256xf32> to vector<8x256xf32>
    %78 = arith.mulf %75, %77 : vector<8x256xf32>
    %79 = arith.addf %73, %78 : vector<8x256xf32>
    %80 = vector.extract_strided_slice %62 {offsets = [24, 0], sizes = [8, 256], strides = [1, 1]} : vector<72x256xf32> to vector<8x256xf32>
    %c1_i32_42 = arith.constant 1 : i32
    %81 = tpu.dynamic_rotate %80 by %c1_i32_42 dim 1 : vector<8x256xf32>, i32 -> vector<8x256xf32>
    %c3_43 = arith.constant 3 : index
    %c0_44 = arith.constant 0 : index
    %c0_45 = arith.constant 0 : index
    %82 = vector.load %arg4[%c3_43, %c0_44, %c0_45] : memref<9x8x256xf32, #tpu.memory_space<vmem>>, vector<1x8x256xf32>
    %83 = vector.shape_cast %82 : vector<1x8x256xf32> to vector<8x256xf32>
    %84 = arith.mulf %81, %83 : vector<8x256xf32>
    %85 = arith.addf %79, %84 : vector<8x256xf32>
    %86 = vector.extract_strided_slice %62 {offsets = [32, 0], sizes = [8, 256], strides = [1, 1]} : vector<72x256xf32> to vector<8x256xf32>
    %87 = arith.addf %85, %86 : vector<8x256xf32>
    %88 = vector.extract_strided_slice %62 {offsets = [40, 0], sizes = [8, 256], strides = [1, 1]} : vector<72x256xf32> to vector<8x256xf32>
    %c255_i32_46 = arith.constant 255 : i32
    %89 = tpu.dynamic_rotate %88 by %c255_i32_46 dim 1 : vector<8x256xf32>, i32 -> vector<8x256xf32>
    %c5_47 = arith.constant 5 : index
    %c0_48 = arith.constant 0 : index
    %c0_49 = arith.constant 0 : index
    %90 = vector.load %arg4[%c5_47, %c0_48, %c0_49] : memref<9x8x256xf32, #tpu.memory_space<vmem>>, vector<1x8x256xf32>
    %91 = vector.shape_cast %90 : vector<1x8x256xf32> to vector<8x256xf32>
    %92 = arith.mulf %89, %91 : vector<8x256xf32>
    %93 = arith.addf %87, %92 : vector<8x256xf32>
    %94 = vector.extract_strided_slice %62 {offsets = [48, 0], sizes = [8, 256], strides = [1, 1]} : vector<72x256xf32> to vector<8x256xf32>
    %c241_i32_50 = arith.constant 241 : i32
    %95 = tpu.dynamic_rotate %94 by %c241_i32_50 dim 1 : vector<8x256xf32>, i32 -> vector<8x256xf32>
    %c6_51 = arith.constant 6 : index
    %c0_52 = arith.constant 0 : index
    %c0_53 = arith.constant 0 : index
    %96 = vector.load %arg4[%c6_51, %c0_52, %c0_53] : memref<9x8x256xf32, #tpu.memory_space<vmem>>, vector<1x8x256xf32>
    %97 = vector.shape_cast %96 : vector<1x8x256xf32> to vector<8x256xf32>
    %98 = arith.mulf %95, %97 : vector<8x256xf32>
    %99 = arith.addf %93, %98 : vector<8x256xf32>
    %100 = vector.extract_strided_slice %62 {offsets = [56, 0], sizes = [8, 256], strides = [1, 1]} : vector<72x256xf32> to vector<8x256xf32>
    %c240_i32_54 = arith.constant 240 : i32
    %101 = tpu.dynamic_rotate %100 by %c240_i32_54 dim 1 : vector<8x256xf32>, i32 -> vector<8x256xf32>
    %c7_55 = arith.constant 7 : index
    %c0_56 = arith.constant 0 : index
    %c0_57 = arith.constant 0 : index
    %102 = vector.load %arg4[%c7_55, %c0_56, %c0_57] : memref<9x8x256xf32, #tpu.memory_space<vmem>>, vector<1x8x256xf32>
    %103 = vector.shape_cast %102 : vector<1x8x256xf32> to vector<8x256xf32>
    %104 = arith.mulf %101, %103 : vector<8x256xf32>
    %105 = arith.addf %99, %104 : vector<8x256xf32>
    %106 = vector.extract_strided_slice %62 {offsets = [64, 0], sizes = [8, 256], strides = [1, 1]} : vector<72x256xf32> to vector<8x256xf32>
    %c239_i32_58 = arith.constant 239 : i32
    %107 = tpu.dynamic_rotate %106 by %c239_i32_58 dim 1 : vector<8x256xf32>, i32 -> vector<8x256xf32>
    %c8_59 = arith.constant 8 : index
    %c0_60 = arith.constant 0 : index
    %c0_61 = arith.constant 0 : index
    %108 = vector.load %arg4[%c8_59, %c0_60, %c0_61] : memref<9x8x256xf32, #tpu.memory_space<vmem>>, vector<1x8x256xf32>
    %109 = vector.shape_cast %108 : vector<1x8x256xf32> to vector<8x256xf32>
    %110 = arith.mulf %107, %109 : vector<8x256xf32>
    %111 = arith.addf %105, %110 : vector<8x256xf32>
    %c1_62 = arith.constant 1 : index
    %c0_63 = arith.constant 0 : index
    %c0_64 = arith.constant 0 : index
    %112 = vector.load %arg3[%c1_62, %c0_63, %c0_64] : memref<10x8x1xf32, #tpu.memory_space<vmem>>, vector<1x8x1xf32>
    %113 = vector.shape_cast %112 : vector<1x8x1xf32> to vector<8x1xf32>
    %114 = vector.broadcast %113 : vector<8x1xf32> to vector<8x256xf32>
    %115 = arith.addf %111, %114 : vector<8x256xf32>
    %cst_65 = arith.constant 0.000000e+00 : f32
    %116 = vector.broadcast %cst_65 : f32 to vector<8x256xf32>
    %117 = arith.maximumf %115, %116 : vector<8x256xf32>
    %c2_66 = arith.constant 2 : index
    %c0_67 = arith.constant 0 : index
    %c0_68 = arith.constant 0 : index
    %118 = vector.load %arg2[%c2_66, %c0_67, %c0_68] : memref<10x72x8xf32, #tpu.memory_space<vmem>>, vector<1x72x8xf32>
    %119 = vector.shape_cast %118 : vector<1x72x8xf32> to vector<72x8xf32>
    %cst_69 = arith.constant dense<0.000000e+00> : vector<72x256xf32>
    %120 = tpu.matmul %119, %117, %cst_69 {dimension_numbers = #tpu.dot_dimension_numbers<[1], [0], [0], [1], [0, 0, 1, 1], [], []>} : vector<72x8xf32>, vector<8x256xf32>, vector<72x256xf32> -> vector<72x256xf32>
    %121 = vector.extract_strided_slice %120 {offsets = [0, 0], sizes = [8, 256], strides = [1, 1]} : vector<72x256xf32> to vector<8x256xf32>
    %c17_i32_70 = arith.constant 17 : i32
    %122 = tpu.dynamic_rotate %121 by %c17_i32_70 dim 1 : vector<8x256xf32>, i32 -> vector<8x256xf32>
    %c0_71 = arith.constant 0 : index
    %c0_72 = arith.constant 0 : index
    %c0_73 = arith.constant 0 : index
    %123 = vector.load %arg4[%c0_71, %c0_72, %c0_73] : memref<9x8x256xf32, #tpu.memory_space<vmem>>, vector<1x8x256xf32>
    %124 = vector.shape_cast %123 : vector<1x8x256xf32> to vector<8x256xf32>
    %125 = arith.mulf %122, %124 : vector<8x256xf32>
    %126 = vector.extract_strided_slice %120 {offsets = [8, 0], sizes = [8, 256], strides = [1, 1]} : vector<72x256xf32> to vector<8x256xf32>
    %c16_i32_74 = arith.constant 16 : i32
    %127 = tpu.dynamic_rotate %126 by %c16_i32_74 dim 1 : vector<8x256xf32>, i32 -> vector<8x256xf32>
    %c1_75 = arith.constant 1 : index
    %c0_76 = arith.constant 0 : index
    %c0_77 = arith.constant 0 : index
    %128 = vector.load %arg4[%c1_75, %c0_76, %c0_77] : memref<9x8x256xf32, #tpu.memory_space<vmem>>, vector<1x8x256xf32>
    %129 = vector.shape_cast %128 : vector<1x8x256xf32> to vector<8x256xf32>
    %130 = arith.mulf %127, %129 : vector<8x256xf32>
    %131 = arith.addf %125, %130 : vector<8x256xf32>
    %132 = vector.extract_strided_slice %120 {offsets = [16, 0], sizes = [8, 256], strides = [1, 1]} : vector<72x256xf32> to vector<8x256xf32>
    %c15_i32_78 = arith.constant 15 : i32
    %133 = tpu.dynamic_rotate %132 by %c15_i32_78 dim 1 : vector<8x256xf32>, i32 -> vector<8x256xf32>
    %c2_79 = arith.constant 2 : index
    %c0_80 = arith.constant 0 : index
    %c0_81 = arith.constant 0 : index
    %134 = vector.load %arg4[%c2_79, %c0_80, %c0_81] : memref<9x8x256xf32, #tpu.memory_space<vmem>>, vector<1x8x256xf32>
    %135 = vector.shape_cast %134 : vector<1x8x256xf32> to vector<8x256xf32>
    %136 = arith.mulf %133, %135 : vector<8x256xf32>
    %137 = arith.addf %131, %136 : vector<8x256xf32>
    %138 = vector.extract_strided_slice %120 {offsets = [24, 0], sizes = [8, 256], strides = [1, 1]} : vector<72x256xf32> to vector<8x256xf32>
    %c1_i32_82 = arith.constant 1 : i32
    %139 = tpu.dynamic_rotate %138 by %c1_i32_82 dim 1 : vector<8x256xf32>, i32 -> vector<8x256xf32>
    %c3_83 = arith.constant 3 : index
    %c0_84 = arith.constant 0 : index
    %c0_85 = arith.constant 0 : index
    %140 = vector.load %arg4[%c3_83, %c0_84, %c0_85] : memref<9x8x256xf32, #tpu.memory_space<vmem>>, vector<1x8x256xf32>
    %141 = vector.shape_cast %140 : vector<1x8x256xf32> to vector<8x256xf32>
    %142 = arith.mulf %139, %141 : vector<8x256xf32>
    %143 = arith.addf %137, %142 : vector<8x256xf32>
    %144 = vector.extract_strided_slice %120 {offsets = [32, 0], sizes = [8, 256], strides = [1, 1]} : vector<72x256xf32> to vector<8x256xf32>
    %145 = arith.addf %143, %144 : vector<8x256xf32>
    %146 = vector.extract_strided_slice %120 {offsets = [40, 0], sizes = [8, 256], strides = [1, 1]} : vector<72x256xf32> to vector<8x256xf32>
    %c255_i32_86 = arith.constant 255 : i32
    %147 = tpu.dynamic_rotate %146 by %c255_i32_86 dim 1 : vector<8x256xf32>, i32 -> vector<8x256xf32>
    %c5_87 = arith.constant 5 : index
    %c0_88 = arith.constant 0 : index
    %c0_89 = arith.constant 0 : index
    %148 = vector.load %arg4[%c5_87, %c0_88, %c0_89] : memref<9x8x256xf32, #tpu.memory_space<vmem>>, vector<1x8x256xf32>
    %149 = vector.shape_cast %148 : vector<1x8x256xf32> to vector<8x256xf32>
    %150 = arith.mulf %147, %149 : vector<8x256xf32>
    %151 = arith.addf %145, %150 : vector<8x256xf32>
    %152 = vector.extract_strided_slice %120 {offsets = [48, 0], sizes = [8, 256], strides = [1, 1]} : vector<72x256xf32> to vector<8x256xf32>
    %c241_i32_90 = arith.constant 241 : i32
    %153 = tpu.dynamic_rotate %152 by %c241_i32_90 dim 1 : vector<8x256xf32>, i32 -> vector<8x256xf32>
    %c6_91 = arith.constant 6 : index
    %c0_92 = arith.constant 0 : index
    %c0_93 = arith.constant 0 : index
    %154 = vector.load %arg4[%c6_91, %c0_92, %c0_93] : memref<9x8x256xf32, #tpu.memory_space<vmem>>, vector<1x8x256xf32>
    %155 = vector.shape_cast %154 : vector<1x8x256xf32> to vector<8x256xf32>
    %156 = arith.mulf %153, %155 : vector<8x256xf32>
    %157 = arith.addf %151, %156 : vector<8x256xf32>
    %158 = vector.extract_strided_slice %120 {offsets = [56, 0], sizes = [8, 256], strides = [1, 1]} : vector<72x256xf32> to vector<8x256xf32>
    %c240_i32_94 = arith.constant 240 : i32
    %159 = tpu.dynamic_rotate %158 by %c240_i32_94 dim 1 : vector<8x256xf32>, i32 -> vector<8x256xf32>
    %c7_95 = arith.constant 7 : index
    %c0_96 = arith.constant 0 : index
    %c0_97 = arith.constant 0 : index
    %160 = vector.load %arg4[%c7_95, %c0_96, %c0_97] : memref<9x8x256xf32, #tpu.memory_space<vmem>>, vector<1x8x256xf32>
    %161 = vector.shape_cast %160 : vector<1x8x256xf32> to vector<8x256xf32>
    %162 = arith.mulf %159, %161 : vector<8x256xf32>
    %163 = arith.addf %157, %162 : vector<8x256xf32>
    %164 = vector.extract_strided_slice %120 {offsets = [64, 0], sizes = [8, 256], strides = [1, 1]} : vector<72x256xf32> to vector<8x256xf32>
    %c239_i32_98 = arith.constant 239 : i32
    %165 = tpu.dynamic_rotate %164 by %c239_i32_98 dim 1 : vector<8x256xf32>, i32 -> vector<8x256xf32>
    %c8_99 = arith.constant 8 : index
    %c0_100 = arith.constant 0 : index
    %c0_101 = arith.constant 0 : index
    %166 = vector.load %arg4[%c8_99, %c0_100, %c0_101] : memref<9x8x256xf32, #tpu.memory_space<vmem>>, vector<1x8x256xf32>
    %167 = vector.shape_cast %166 : vector<1x8x256xf32> to vector<8x256xf32>
    %168 = arith.mulf %165, %167 : vector<8x256xf32>
    %169 = arith.addf %163, %168 : vector<8x256xf32>
    %c2_102 = arith.constant 2 : index
    %c0_103 = arith.constant 0 : index
    %c0_104 = arith.constant 0 : index
    %170 = vector.load %arg3[%c2_102, %c0_103, %c0_104] : memref<10x8x1xf32, #tpu.memory_space<vmem>>, vector<1x8x1xf32>
    %171 = vector.shape_cast %170 : vector<1x8x1xf32> to vector<8x1xf32>
    %172 = vector.broadcast %171 : vector<8x1xf32> to vector<8x256xf32>
    %173 = arith.addf %169, %172 : vector<8x256xf32>
    %cst_105 = arith.constant 0.000000e+00 : f32
    %174 = vector.broadcast %cst_105 : f32 to vector<8x256xf32>
    %175 = arith.maximumf %173, %174 : vector<8x256xf32>
    %c3_106 = arith.constant 3 : index
    %c0_107 = arith.constant 0 : index
    %c0_108 = arith.constant 0 : index
    %176 = vector.load %arg2[%c3_106, %c0_107, %c0_108] : memref<10x72x8xf32, #tpu.memory_space<vmem>>, vector<1x72x8xf32>
    %177 = vector.shape_cast %176 : vector<1x72x8xf32> to vector<72x8xf32>
    %cst_109 = arith.constant dense<0.000000e+00> : vector<72x256xf32>
    %178 = tpu.matmul %177, %175, %cst_109 {dimension_numbers = #tpu.dot_dimension_numbers<[1], [0], [0], [1], [0, 0, 1, 1], [], []>} : vector<72x8xf32>, vector<8x256xf32>, vector<72x256xf32> -> vector<72x256xf32>
    %179 = vector.extract_strided_slice %178 {offsets = [0, 0], sizes = [8, 256], strides = [1, 1]} : vector<72x256xf32> to vector<8x256xf32>
    %c17_i32_110 = arith.constant 17 : i32
    %180 = tpu.dynamic_rotate %179 by %c17_i32_110 dim 1 : vector<8x256xf32>, i32 -> vector<8x256xf32>
    %c0_111 = arith.constant 0 : index
    %c0_112 = arith.constant 0 : index
    %c0_113 = arith.constant 0 : index
    %181 = vector.load %arg4[%c0_111, %c0_112, %c0_113] : memref<9x8x256xf32, #tpu.memory_space<vmem>>, vector<1x8x256xf32>
    %182 = vector.shape_cast %181 : vector<1x8x256xf32> to vector<8x256xf32>
    %183 = arith.mulf %180, %182 : vector<8x256xf32>
    %184 = vector.extract_strided_slice %178 {offsets = [8, 0], sizes = [8, 256], strides = [1, 1]} : vector<72x256xf32> to vector<8x256xf32>
    %c16_i32_114 = arith.constant 16 : i32
    %185 = tpu.dynamic_rotate %184 by %c16_i32_114 dim 1 : vector<8x256xf32>, i32 -> vector<8x256xf32>
    %c1_115 = arith.constant 1 : index
    %c0_116 = arith.constant 0 : index
    %c0_117 = arith.constant 0 : index
    %186 = vector.load %arg4[%c1_115, %c0_116, %c0_117] : memref<9x8x256xf32, #tpu.memory_space<vmem>>, vector<1x8x256xf32>
    %187 = vector.shape_cast %186 : vector<1x8x256xf32> to vector<8x256xf32>
    %188 = arith.mulf %185, %187 : vector<8x256xf32>
    %189 = arith.addf %183, %188 : vector<8x256xf32>
    %190 = vector.extract_strided_slice %178 {offsets = [16, 0], sizes = [8, 256], strides = [1, 1]} : vector<72x256xf32> to vector<8x256xf32>
    %c15_i32_118 = arith.constant 15 : i32
    %191 = tpu.dynamic_rotate %190 by %c15_i32_118 dim 1 : vector<8x256xf32>, i32 -> vector<8x256xf32>
    %c2_119 = arith.constant 2 : index
    %c0_120 = arith.constant 0 : index
    %c0_121 = arith.constant 0 : index
    %192 = vector.load %arg4[%c2_119, %c0_120, %c0_121] : memref<9x8x256xf32, #tpu.memory_space<vmem>>, vector<1x8x256xf32>
    %193 = vector.shape_cast %192 : vector<1x8x256xf32> to vector<8x256xf32>
    %194 = arith.mulf %191, %193 : vector<8x256xf32>
    %195 = arith.addf %189, %194 : vector<8x256xf32>
    %196 = vector.extract_strided_slice %178 {offsets = [24, 0], sizes = [8, 256], strides = [1, 1]} : vector<72x256xf32> to vector<8x256xf32>
    %c1_i32_122 = arith.constant 1 : i32
    %197 = tpu.dynamic_rotate %196 by %c1_i32_122 dim 1 : vector<8x256xf32>, i32 -> vector<8x256xf32>
    %c3_123 = arith.constant 3 : index
    %c0_124 = arith.constant 0 : index
    %c0_125 = arith.constant 0 : index
    %198 = vector.load %arg4[%c3_123, %c0_124, %c0_125] : memref<9x8x256xf32, #tpu.memory_space<vmem>>, vector<1x8x256xf32>
    %199 = vector.shape_cast %198 : vector<1x8x256xf32> to vector<8x256xf32>
    %200 = arith.mulf %197, %199 : vector<8x256xf32>
    %201 = arith.addf %195, %200 : vector<8x256xf32>
    %202 = vector.extract_strided_slice %178 {offsets = [32, 0], sizes = [8, 256], strides = [1, 1]} : vector<72x256xf32> to vector<8x256xf32>
    %203 = arith.addf %201, %202 : vector<8x256xf32>
    %204 = vector.extract_strided_slice %178 {offsets = [40, 0], sizes = [8, 256], strides = [1, 1]} : vector<72x256xf32> to vector<8x256xf32>
    %c255_i32_126 = arith.constant 255 : i32
    %205 = tpu.dynamic_rotate %204 by %c255_i32_126 dim 1 : vector<8x256xf32>, i32 -> vector<8x256xf32>
    %c5_127 = arith.constant 5 : index
    %c0_128 = arith.constant 0 : index
    %c0_129 = arith.constant 0 : index
    %206 = vector.load %arg4[%c5_127, %c0_128, %c0_129] : memref<9x8x256xf32, #tpu.memory_space<vmem>>, vector<1x8x256xf32>
    %207 = vector.shape_cast %206 : vector<1x8x256xf32> to vector<8x256xf32>
    %208 = arith.mulf %205, %207 : vector<8x256xf32>
    %209 = arith.addf %203, %208 : vector<8x256xf32>
    %210 = vector.extract_strided_slice %178 {offsets = [48, 0], sizes = [8, 256], strides = [1, 1]} : vector<72x256xf32> to vector<8x256xf32>
    %c241_i32_130 = arith.constant 241 : i32
    %211 = tpu.dynamic_rotate %210 by %c241_i32_130 dim 1 : vector<8x256xf32>, i32 -> vector<8x256xf32>
    %c6_131 = arith.constant 6 : index
    %c0_132 = arith.constant 0 : index
    %c0_133 = arith.constant 0 : index
    %212 = vector.load %arg4[%c6_131, %c0_132, %c0_133] : memref<9x8x256xf32, #tpu.memory_space<vmem>>, vector<1x8x256xf32>
    %213 = vector.shape_cast %212 : vector<1x8x256xf32> to vector<8x256xf32>
    %214 = arith.mulf %211, %213 : vector<8x256xf32>
    %215 = arith.addf %209, %214 : vector<8x256xf32>
    %216 = vector.extract_strided_slice %178 {offsets = [56, 0], sizes = [8, 256], strides = [1, 1]} : vector<72x256xf32> to vector<8x256xf32>
    %c240_i32_134 = arith.constant 240 : i32
    %217 = tpu.dynamic_rotate %216 by %c240_i32_134 dim 1 : vector<8x256xf32>, i32 -> vector<8x256xf32>
    %c7_135 = arith.constant 7 : index
    %c0_136 = arith.constant 0 : index
    %c0_137 = arith.constant 0 : index
    %218 = vector.load %arg4[%c7_135, %c0_136, %c0_137] : memref<9x8x256xf32, #tpu.memory_space<vmem>>, vector<1x8x256xf32>
    %219 = vector.shape_cast %218 : vector<1x8x256xf32> to vector<8x256xf32>
    %220 = arith.mulf %217, %219 : vector<8x256xf32>
    %221 = arith.addf %215, %220 : vector<8x256xf32>
    %222 = vector.extract_strided_slice %178 {offsets = [64, 0], sizes = [8, 256], strides = [1, 1]} : vector<72x256xf32> to vector<8x256xf32>
    %c239_i32_138 = arith.constant 239 : i32
    %223 = tpu.dynamic_rotate %222 by %c239_i32_138 dim 1 : vector<8x256xf32>, i32 -> vector<8x256xf32>
    %c8_139 = arith.constant 8 : index
    %c0_140 = arith.constant 0 : index
    %c0_141 = arith.constant 0 : index
    %224 = vector.load %arg4[%c8_139, %c0_140, %c0_141] : memref<9x8x256xf32, #tpu.memory_space<vmem>>, vector<1x8x256xf32>
    %225 = vector.shape_cast %224 : vector<1x8x256xf32> to vector<8x256xf32>
    %226 = arith.mulf %223, %225 : vector<8x256xf32>
    %227 = arith.addf %221, %226 : vector<8x256xf32>
    %c3_142 = arith.constant 3 : index
    %c0_143 = arith.constant 0 : index
    %c0_144 = arith.constant 0 : index
    %228 = vector.load %arg3[%c3_142, %c0_143, %c0_144] : memref<10x8x1xf32, #tpu.memory_space<vmem>>, vector<1x8x1xf32>
    %229 = vector.shape_cast %228 : vector<1x8x1xf32> to vector<8x1xf32>
    %230 = vector.broadcast %229 : vector<8x1xf32> to vector<8x256xf32>
    %231 = arith.addf %227, %230 : vector<8x256xf32>
    %cst_145 = arith.constant 0.000000e+00 : f32
    %232 = vector.broadcast %cst_145 : f32 to vector<8x256xf32>
    %233 = arith.maximumf %231, %232 : vector<8x256xf32>
    %c4 = arith.constant 4 : index
    %c0_146 = arith.constant 0 : index
    %c0_147 = arith.constant 0 : index
    %234 = vector.load %arg2[%c4, %c0_146, %c0_147] : memref<10x72x8xf32, #tpu.memory_space<vmem>>, vector<1x72x8xf32>
    %235 = vector.shape_cast %234 : vector<1x72x8xf32> to vector<72x8xf32>
    %cst_148 = arith.constant dense<0.000000e+00> : vector<72x256xf32>
    %236 = tpu.matmul %235, %233, %cst_148 {dimension_numbers = #tpu.dot_dimension_numbers<[1], [0], [0], [1], [0, 0, 1, 1], [], []>} : vector<72x8xf32>, vector<8x256xf32>, vector<72x256xf32> -> vector<72x256xf32>
    %237 = vector.extract_strided_slice %236 {offsets = [0, 0], sizes = [8, 256], strides = [1, 1]} : vector<72x256xf32> to vector<8x256xf32>
    %c17_i32_149 = arith.constant 17 : i32
    %238 = tpu.dynamic_rotate %237 by %c17_i32_149 dim 1 : vector<8x256xf32>, i32 -> vector<8x256xf32>
    %c0_150 = arith.constant 0 : index
    %c0_151 = arith.constant 0 : index
    %c0_152 = arith.constant 0 : index
    %239 = vector.load %arg4[%c0_150, %c0_151, %c0_152] : memref<9x8x256xf32, #tpu.memory_space<vmem>>, vector<1x8x256xf32>
    %240 = vector.shape_cast %239 : vector<1x8x256xf32> to vector<8x256xf32>
    %241 = arith.mulf %238, %240 : vector<8x256xf32>
    %242 = vector.extract_strided_slice %236 {offsets = [8, 0], sizes = [8, 256], strides = [1, 1]} : vector<72x256xf32> to vector<8x256xf32>
    %c16_i32_153 = arith.constant 16 : i32
    %243 = tpu.dynamic_rotate %242 by %c16_i32_153 dim 1 : vector<8x256xf32>, i32 -> vector<8x256xf32>
    %c1_154 = arith.constant 1 : index
    %c0_155 = arith.constant 0 : index
    %c0_156 = arith.constant 0 : index
    %244 = vector.load %arg4[%c1_154, %c0_155, %c0_156] : memref<9x8x256xf32, #tpu.memory_space<vmem>>, vector<1x8x256xf32>
    %245 = vector.shape_cast %244 : vector<1x8x256xf32> to vector<8x256xf32>
    %246 = arith.mulf %243, %245 : vector<8x256xf32>
    %247 = arith.addf %241, %246 : vector<8x256xf32>
    %248 = vector.extract_strided_slice %236 {offsets = [16, 0], sizes = [8, 256], strides = [1, 1]} : vector<72x256xf32> to vector<8x256xf32>
    %c15_i32_157 = arith.constant 15 : i32
    %249 = tpu.dynamic_rotate %248 by %c15_i32_157 dim 1 : vector<8x256xf32>, i32 -> vector<8x256xf32>
    %c2_158 = arith.constant 2 : index
    %c0_159 = arith.constant 0 : index
    %c0_160 = arith.constant 0 : index
    %250 = vector.load %arg4[%c2_158, %c0_159, %c0_160] : memref<9x8x256xf32, #tpu.memory_space<vmem>>, vector<1x8x256xf32>
    %251 = vector.shape_cast %250 : vector<1x8x256xf32> to vector<8x256xf32>
    %252 = arith.mulf %249, %251 : vector<8x256xf32>
    %253 = arith.addf %247, %252 : vector<8x256xf32>
    %254 = vector.extract_strided_slice %236 {offsets = [24, 0], sizes = [8, 256], strides = [1, 1]} : vector<72x256xf32> to vector<8x256xf32>
    %c1_i32_161 = arith.constant 1 : i32
    %255 = tpu.dynamic_rotate %254 by %c1_i32_161 dim 1 : vector<8x256xf32>, i32 -> vector<8x256xf32>
    %c3_162 = arith.constant 3 : index
    %c0_163 = arith.constant 0 : index
    %c0_164 = arith.constant 0 : index
    %256 = vector.load %arg4[%c3_162, %c0_163, %c0_164] : memref<9x8x256xf32, #tpu.memory_space<vmem>>, vector<1x8x256xf32>
    %257 = vector.shape_cast %256 : vector<1x8x256xf32> to vector<8x256xf32>
    %258 = arith.mulf %255, %257 : vector<8x256xf32>
    %259 = arith.addf %253, %258 : vector<8x256xf32>
    %260 = vector.extract_strided_slice %236 {offsets = [32, 0], sizes = [8, 256], strides = [1, 1]} : vector<72x256xf32> to vector<8x256xf32>
    %261 = arith.addf %259, %260 : vector<8x256xf32>
    %262 = vector.extract_strided_slice %236 {offsets = [40, 0], sizes = [8, 256], strides = [1, 1]} : vector<72x256xf32> to vector<8x256xf32>
    %c255_i32_165 = arith.constant 255 : i32
    %263 = tpu.dynamic_rotate %262 by %c255_i32_165 dim 1 : vector<8x256xf32>, i32 -> vector<8x256xf32>
    %c5_166 = arith.constant 5 : index
    %c0_167 = arith.constant 0 : index
    %c0_168 = arith.constant 0 : index
    %264 = vector.load %arg4[%c5_166, %c0_167, %c0_168] : memref<9x8x256xf32, #tpu.memory_space<vmem>>, vector<1x8x256xf32>
    %265 = vector.shape_cast %264 : vector<1x8x256xf32> to vector<8x256xf32>
    %266 = arith.mulf %263, %265 : vector<8x256xf32>
    %267 = arith.addf %261, %266 : vector<8x256xf32>
    %268 = vector.extract_strided_slice %236 {offsets = [48, 0], sizes = [8, 256], strides = [1, 1]} : vector<72x256xf32> to vector<8x256xf32>
    %c241_i32_169 = arith.constant 241 : i32
    %269 = tpu.dynamic_rotate %268 by %c241_i32_169 dim 1 : vector<8x256xf32>, i32 -> vector<8x256xf32>
    %c6_170 = arith.constant 6 : index
    %c0_171 = arith.constant 0 : index
    %c0_172 = arith.constant 0 : index
    %270 = vector.load %arg4[%c6_170, %c0_171, %c0_172] : memref<9x8x256xf32, #tpu.memory_space<vmem>>, vector<1x8x256xf32>
    %271 = vector.shape_cast %270 : vector<1x8x256xf32> to vector<8x256xf32>
    %272 = arith.mulf %269, %271 : vector<8x256xf32>
    %273 = arith.addf %267, %272 : vector<8x256xf32>
    %274 = vector.extract_strided_slice %236 {offsets = [56, 0], sizes = [8, 256], strides = [1, 1]} : vector<72x256xf32> to vector<8x256xf32>
    %c240_i32_173 = arith.constant 240 : i32
    %275 = tpu.dynamic_rotate %274 by %c240_i32_173 dim 1 : vector<8x256xf32>, i32 -> vector<8x256xf32>
    %c7_174 = arith.constant 7 : index
    %c0_175 = arith.constant 0 : index
    %c0_176 = arith.constant 0 : index
    %276 = vector.load %arg4[%c7_174, %c0_175, %c0_176] : memref<9x8x256xf32, #tpu.memory_space<vmem>>, vector<1x8x256xf32>
    %277 = vector.shape_cast %276 : vector<1x8x256xf32> to vector<8x256xf32>
    %278 = arith.mulf %275, %277 : vector<8x256xf32>
    %279 = arith.addf %273, %278 : vector<8x256xf32>
    %280 = vector.extract_strided_slice %236 {offsets = [64, 0], sizes = [8, 256], strides = [1, 1]} : vector<72x256xf32> to vector<8x256xf32>
    %c239_i32_177 = arith.constant 239 : i32
    %281 = tpu.dynamic_rotate %280 by %c239_i32_177 dim 1 : vector<8x256xf32>, i32 -> vector<8x256xf32>
    %c8_178 = arith.constant 8 : index
    %c0_179 = arith.constant 0 : index
    %c0_180 = arith.constant 0 : index
    %282 = vector.load %arg4[%c8_178, %c0_179, %c0_180] : memref<9x8x256xf32, #tpu.memory_space<vmem>>, vector<1x8x256xf32>
    %283 = vector.shape_cast %282 : vector<1x8x256xf32> to vector<8x256xf32>
    %284 = arith.mulf %281, %283 : vector<8x256xf32>
    %285 = arith.addf %279, %284 : vector<8x256xf32>
    %c4_181 = arith.constant 4 : index
    %c0_182 = arith.constant 0 : index
    %c0_183 = arith.constant 0 : index
    %286 = vector.load %arg3[%c4_181, %c0_182, %c0_183] : memref<10x8x1xf32, #tpu.memory_space<vmem>>, vector<1x8x1xf32>
    %287 = vector.shape_cast %286 : vector<1x8x1xf32> to vector<8x1xf32>
    %288 = vector.broadcast %287 : vector<8x1xf32> to vector<8x256xf32>
    %289 = arith.addf %285, %288 : vector<8x256xf32>
    %cst_184 = arith.constant 0.000000e+00 : f32
    %290 = vector.broadcast %cst_184 : f32 to vector<8x256xf32>
    %291 = arith.maximumf %289, %290 : vector<8x256xf32>
    %c5_185 = arith.constant 5 : index
    %c0_186 = arith.constant 0 : index
    %c0_187 = arith.constant 0 : index
    %292 = vector.load %arg2[%c5_185, %c0_186, %c0_187] : memref<10x72x8xf32, #tpu.memory_space<vmem>>, vector<1x72x8xf32>
    %293 = vector.shape_cast %292 : vector<1x72x8xf32> to vector<72x8xf32>
    %cst_188 = arith.constant dense<0.000000e+00> : vector<72x256xf32>
    %294 = tpu.matmul %293, %291, %cst_188 {dimension_numbers = #tpu.dot_dimension_numbers<[1], [0], [0], [1], [0, 0, 1, 1], [], []>} : vector<72x8xf32>, vector<8x256xf32>, vector<72x256xf32> -> vector<72x256xf32>
    %295 = vector.extract_strided_slice %294 {offsets = [0, 0], sizes = [8, 256], strides = [1, 1]} : vector<72x256xf32> to vector<8x256xf32>
    %c17_i32_189 = arith.constant 17 : i32
    %296 = tpu.dynamic_rotate %295 by %c17_i32_189 dim 1 : vector<8x256xf32>, i32 -> vector<8x256xf32>
    %c0_190 = arith.constant 0 : index
    %c0_191 = arith.constant 0 : index
    %c0_192 = arith.constant 0 : index
    %297 = vector.load %arg4[%c0_190, %c0_191, %c0_192] : memref<9x8x256xf32, #tpu.memory_space<vmem>>, vector<1x8x256xf32>
    %298 = vector.shape_cast %297 : vector<1x8x256xf32> to vector<8x256xf32>
    %299 = arith.mulf %296, %298 : vector<8x256xf32>
    %300 = vector.extract_strided_slice %294 {offsets = [8, 0], sizes = [8, 256], strides = [1, 1]} : vector<72x256xf32> to vector<8x256xf32>
    %c16_i32_193 = arith.constant 16 : i32
    %301 = tpu.dynamic_rotate %300 by %c16_i32_193 dim 1 : vector<8x256xf32>, i32 -> vector<8x256xf32>
    %c1_194 = arith.constant 1 : index
    %c0_195 = arith.constant 0 : index
    %c0_196 = arith.constant 0 : index
    %302 = vector.load %arg4[%c1_194, %c0_195, %c0_196] : memref<9x8x256xf32, #tpu.memory_space<vmem>>, vector<1x8x256xf32>
    %303 = vector.shape_cast %302 : vector<1x8x256xf32> to vector<8x256xf32>
    %304 = arith.mulf %301, %303 : vector<8x256xf32>
    %305 = arith.addf %299, %304 : vector<8x256xf32>
    %306 = vector.extract_strided_slice %294 {offsets = [16, 0], sizes = [8, 256], strides = [1, 1]} : vector<72x256xf32> to vector<8x256xf32>
    %c15_i32_197 = arith.constant 15 : i32
    %307 = tpu.dynamic_rotate %306 by %c15_i32_197 dim 1 : vector<8x256xf32>, i32 -> vector<8x256xf32>
    %c2_198 = arith.constant 2 : index
    %c0_199 = arith.constant 0 : index
    %c0_200 = arith.constant 0 : index
    %308 = vector.load %arg4[%c2_198, %c0_199, %c0_200] : memref<9x8x256xf32, #tpu.memory_space<vmem>>, vector<1x8x256xf32>
    %309 = vector.shape_cast %308 : vector<1x8x256xf32> to vector<8x256xf32>
    %310 = arith.mulf %307, %309 : vector<8x256xf32>
    %311 = arith.addf %305, %310 : vector<8x256xf32>
    %312 = vector.extract_strided_slice %294 {offsets = [24, 0], sizes = [8, 256], strides = [1, 1]} : vector<72x256xf32> to vector<8x256xf32>
    %c1_i32_201 = arith.constant 1 : i32
    %313 = tpu.dynamic_rotate %312 by %c1_i32_201 dim 1 : vector<8x256xf32>, i32 -> vector<8x256xf32>
    %c3_202 = arith.constant 3 : index
    %c0_203 = arith.constant 0 : index
    %c0_204 = arith.constant 0 : index
    %314 = vector.load %arg4[%c3_202, %c0_203, %c0_204] : memref<9x8x256xf32, #tpu.memory_space<vmem>>, vector<1x8x256xf32>
    %315 = vector.shape_cast %314 : vector<1x8x256xf32> to vector<8x256xf32>
    %316 = arith.mulf %313, %315 : vector<8x256xf32>
    %317 = arith.addf %311, %316 : vector<8x256xf32>
    %318 = vector.extract_strided_slice %294 {offsets = [32, 0], sizes = [8, 256], strides = [1, 1]} : vector<72x256xf32> to vector<8x256xf32>
    %319 = arith.addf %317, %318 : vector<8x256xf32>
    %320 = vector.extract_strided_slice %294 {offsets = [40, 0], sizes = [8, 256], strides = [1, 1]} : vector<72x256xf32> to vector<8x256xf32>
    %c255_i32_205 = arith.constant 255 : i32
    %321 = tpu.dynamic_rotate %320 by %c255_i32_205 dim 1 : vector<8x256xf32>, i32 -> vector<8x256xf32>
    %c5_206 = arith.constant 5 : index
    %c0_207 = arith.constant 0 : index
    %c0_208 = arith.constant 0 : index
    %322 = vector.load %arg4[%c5_206, %c0_207, %c0_208] : memref<9x8x256xf32, #tpu.memory_space<vmem>>, vector<1x8x256xf32>
    %323 = vector.shape_cast %322 : vector<1x8x256xf32> to vector<8x256xf32>
    %324 = arith.mulf %321, %323 : vector<8x256xf32>
    %325 = arith.addf %319, %324 : vector<8x256xf32>
    %326 = vector.extract_strided_slice %294 {offsets = [48, 0], sizes = [8, 256], strides = [1, 1]} : vector<72x256xf32> to vector<8x256xf32>
    %c241_i32_209 = arith.constant 241 : i32
    %327 = tpu.dynamic_rotate %326 by %c241_i32_209 dim 1 : vector<8x256xf32>, i32 -> vector<8x256xf32>
    %c6_210 = arith.constant 6 : index
    %c0_211 = arith.constant 0 : index
    %c0_212 = arith.constant 0 : index
    %328 = vector.load %arg4[%c6_210, %c0_211, %c0_212] : memref<9x8x256xf32, #tpu.memory_space<vmem>>, vector<1x8x256xf32>
    %329 = vector.shape_cast %328 : vector<1x8x256xf32> to vector<8x256xf32>
    %330 = arith.mulf %327, %329 : vector<8x256xf32>
    %331 = arith.addf %325, %330 : vector<8x256xf32>
    %332 = vector.extract_strided_slice %294 {offsets = [56, 0], sizes = [8, 256], strides = [1, 1]} : vector<72x256xf32> to vector<8x256xf32>
    %c240_i32_213 = arith.constant 240 : i32
    %333 = tpu.dynamic_rotate %332 by %c240_i32_213 dim 1 : vector<8x256xf32>, i32 -> vector<8x256xf32>
    %c7_214 = arith.constant 7 : index
    %c0_215 = arith.constant 0 : index
    %c0_216 = arith.constant 0 : index
    %334 = vector.load %arg4[%c7_214, %c0_215, %c0_216] : memref<9x8x256xf32, #tpu.memory_space<vmem>>, vector<1x8x256xf32>
    %335 = vector.shape_cast %334 : vector<1x8x256xf32> to vector<8x256xf32>
    %336 = arith.mulf %333, %335 : vector<8x256xf32>
    %337 = arith.addf %331, %336 : vector<8x256xf32>
    %338 = vector.extract_strided_slice %294 {offsets = [64, 0], sizes = [8, 256], strides = [1, 1]} : vector<72x256xf32> to vector<8x256xf32>
    %c239_i32_217 = arith.constant 239 : i32
    %339 = tpu.dynamic_rotate %338 by %c239_i32_217 dim 1 : vector<8x256xf32>, i32 -> vector<8x256xf32>
    %c8_218 = arith.constant 8 : index
    %c0_219 = arith.constant 0 : index
    %c0_220 = arith.constant 0 : index
    %340 = vector.load %arg4[%c8_218, %c0_219, %c0_220] : memref<9x8x256xf32, #tpu.memory_space<vmem>>, vector<1x8x256xf32>
    %341 = vector.shape_cast %340 : vector<1x8x256xf32> to vector<8x256xf32>
    %342 = arith.mulf %339, %341 : vector<8x256xf32>
    %343 = arith.addf %337, %342 : vector<8x256xf32>
    %c5_221 = arith.constant 5 : index
    %c0_222 = arith.constant 0 : index
    %c0_223 = arith.constant 0 : index
    %344 = vector.load %arg3[%c5_221, %c0_222, %c0_223] : memref<10x8x1xf32, #tpu.memory_space<vmem>>, vector<1x8x1xf32>
    %345 = vector.shape_cast %344 : vector<1x8x1xf32> to vector<8x1xf32>
    %346 = vector.broadcast %345 : vector<8x1xf32> to vector<8x256xf32>
    %347 = arith.addf %343, %346 : vector<8x256xf32>
    %cst_224 = arith.constant 0.000000e+00 : f32
    %348 = vector.broadcast %cst_224 : f32 to vector<8x256xf32>
    %349 = arith.maximumf %347, %348 : vector<8x256xf32>
    %c6_225 = arith.constant 6 : index
    %c0_226 = arith.constant 0 : index
    %c0_227 = arith.constant 0 : index
    %350 = vector.load %arg2[%c6_225, %c0_226, %c0_227] : memref<10x72x8xf32, #tpu.memory_space<vmem>>, vector<1x72x8xf32>
    %351 = vector.shape_cast %350 : vector<1x72x8xf32> to vector<72x8xf32>
    %cst_228 = arith.constant dense<0.000000e+00> : vector<72x256xf32>
    %352 = tpu.matmul %351, %349, %cst_228 {dimension_numbers = #tpu.dot_dimension_numbers<[1], [0], [0], [1], [0, 0, 1, 1], [], []>} : vector<72x8xf32>, vector<8x256xf32>, vector<72x256xf32> -> vector<72x256xf32>
    %353 = vector.extract_strided_slice %352 {offsets = [0, 0], sizes = [8, 256], strides = [1, 1]} : vector<72x256xf32> to vector<8x256xf32>
    %c17_i32_229 = arith.constant 17 : i32
    %354 = tpu.dynamic_rotate %353 by %c17_i32_229 dim 1 : vector<8x256xf32>, i32 -> vector<8x256xf32>
    %c0_230 = arith.constant 0 : index
    %c0_231 = arith.constant 0 : index
    %c0_232 = arith.constant 0 : index
    %355 = vector.load %arg4[%c0_230, %c0_231, %c0_232] : memref<9x8x256xf32, #tpu.memory_space<vmem>>, vector<1x8x256xf32>
    %356 = vector.shape_cast %355 : vector<1x8x256xf32> to vector<8x256xf32>
    %357 = arith.mulf %354, %356 : vector<8x256xf32>
    %358 = vector.extract_strided_slice %352 {offsets = [8, 0], sizes = [8, 256], strides = [1, 1]} : vector<72x256xf32> to vector<8x256xf32>
    %c16_i32_233 = arith.constant 16 : i32
    %359 = tpu.dynamic_rotate %358 by %c16_i32_233 dim 1 : vector<8x256xf32>, i32 -> vector<8x256xf32>
    %c1_234 = arith.constant 1 : index
    %c0_235 = arith.constant 0 : index
    %c0_236 = arith.constant 0 : index
    %360 = vector.load %arg4[%c1_234, %c0_235, %c0_236] : memref<9x8x256xf32, #tpu.memory_space<vmem>>, vector<1x8x256xf32>
    %361 = vector.shape_cast %360 : vector<1x8x256xf32> to vector<8x256xf32>
    %362 = arith.mulf %359, %361 : vector<8x256xf32>
    %363 = arith.addf %357, %362 : vector<8x256xf32>
    %364 = vector.extract_strided_slice %352 {offsets = [16, 0], sizes = [8, 256], strides = [1, 1]} : vector<72x256xf32> to vector<8x256xf32>
    %c15_i32_237 = arith.constant 15 : i32
    %365 = tpu.dynamic_rotate %364 by %c15_i32_237 dim 1 : vector<8x256xf32>, i32 -> vector<8x256xf32>
    %c2_238 = arith.constant 2 : index
    %c0_239 = arith.constant 0 : index
    %c0_240 = arith.constant 0 : index
    %366 = vector.load %arg4[%c2_238, %c0_239, %c0_240] : memref<9x8x256xf32, #tpu.memory_space<vmem>>, vector<1x8x256xf32>
    %367 = vector.shape_cast %366 : vector<1x8x256xf32> to vector<8x256xf32>
    %368 = arith.mulf %365, %367 : vector<8x256xf32>
    %369 = arith.addf %363, %368 : vector<8x256xf32>
    %370 = vector.extract_strided_slice %352 {offsets = [24, 0], sizes = [8, 256], strides = [1, 1]} : vector<72x256xf32> to vector<8x256xf32>
    %c1_i32_241 = arith.constant 1 : i32
    %371 = tpu.dynamic_rotate %370 by %c1_i32_241 dim 1 : vector<8x256xf32>, i32 -> vector<8x256xf32>
    %c3_242 = arith.constant 3 : index
    %c0_243 = arith.constant 0 : index
    %c0_244 = arith.constant 0 : index
    %372 = vector.load %arg4[%c3_242, %c0_243, %c0_244] : memref<9x8x256xf32, #tpu.memory_space<vmem>>, vector<1x8x256xf32>
    %373 = vector.shape_cast %372 : vector<1x8x256xf32> to vector<8x256xf32>
    %374 = arith.mulf %371, %373 : vector<8x256xf32>
    %375 = arith.addf %369, %374 : vector<8x256xf32>
    %376 = vector.extract_strided_slice %352 {offsets = [32, 0], sizes = [8, 256], strides = [1, 1]} : vector<72x256xf32> to vector<8x256xf32>
    %377 = arith.addf %375, %376 : vector<8x256xf32>
    %378 = vector.extract_strided_slice %352 {offsets = [40, 0], sizes = [8, 256], strides = [1, 1]} : vector<72x256xf32> to vector<8x256xf32>
    %c255_i32_245 = arith.constant 255 : i32
    %379 = tpu.dynamic_rotate %378 by %c255_i32_245 dim 1 : vector<8x256xf32>, i32 -> vector<8x256xf32>
    %c5_246 = arith.constant 5 : index
    %c0_247 = arith.constant 0 : index
    %c0_248 = arith.constant 0 : index
    %380 = vector.load %arg4[%c5_246, %c0_247, %c0_248] : memref<9x8x256xf32, #tpu.memory_space<vmem>>, vector<1x8x256xf32>
    %381 = vector.shape_cast %380 : vector<1x8x256xf32> to vector<8x256xf32>
    %382 = arith.mulf %379, %381 : vector<8x256xf32>
    %383 = arith.addf %377, %382 : vector<8x256xf32>
    %384 = vector.extract_strided_slice %352 {offsets = [48, 0], sizes = [8, 256], strides = [1, 1]} : vector<72x256xf32> to vector<8x256xf32>
    %c241_i32_249 = arith.constant 241 : i32
    %385 = tpu.dynamic_rotate %384 by %c241_i32_249 dim 1 : vector<8x256xf32>, i32 -> vector<8x256xf32>
    %c6_250 = arith.constant 6 : index
    %c0_251 = arith.constant 0 : index
    %c0_252 = arith.constant 0 : index
    %386 = vector.load %arg4[%c6_250, %c0_251, %c0_252] : memref<9x8x256xf32, #tpu.memory_space<vmem>>, vector<1x8x256xf32>
    %387 = vector.shape_cast %386 : vector<1x8x256xf32> to vector<8x256xf32>
    %388 = arith.mulf %385, %387 : vector<8x256xf32>
    %389 = arith.addf %383, %388 : vector<8x256xf32>
    %390 = vector.extract_strided_slice %352 {offsets = [56, 0], sizes = [8, 256], strides = [1, 1]} : vector<72x256xf32> to vector<8x256xf32>
    %c240_i32_253 = arith.constant 240 : i32
    %391 = tpu.dynamic_rotate %390 by %c240_i32_253 dim 1 : vector<8x256xf32>, i32 -> vector<8x256xf32>
    %c7_254 = arith.constant 7 : index
    %c0_255 = arith.constant 0 : index
    %c0_256 = arith.constant 0 : index
    %392 = vector.load %arg4[%c7_254, %c0_255, %c0_256] : memref<9x8x256xf32, #tpu.memory_space<vmem>>, vector<1x8x256xf32>
    %393 = vector.shape_cast %392 : vector<1x8x256xf32> to vector<8x256xf32>
    %394 = arith.mulf %391, %393 : vector<8x256xf32>
    %395 = arith.addf %389, %394 : vector<8x256xf32>
    %396 = vector.extract_strided_slice %352 {offsets = [64, 0], sizes = [8, 256], strides = [1, 1]} : vector<72x256xf32> to vector<8x256xf32>
    %c239_i32_257 = arith.constant 239 : i32
    %397 = tpu.dynamic_rotate %396 by %c239_i32_257 dim 1 : vector<8x256xf32>, i32 -> vector<8x256xf32>
    %c8_258 = arith.constant 8 : index
    %c0_259 = arith.constant 0 : index
    %c0_260 = arith.constant 0 : index
    %398 = vector.load %arg4[%c8_258, %c0_259, %c0_260] : memref<9x8x256xf32, #tpu.memory_space<vmem>>, vector<1x8x256xf32>
    %399 = vector.shape_cast %398 : vector<1x8x256xf32> to vector<8x256xf32>
    %400 = arith.mulf %397, %399 : vector<8x256xf32>
    %401 = arith.addf %395, %400 : vector<8x256xf32>
    %c6_261 = arith.constant 6 : index
    %c0_262 = arith.constant 0 : index
    %c0_263 = arith.constant 0 : index
    %402 = vector.load %arg3[%c6_261, %c0_262, %c0_263] : memref<10x8x1xf32, #tpu.memory_space<vmem>>, vector<1x8x1xf32>
    %403 = vector.shape_cast %402 : vector<1x8x1xf32> to vector<8x1xf32>
    %404 = vector.broadcast %403 : vector<8x1xf32> to vector<8x256xf32>
    %405 = arith.addf %401, %404 : vector<8x256xf32>
    %cst_264 = arith.constant 0.000000e+00 : f32
    %406 = vector.broadcast %cst_264 : f32 to vector<8x256xf32>
    %407 = arith.maximumf %405, %406 : vector<8x256xf32>
    %c7_265 = arith.constant 7 : index
    %c0_266 = arith.constant 0 : index
    %c0_267 = arith.constant 0 : index
    %408 = vector.load %arg2[%c7_265, %c0_266, %c0_267] : memref<10x72x8xf32, #tpu.memory_space<vmem>>, vector<1x72x8xf32>
    %409 = vector.shape_cast %408 : vector<1x72x8xf32> to vector<72x8xf32>
    %cst_268 = arith.constant dense<0.000000e+00> : vector<72x256xf32>
    %410 = tpu.matmul %409, %407, %cst_268 {dimension_numbers = #tpu.dot_dimension_numbers<[1], [0], [0], [1], [0, 0, 1, 1], [], []>} : vector<72x8xf32>, vector<8x256xf32>, vector<72x256xf32> -> vector<72x256xf32>
    %411 = vector.extract_strided_slice %410 {offsets = [0, 0], sizes = [8, 256], strides = [1, 1]} : vector<72x256xf32> to vector<8x256xf32>
    %c17_i32_269 = arith.constant 17 : i32
    %412 = tpu.dynamic_rotate %411 by %c17_i32_269 dim 1 : vector<8x256xf32>, i32 -> vector<8x256xf32>
    %c0_270 = arith.constant 0 : index
    %c0_271 = arith.constant 0 : index
    %c0_272 = arith.constant 0 : index
    %413 = vector.load %arg4[%c0_270, %c0_271, %c0_272] : memref<9x8x256xf32, #tpu.memory_space<vmem>>, vector<1x8x256xf32>
    %414 = vector.shape_cast %413 : vector<1x8x256xf32> to vector<8x256xf32>
    %415 = arith.mulf %412, %414 : vector<8x256xf32>
    %416 = vector.extract_strided_slice %410 {offsets = [8, 0], sizes = [8, 256], strides = [1, 1]} : vector<72x256xf32> to vector<8x256xf32>
    %c16_i32_273 = arith.constant 16 : i32
    %417 = tpu.dynamic_rotate %416 by %c16_i32_273 dim 1 : vector<8x256xf32>, i32 -> vector<8x256xf32>
    %c1_274 = arith.constant 1 : index
    %c0_275 = arith.constant 0 : index
    %c0_276 = arith.constant 0 : index
    %418 = vector.load %arg4[%c1_274, %c0_275, %c0_276] : memref<9x8x256xf32, #tpu.memory_space<vmem>>, vector<1x8x256xf32>
    %419 = vector.shape_cast %418 : vector<1x8x256xf32> to vector<8x256xf32>
    %420 = arith.mulf %417, %419 : vector<8x256xf32>
    %421 = arith.addf %415, %420 : vector<8x256xf32>
    %422 = vector.extract_strided_slice %410 {offsets = [16, 0], sizes = [8, 256], strides = [1, 1]} : vector<72x256xf32> to vector<8x256xf32>
    %c15_i32_277 = arith.constant 15 : i32
    %423 = tpu.dynamic_rotate %422 by %c15_i32_277 dim 1 : vector<8x256xf32>, i32 -> vector<8x256xf32>
    %c2_278 = arith.constant 2 : index
    %c0_279 = arith.constant 0 : index
    %c0_280 = arith.constant 0 : index
    %424 = vector.load %arg4[%c2_278, %c0_279, %c0_280] : memref<9x8x256xf32, #tpu.memory_space<vmem>>, vector<1x8x256xf32>
    %425 = vector.shape_cast %424 : vector<1x8x256xf32> to vector<8x256xf32>
    %426 = arith.mulf %423, %425 : vector<8x256xf32>
    %427 = arith.addf %421, %426 : vector<8x256xf32>
    %428 = vector.extract_strided_slice %410 {offsets = [24, 0], sizes = [8, 256], strides = [1, 1]} : vector<72x256xf32> to vector<8x256xf32>
    %c1_i32_281 = arith.constant 1 : i32
    %429 = tpu.dynamic_rotate %428 by %c1_i32_281 dim 1 : vector<8x256xf32>, i32 -> vector<8x256xf32>
    %c3_282 = arith.constant 3 : index
    %c0_283 = arith.constant 0 : index
    %c0_284 = arith.constant 0 : index
    %430 = vector.load %arg4[%c3_282, %c0_283, %c0_284] : memref<9x8x256xf32, #tpu.memory_space<vmem>>, vector<1x8x256xf32>
    %431 = vector.shape_cast %430 : vector<1x8x256xf32> to vector<8x256xf32>
    %432 = arith.mulf %429, %431 : vector<8x256xf32>
    %433 = arith.addf %427, %432 : vector<8x256xf32>
    %434 = vector.extract_strided_slice %410 {offsets = [32, 0], sizes = [8, 256], strides = [1, 1]} : vector<72x256xf32> to vector<8x256xf32>
    %435 = arith.addf %433, %434 : vector<8x256xf32>
    %436 = vector.extract_strided_slice %410 {offsets = [40, 0], sizes = [8, 256], strides = [1, 1]} : vector<72x256xf32> to vector<8x256xf32>
    %c255_i32_285 = arith.constant 255 : i32
    %437 = tpu.dynamic_rotate %436 by %c255_i32_285 dim 1 : vector<8x256xf32>, i32 -> vector<8x256xf32>
    %c5_286 = arith.constant 5 : index
    %c0_287 = arith.constant 0 : index
    %c0_288 = arith.constant 0 : index
    %438 = vector.load %arg4[%c5_286, %c0_287, %c0_288] : memref<9x8x256xf32, #tpu.memory_space<vmem>>, vector<1x8x256xf32>
    %439 = vector.shape_cast %438 : vector<1x8x256xf32> to vector<8x256xf32>
    %440 = arith.mulf %437, %439 : vector<8x256xf32>
    %441 = arith.addf %435, %440 : vector<8x256xf32>
    %442 = vector.extract_strided_slice %410 {offsets = [48, 0], sizes = [8, 256], strides = [1, 1]} : vector<72x256xf32> to vector<8x256xf32>
    %c241_i32_289 = arith.constant 241 : i32
    %443 = tpu.dynamic_rotate %442 by %c241_i32_289 dim 1 : vector<8x256xf32>, i32 -> vector<8x256xf32>
    %c6_290 = arith.constant 6 : index
    %c0_291 = arith.constant 0 : index
    %c0_292 = arith.constant 0 : index
    %444 = vector.load %arg4[%c6_290, %c0_291, %c0_292] : memref<9x8x256xf32, #tpu.memory_space<vmem>>, vector<1x8x256xf32>
    %445 = vector.shape_cast %444 : vector<1x8x256xf32> to vector<8x256xf32>
    %446 = arith.mulf %443, %445 : vector<8x256xf32>
    %447 = arith.addf %441, %446 : vector<8x256xf32>
    %448 = vector.extract_strided_slice %410 {offsets = [56, 0], sizes = [8, 256], strides = [1, 1]} : vector<72x256xf32> to vector<8x256xf32>
    %c240_i32_293 = arith.constant 240 : i32
    %449 = tpu.dynamic_rotate %448 by %c240_i32_293 dim 1 : vector<8x256xf32>, i32 -> vector<8x256xf32>
    %c7_294 = arith.constant 7 : index
    %c0_295 = arith.constant 0 : index
    %c0_296 = arith.constant 0 : index
    %450 = vector.load %arg4[%c7_294, %c0_295, %c0_296] : memref<9x8x256xf32, #tpu.memory_space<vmem>>, vector<1x8x256xf32>
    %451 = vector.shape_cast %450 : vector<1x8x256xf32> to vector<8x256xf32>
    %452 = arith.mulf %449, %451 : vector<8x256xf32>
    %453 = arith.addf %447, %452 : vector<8x256xf32>
    %454 = vector.extract_strided_slice %410 {offsets = [64, 0], sizes = [8, 256], strides = [1, 1]} : vector<72x256xf32> to vector<8x256xf32>
    %c239_i32_297 = arith.constant 239 : i32
    %455 = tpu.dynamic_rotate %454 by %c239_i32_297 dim 1 : vector<8x256xf32>, i32 -> vector<8x256xf32>
    %c8_298 = arith.constant 8 : index
    %c0_299 = arith.constant 0 : index
    %c0_300 = arith.constant 0 : index
    %456 = vector.load %arg4[%c8_298, %c0_299, %c0_300] : memref<9x8x256xf32, #tpu.memory_space<vmem>>, vector<1x8x256xf32>
    %457 = vector.shape_cast %456 : vector<1x8x256xf32> to vector<8x256xf32>
    %458 = arith.mulf %455, %457 : vector<8x256xf32>
    %459 = arith.addf %453, %458 : vector<8x256xf32>
    %c7_301 = arith.constant 7 : index
    %c0_302 = arith.constant 0 : index
    %c0_303 = arith.constant 0 : index
    %460 = vector.load %arg3[%c7_301, %c0_302, %c0_303] : memref<10x8x1xf32, #tpu.memory_space<vmem>>, vector<1x8x1xf32>
    %461 = vector.shape_cast %460 : vector<1x8x1xf32> to vector<8x1xf32>
    %462 = vector.broadcast %461 : vector<8x1xf32> to vector<8x256xf32>
    %463 = arith.addf %459, %462 : vector<8x256xf32>
    %cst_304 = arith.constant 0.000000e+00 : f32
    %464 = vector.broadcast %cst_304 : f32 to vector<8x256xf32>
    %465 = arith.maximumf %463, %464 : vector<8x256xf32>
    %c8_305 = arith.constant 8 : index
    %c0_306 = arith.constant 0 : index
    %c0_307 = arith.constant 0 : index
    %466 = vector.load %arg2[%c8_305, %c0_306, %c0_307] : memref<10x72x8xf32, #tpu.memory_space<vmem>>, vector<1x72x8xf32>
    %467 = vector.shape_cast %466 : vector<1x72x8xf32> to vector<72x8xf32>
    %cst_308 = arith.constant dense<0.000000e+00> : vector<72x256xf32>
    %468 = tpu.matmul %467, %465, %cst_308 {dimension_numbers = #tpu.dot_dimension_numbers<[1], [0], [0], [1], [0, 0, 1, 1], [], []>} : vector<72x8xf32>, vector<8x256xf32>, vector<72x256xf32> -> vector<72x256xf32>
    %469 = vector.extract_strided_slice %468 {offsets = [0, 0], sizes = [8, 256], strides = [1, 1]} : vector<72x256xf32> to vector<8x256xf32>
    %c17_i32_309 = arith.constant 17 : i32
    %470 = tpu.dynamic_rotate %469 by %c17_i32_309 dim 1 : vector<8x256xf32>, i32 -> vector<8x256xf32>
    %c0_310 = arith.constant 0 : index
    %c0_311 = arith.constant 0 : index
    %c0_312 = arith.constant 0 : index
    %471 = vector.load %arg4[%c0_310, %c0_311, %c0_312] : memref<9x8x256xf32, #tpu.memory_space<vmem>>, vector<1x8x256xf32>
    %472 = vector.shape_cast %471 : vector<1x8x256xf32> to vector<8x256xf32>
    %473 = arith.mulf %470, %472 : vector<8x256xf32>
    %474 = vector.extract_strided_slice %468 {offsets = [8, 0], sizes = [8, 256], strides = [1, 1]} : vector<72x256xf32> to vector<8x256xf32>
    %c16_i32_313 = arith.constant 16 : i32
    %475 = tpu.dynamic_rotate %474 by %c16_i32_313 dim 1 : vector<8x256xf32>, i32 -> vector<8x256xf32>
    %c1_314 = arith.constant 1 : index
    %c0_315 = arith.constant 0 : index
    %c0_316 = arith.constant 0 : index
    %476 = vector.load %arg4[%c1_314, %c0_315, %c0_316] : memref<9x8x256xf32, #tpu.memory_space<vmem>>, vector<1x8x256xf32>
    %477 = vector.shape_cast %476 : vector<1x8x256xf32> to vector<8x256xf32>
    %478 = arith.mulf %475, %477 : vector<8x256xf32>
    %479 = arith.addf %473, %478 : vector<8x256xf32>
    %480 = vector.extract_strided_slice %468 {offsets = [16, 0], sizes = [8, 256], strides = [1, 1]} : vector<72x256xf32> to vector<8x256xf32>
    %c15_i32_317 = arith.constant 15 : i32
    %481 = tpu.dynamic_rotate %480 by %c15_i32_317 dim 1 : vector<8x256xf32>, i32 -> vector<8x256xf32>
    %c2_318 = arith.constant 2 : index
    %c0_319 = arith.constant 0 : index
    %c0_320 = arith.constant 0 : index
    %482 = vector.load %arg4[%c2_318, %c0_319, %c0_320] : memref<9x8x256xf32, #tpu.memory_space<vmem>>, vector<1x8x256xf32>
    %483 = vector.shape_cast %482 : vector<1x8x256xf32> to vector<8x256xf32>
    %484 = arith.mulf %481, %483 : vector<8x256xf32>
    %485 = arith.addf %479, %484 : vector<8x256xf32>
    %486 = vector.extract_strided_slice %468 {offsets = [24, 0], sizes = [8, 256], strides = [1, 1]} : vector<72x256xf32> to vector<8x256xf32>
    %c1_i32_321 = arith.constant 1 : i32
    %487 = tpu.dynamic_rotate %486 by %c1_i32_321 dim 1 : vector<8x256xf32>, i32 -> vector<8x256xf32>
    %c3_322 = arith.constant 3 : index
    %c0_323 = arith.constant 0 : index
    %c0_324 = arith.constant 0 : index
    %488 = vector.load %arg4[%c3_322, %c0_323, %c0_324] : memref<9x8x256xf32, #tpu.memory_space<vmem>>, vector<1x8x256xf32>
    %489 = vector.shape_cast %488 : vector<1x8x256xf32> to vector<8x256xf32>
    %490 = arith.mulf %487, %489 : vector<8x256xf32>
    %491 = arith.addf %485, %490 : vector<8x256xf32>
    %492 = vector.extract_strided_slice %468 {offsets = [32, 0], sizes = [8, 256], strides = [1, 1]} : vector<72x256xf32> to vector<8x256xf32>
    %493 = arith.addf %491, %492 : vector<8x256xf32>
    %494 = vector.extract_strided_slice %468 {offsets = [40, 0], sizes = [8, 256], strides = [1, 1]} : vector<72x256xf32> to vector<8x256xf32>
    %c255_i32_325 = arith.constant 255 : i32
    %495 = tpu.dynamic_rotate %494 by %c255_i32_325 dim 1 : vector<8x256xf32>, i32 -> vector<8x256xf32>
    %c5_326 = arith.constant 5 : index
    %c0_327 = arith.constant 0 : index
    %c0_328 = arith.constant 0 : index
    %496 = vector.load %arg4[%c5_326, %c0_327, %c0_328] : memref<9x8x256xf32, #tpu.memory_space<vmem>>, vector<1x8x256xf32>
    %497 = vector.shape_cast %496 : vector<1x8x256xf32> to vector<8x256xf32>
    %498 = arith.mulf %495, %497 : vector<8x256xf32>
    %499 = arith.addf %493, %498 : vector<8x256xf32>
    %500 = vector.extract_strided_slice %468 {offsets = [48, 0], sizes = [8, 256], strides = [1, 1]} : vector<72x256xf32> to vector<8x256xf32>
    %c241_i32_329 = arith.constant 241 : i32
    %501 = tpu.dynamic_rotate %500 by %c241_i32_329 dim 1 : vector<8x256xf32>, i32 -> vector<8x256xf32>
    %c6_330 = arith.constant 6 : index
    %c0_331 = arith.constant 0 : index
    %c0_332 = arith.constant 0 : index
    %502 = vector.load %arg4[%c6_330, %c0_331, %c0_332] : memref<9x8x256xf32, #tpu.memory_space<vmem>>, vector<1x8x256xf32>
    %503 = vector.shape_cast %502 : vector<1x8x256xf32> to vector<8x256xf32>
    %504 = arith.mulf %501, %503 : vector<8x256xf32>
    %505 = arith.addf %499, %504 : vector<8x256xf32>
    %506 = vector.extract_strided_slice %468 {offsets = [56, 0], sizes = [8, 256], strides = [1, 1]} : vector<72x256xf32> to vector<8x256xf32>
    %c240_i32_333 = arith.constant 240 : i32
    %507 = tpu.dynamic_rotate %506 by %c240_i32_333 dim 1 : vector<8x256xf32>, i32 -> vector<8x256xf32>
    %c7_334 = arith.constant 7 : index
    %c0_335 = arith.constant 0 : index
    %c0_336 = arith.constant 0 : index
    %508 = vector.load %arg4[%c7_334, %c0_335, %c0_336] : memref<9x8x256xf32, #tpu.memory_space<vmem>>, vector<1x8x256xf32>
    %509 = vector.shape_cast %508 : vector<1x8x256xf32> to vector<8x256xf32>
    %510 = arith.mulf %507, %509 : vector<8x256xf32>
    %511 = arith.addf %505, %510 : vector<8x256xf32>
    %512 = vector.extract_strided_slice %468 {offsets = [64, 0], sizes = [8, 256], strides = [1, 1]} : vector<72x256xf32> to vector<8x256xf32>
    %c239_i32_337 = arith.constant 239 : i32
    %513 = tpu.dynamic_rotate %512 by %c239_i32_337 dim 1 : vector<8x256xf32>, i32 -> vector<8x256xf32>
    %c8_338 = arith.constant 8 : index
    %c0_339 = arith.constant 0 : index
    %c0_340 = arith.constant 0 : index
    %514 = vector.load %arg4[%c8_338, %c0_339, %c0_340] : memref<9x8x256xf32, #tpu.memory_space<vmem>>, vector<1x8x256xf32>
    %515 = vector.shape_cast %514 : vector<1x8x256xf32> to vector<8x256xf32>
    %516 = arith.mulf %513, %515 : vector<8x256xf32>
    %517 = arith.addf %511, %516 : vector<8x256xf32>
    %c8_341 = arith.constant 8 : index
    %c0_342 = arith.constant 0 : index
    %c0_343 = arith.constant 0 : index
    %518 = vector.load %arg3[%c8_341, %c0_342, %c0_343] : memref<10x8x1xf32, #tpu.memory_space<vmem>>, vector<1x8x1xf32>
    %519 = vector.shape_cast %518 : vector<1x8x1xf32> to vector<8x1xf32>
    %520 = vector.broadcast %519 : vector<8x1xf32> to vector<8x256xf32>
    %521 = arith.addf %517, %520 : vector<8x256xf32>
    %cst_344 = arith.constant 0.000000e+00 : f32
    %522 = vector.broadcast %cst_344 : f32 to vector<8x256xf32>
    %523 = arith.maximumf %521, %522 : vector<8x256xf32>
    %c9 = arith.constant 9 : index
    %c0_345 = arith.constant 0 : index
    %c0_346 = arith.constant 0 : index
    %524 = vector.load %arg2[%c9, %c0_345, %c0_346] : memref<10x72x8xf32, #tpu.memory_space<vmem>>, vector<1x72x8xf32>
    %525 = vector.shape_cast %524 : vector<1x72x8xf32> to vector<72x8xf32>
    %cst_347 = arith.constant dense<0.000000e+00> : vector<72x256xf32>
    %526 = tpu.matmul %525, %523, %cst_347 {dimension_numbers = #tpu.dot_dimension_numbers<[1], [0], [0], [1], [0, 0, 1, 1], [], []>} : vector<72x8xf32>, vector<8x256xf32>, vector<72x256xf32> -> vector<72x256xf32>
    %527 = vector.extract_strided_slice %526 {offsets = [0, 0], sizes = [8, 256], strides = [1, 1]} : vector<72x256xf32> to vector<8x256xf32>
    %c17_i32_348 = arith.constant 17 : i32
    %528 = tpu.dynamic_rotate %527 by %c17_i32_348 dim 1 : vector<8x256xf32>, i32 -> vector<8x256xf32>
    %c0_349 = arith.constant 0 : index
    %c0_350 = arith.constant 0 : index
    %c0_351 = arith.constant 0 : index
    %529 = vector.load %arg4[%c0_349, %c0_350, %c0_351] : memref<9x8x256xf32, #tpu.memory_space<vmem>>, vector<1x8x256xf32>
    %530 = vector.shape_cast %529 : vector<1x8x256xf32> to vector<8x256xf32>
    %531 = arith.mulf %528, %530 : vector<8x256xf32>
    %532 = vector.extract_strided_slice %526 {offsets = [8, 0], sizes = [8, 256], strides = [1, 1]} : vector<72x256xf32> to vector<8x256xf32>
    %c16_i32_352 = arith.constant 16 : i32
    %533 = tpu.dynamic_rotate %532 by %c16_i32_352 dim 1 : vector<8x256xf32>, i32 -> vector<8x256xf32>
    %c1_353 = arith.constant 1 : index
    %c0_354 = arith.constant 0 : index
    %c0_355 = arith.constant 0 : index
    %534 = vector.load %arg4[%c1_353, %c0_354, %c0_355] : memref<9x8x256xf32, #tpu.memory_space<vmem>>, vector<1x8x256xf32>
    %535 = vector.shape_cast %534 : vector<1x8x256xf32> to vector<8x256xf32>
    %536 = arith.mulf %533, %535 : vector<8x256xf32>
    %537 = arith.addf %531, %536 : vector<8x256xf32>
    %538 = vector.extract_strided_slice %526 {offsets = [16, 0], sizes = [8, 256], strides = [1, 1]} : vector<72x256xf32> to vector<8x256xf32>
    %c15_i32_356 = arith.constant 15 : i32
    %539 = tpu.dynamic_rotate %538 by %c15_i32_356 dim 1 : vector<8x256xf32>, i32 -> vector<8x256xf32>
    %c2_357 = arith.constant 2 : index
    %c0_358 = arith.constant 0 : index
    %c0_359 = arith.constant 0 : index
    %540 = vector.load %arg4[%c2_357, %c0_358, %c0_359] : memref<9x8x256xf32, #tpu.memory_space<vmem>>, vector<1x8x256xf32>
    %541 = vector.shape_cast %540 : vector<1x8x256xf32> to vector<8x256xf32>
    %542 = arith.mulf %539, %541 : vector<8x256xf32>
    %543 = arith.addf %537, %542 : vector<8x256xf32>
    %544 = vector.extract_strided_slice %526 {offsets = [24, 0], sizes = [8, 256], strides = [1, 1]} : vector<72x256xf32> to vector<8x256xf32>
    %c1_i32_360 = arith.constant 1 : i32
    %545 = tpu.dynamic_rotate %544 by %c1_i32_360 dim 1 : vector<8x256xf32>, i32 -> vector<8x256xf32>
    %c3_361 = arith.constant 3 : index
    %c0_362 = arith.constant 0 : index
    %c0_363 = arith.constant 0 : index
    %546 = vector.load %arg4[%c3_361, %c0_362, %c0_363] : memref<9x8x256xf32, #tpu.memory_space<vmem>>, vector<1x8x256xf32>
    %547 = vector.shape_cast %546 : vector<1x8x256xf32> to vector<8x256xf32>
    %548 = arith.mulf %545, %547 : vector<8x256xf32>
    %549 = arith.addf %543, %548 : vector<8x256xf32>
    %550 = vector.extract_strided_slice %526 {offsets = [32, 0], sizes = [8, 256], strides = [1, 1]} : vector<72x256xf32> to vector<8x256xf32>
    %551 = arith.addf %549, %550 : vector<8x256xf32>
    %552 = vector.extract_strided_slice %526 {offsets = [40, 0], sizes = [8, 256], strides = [1, 1]} : vector<72x256xf32> to vector<8x256xf32>
    %c255_i32_364 = arith.constant 255 : i32
    %553 = tpu.dynamic_rotate %552 by %c255_i32_364 dim 1 : vector<8x256xf32>, i32 -> vector<8x256xf32>
    %c5_365 = arith.constant 5 : index
    %c0_366 = arith.constant 0 : index
    %c0_367 = arith.constant 0 : index
    %554 = vector.load %arg4[%c5_365, %c0_366, %c0_367] : memref<9x8x256xf32, #tpu.memory_space<vmem>>, vector<1x8x256xf32>
    %555 = vector.shape_cast %554 : vector<1x8x256xf32> to vector<8x256xf32>
    %556 = arith.mulf %553, %555 : vector<8x256xf32>
    %557 = arith.addf %551, %556 : vector<8x256xf32>
    %558 = vector.extract_strided_slice %526 {offsets = [48, 0], sizes = [8, 256], strides = [1, 1]} : vector<72x256xf32> to vector<8x256xf32>
    %c241_i32_368 = arith.constant 241 : i32
    %559 = tpu.dynamic_rotate %558 by %c241_i32_368 dim 1 : vector<8x256xf32>, i32 -> vector<8x256xf32>
    %c6_369 = arith.constant 6 : index
    %c0_370 = arith.constant 0 : index
    %c0_371 = arith.constant 0 : index
    %560 = vector.load %arg4[%c6_369, %c0_370, %c0_371] : memref<9x8x256xf32, #tpu.memory_space<vmem>>, vector<1x8x256xf32>
    %561 = vector.shape_cast %560 : vector<1x8x256xf32> to vector<8x256xf32>
    %562 = arith.mulf %559, %561 : vector<8x256xf32>
    %563 = arith.addf %557, %562 : vector<8x256xf32>
    %564 = vector.extract_strided_slice %526 {offsets = [56, 0], sizes = [8, 256], strides = [1, 1]} : vector<72x256xf32> to vector<8x256xf32>
    %c240_i32_372 = arith.constant 240 : i32
    %565 = tpu.dynamic_rotate %564 by %c240_i32_372 dim 1 : vector<8x256xf32>, i32 -> vector<8x256xf32>
    %c7_373 = arith.constant 7 : index
    %c0_374 = arith.constant 0 : index
    %c0_375 = arith.constant 0 : index
    %566 = vector.load %arg4[%c7_373, %c0_374, %c0_375] : memref<9x8x256xf32, #tpu.memory_space<vmem>>, vector<1x8x256xf32>
    %567 = vector.shape_cast %566 : vector<1x8x256xf32> to vector<8x256xf32>
    %568 = arith.mulf %565, %567 : vector<8x256xf32>
    %569 = arith.addf %563, %568 : vector<8x256xf32>
    %570 = vector.extract_strided_slice %526 {offsets = [64, 0], sizes = [8, 256], strides = [1, 1]} : vector<72x256xf32> to vector<8x256xf32>
    %c239_i32_376 = arith.constant 239 : i32
    %571 = tpu.dynamic_rotate %570 by %c239_i32_376 dim 1 : vector<8x256xf32>, i32 -> vector<8x256xf32>
    %c8_377 = arith.constant 8 : index
    %c0_378 = arith.constant 0 : index
    %c0_379 = arith.constant 0 : index
    %572 = vector.load %arg4[%c8_377, %c0_378, %c0_379] : memref<9x8x256xf32, #tpu.memory_space<vmem>>, vector<1x8x256xf32>
    %573 = vector.shape_cast %572 : vector<1x8x256xf32> to vector<8x256xf32>
    %574 = arith.mulf %571, %573 : vector<8x256xf32>
    %575 = arith.addf %569, %574 : vector<8x256xf32>
    %c9_380 = arith.constant 9 : index
    %c0_381 = arith.constant 0 : index
    %c0_382 = arith.constant 0 : index
    %576 = vector.load %arg3[%c9_380, %c0_381, %c0_382] : memref<10x8x1xf32, #tpu.memory_space<vmem>>, vector<1x8x1xf32>
    %577 = vector.shape_cast %576 : vector<1x8x1xf32> to vector<8x1xf32>
    %578 = vector.broadcast %577 : vector<8x1xf32> to vector<8x256xf32>
    %579 = arith.addf %575, %578 : vector<8x256xf32>
    %cst_383 = arith.constant 0.000000e+00 : f32
    %580 = vector.broadcast %cst_383 : f32 to vector<8x256xf32>
    %581 = arith.maximumf %579, %580 : vector<8x256xf32>
    %582 = arith.addf %581, %1 : vector<8x256xf32>
    %c0_384 = arith.constant 0 : index
    %c0_385 = arith.constant 0 : index
    %c0_386 = arith.constant 0 : index
    %583 = vector.load %arg5[%c0_384, %c0_385, %c0_386] : memref<1x8x256xf32, #tpu.memory_space<vmem>>, vector<1x8x256xf32>
    %584 = vector.shape_cast %583 : vector<1x8x256xf32> to vector<8x256xf32>
    %585 = vector.shape_cast %582 : vector<8x256xf32> to vector<1x8x256xf32>
    tpu.vector_store %arg5[%c0_384, %c0_385, %c0_386], %585 {strides = array<i32>} : memref<1x8x256xf32, #tpu.memory_space<vmem>>, vector<1x8x256xf32>,
    return
  }
  func.func @transform_0(%arg0: i32) -> (i32, i32, i32) {
    %c0_i32 = arith.constant 0 : i32
    %c0_i32_0 = arith.constant 0 : i32
    %c0_i32_1 = arith.constant 0 : i32
    return %arg0, %c0_i32, %c0_i32_0 : i32, i32, i32
  }
  func.func @transform_1(%arg0: i32) -> (i32, i32, i32) {
    %c0_i32 = arith.constant 0 : i32
    %c0_i32_0 = arith.constant 0 : i32
    %c0_i32_1 = arith.constant 0 : i32
    %c0_i32_2 = arith.constant 0 : i32
    return %c0_i32, %c0_i32_0, %c0_i32_1 : i32, i32, i32
  }
  func.func @transform_2(%arg0: i32) -> (i32, i32, i32) {
    %c0_i32 = arith.constant 0 : i32
    %c0_i32_0 = arith.constant 0 : i32
    %c0_i32_1 = arith.constant 0 : i32
    %c0_i32_2 = arith.constant 0 : i32
    return %c0_i32, %c0_i32_0, %c0_i32_1 : i32, i32, i32
  }
  func.func @transform_3(%arg0: i32) -> (i32, i32, i32) {
    %c0_i32 = arith.constant 0 : i32
    %c0_i32_0 = arith.constant 0 : i32
    %c0_i32_1 = arith.constant 0 : i32
    %c0_i32_2 = arith.constant 0 : i32
    return %c0_i32, %c0_i32_0, %c0_i32_1 : i32, i32, i32
  }
  func.func @transform_4(%arg0: i32) -> (i32, i32, i32) {
    %c0_i32 = arith.constant 0 : i32
    %c0_i32_0 = arith.constant 0 : i32
    %c0_i32_1 = arith.constant 0 : i32
    return %arg0, %c0_i32, %c0_i32_0 : i32, i32, i32
  }
}

</mosaic_0001>

<llo_original>
// kernel: tpu_custom_call.1
$region0: #{tpu_custom_call.1}
  #allocation0 [shape = 'u32[]', space=smem, size = 0x4, offset = 0x4, fixed_abs, tag = 'smem constant byte address 0x4 - core index']
  #allocation1 [shape = 'u32[144,128]{1,0:T(1,128)}', space=vmem, size = 0x12000, scoped, tag = 'internal scratch']
  %s0 = inlined_call_operand.vmem [shape: f32[2,8,256], index: 0, kind: input, shape index: {}]
  %s1 = inlined_call_operand.vmem [shape: f32[10,72,8], index: 1, kind: input, shape index: {}]
  %s2 = inlined_call_operand.vmem [shape: f32[10,8,1], index: 2, kind: input, shape index: {}]
  %s3 = inlined_call_operand.vmem [shape: f32[9,8,256], index: 3, kind: input, shape index: {}]
  %s4 = inlined_call_operand.hbm [shape: f32[2,8,256], index: 4, kind: output, shape index: {}]
  %s5 = sld [smem:[#allocation0]]
  $region49: #{tpu_custom_call.1} parent=0
    _
  %s7 = ssub.s32 1, %s5
  %s8 = scalar_select 0, %s7, %s5
  $region1: #{tpu_custom_call.1} parent=0
    #allocation2 [shape = 'u8[16384]{0}', space=vmem, size = 0x4000, scoped, tag = 'output window, operand 0']
    #allocation3 [shape = 's32[2]{0}', space=sflag, size = 0x8, scoped, tag = 'scoped memory for tpu_custom_call.1']
    %9 = vsyncpa [#allocation3], 0
    %s10 = scalar_lea.sflag [#allocation3], 1
    %11 = vsyncpa %s10, 0
    loop: start=0, step=1, limit=4
    $region2: #{tpu_custom_call.1} parent=1 // loop_pre_header
      _
    $region3: #{tpu_custom_call.1} parent=1 // loop_header
      %s13 = sphi 0, %s17
      %p14 = scmp.ge.s32.totalorder %s13, 4
      %s23 = sphi 0, %s25
      %s26 = sphi 0, %s23
      %s27 = sphi 0, %s26
      %s43 = sphi 0, %s27
      %s47 = sphi 0, %s47
      %s49 = sphi 0, %s47
      %s50 = sphi 0, %s49
      %s64 = sphi 0, %s50
      %s68 = sphi 0, %s68
      %s70 = sphi 0, %s68
      %s71 = sphi 0, %s70
      %s85 = sphi 0, %s71
      %s89 = sphi 0, %s89
      %s91 = sphi 0, %s89
      %s92 = sphi 0, %s91
      %s106 = sphi 0, %s92
      %s112 = sphi 0, %s114
      %s115 = sphi 0, %s112
      %s116 = sphi 0, %s115
      %s132 = sphi 0, %s116
    $region4: #{tpu_custom_call.1} parent=1 // loop_header_branch
      %16 = sbr.rel (%p14) target = $region8
    $region5: #{tpu_custom_call.1} parent=1 // loop_body
      %s18 = ssub.s32 %s13, 1
      %s19 = ssub.s32 %s13, 2
      %s20 = sadd.s32 %s13, 1
      %s21 = ssub.s32 %s13, %s20
      %p22 = scmp.eq.s32.totalorder %s21, 0
      %s24 = sadd.s32 %s23, 1
      %s25 = scalar_select %p22, %s23, %s24
      %p28 = pneg %p22
      %p29 = scmp.eq.s32.totalorder %s13, 1
      %p30 = por %p28, %p29
      %p31 = scmp.ne.s32.totalorder %s23, %s26
      %p32 = scmp.eq.s32.totalorder %s13, 0
      %p33 = por %p31, %p32
      %p34 = scmp.ne.s32.totalorder %s23, %s26
      %p35 = scmp.eq.s32.totalorder %s18, 1
      %p36 = por %p34, %p35
      %p37 = scmp.ne.s32.totalorder %s26, %s27
      %p38 = scmp.eq.s32.totalorder %s18, 0
      %p39 = por %p37, %p38
      %p40 = scmp.ne.s32.totalorder %s26, %s27
      %p41 = scmp.eq.s32.totalorder %s19, 1
      %p42 = por %p40, %p41
      %p44 = scmp.ne.s32.totalorder %s27, %s43
      %p45 = scmp.eq.s32.totalorder %s19, 0
      %p46 = por %p44, %p45
      %s48 = sadd.s32 %s47, 1
      %p51 = scmp.eq.s32.totalorder %s13, 1
      %p52 = scmp.ne.s32.totalorder %s47, %s49
      %p53 = scmp.eq.s32.totalorder %s13, 0
      %p54 = por %p52, %p53
      %p55 = scmp.ne.s32.totalorder %s47, %s49
      %p56 = scmp.eq.s32.totalorder %s18, 1
      %p57 = por %p55, %p56
      %p58 = scmp.ne.s32.totalorder %s49, %s50
      %p59 = scmp.eq.s32.totalorder %s18, 0
      %p60 = por %p58, %p59
      %p61 = scmp.ne.s32.totalorder %s49, %s50
      %p62 = scmp.eq.s32.totalorder %s19, 1
      %p63 = por %p61, %p62
      %p65 = scmp.ne.s32.totalorder %s50, %s64
      %p66 = scmp.eq.s32.totalorder %s19, 0
      %p67 = por %p65, %p66
      %s69 = sadd.s32 %s68, 1
      %p72 = scmp.eq.s32.totalorder %s13, 1
      %p73 = scmp.ne.s32.totalorder %s68, %s70
      %p74 = scmp.eq.s32.totalorder %s13, 0
      %p75 = por %p73, %p74
      %p76 = scmp.ne.s32.totalorder %s68, %s70
      %p77 = scmp.eq.s32.totalorder %s18, 1
      %p78 = por %p76, %p77
      %p79 = scmp.ne.s32.totalorder %s70, %s71
      %p80 = scmp.eq.s32.totalorder %s18, 0
      %p81 = por %p79, %p80
      %p82 = scmp.ne.s32.totalorder %s70, %s71
      %p83 = scmp.eq.s32.totalorder %s19, 1
      %p84 = por %p82, %p83
      %p86 = scmp.ne.s32.totalorder %s71, %s85
      %p87 = scmp.eq.s32.totalorder %s19, 0
      %p88 = por %p86, %p87
      %s90 = sadd.s32 %s89, 1
      %p93 = scmp.eq.s32.totalorder %s13, 1
      %p94 = scmp.ne.s32.totalorder %s89, %s91
      %p95 = scmp.eq.s32.totalorder %s13, 0
      %p96 = por %p94, %p95
      %p97 = scmp.ne.s32.totalorder %s89, %s91
      %p98 = scmp.eq.s32.totalorder %s18, 1
      %p99 = por %p97, %p98
      %p100 = scmp.ne.s32.totalorder %s91, %s92
      %p101 = scmp.eq.s32.totalorder %s18, 0
      %p102 = por %p100, %p101
      %p103 = scmp.ne.s32.totalorder %s91, %s92
      %p104 = scmp.eq.s32.totalorder %s19, 1
      %p105 = por %p103, %p104
      %p107 = scmp.ne.s32.totalorder %s92, %s106
      %p108 = scmp.eq.s32.totalorder %s19, 0
      %p109 = por %p107, %p108
      %s110 = ssub.s32 %s13, %s20
      %p111 = scmp.eq.s32.totalorder %s110, 0
      %s113 = sadd.s32 %s112, 1
      %s114 = scalar_select %p111, %s112, %s113
      %p117 = pneg %p111
      %p118 = scmp.eq.s32.totalorder %s13, 1
      %p119 = por %p117, %p118
      %p120 = scmp.ne.s32.totalorder %s112, %s115
      %p121 = scmp.eq.s32.totalorder %s13, 0
      %p122 = por %p120, %p121
      %p123 = scmp.ne.s32.totalorder %s112, %s115
      %p124 = scmp.eq.s32.totalorder %s18, 1
      %p125 = por %p123, %p124
      %p126 = scmp.ne.s32.totalorder %s115, %s116
      %p127 = scmp.eq.s32.totalorder %s18, 0
      %p128 = por %p126, %p127
      %p129 = scmp.ne.s32.totalorder %s115, %s116
      %p130 = scmp.eq.s32.totalorder %s19, 1
      %p131 = por %p129, %p130
      %p133 = scmp.ne.s32.totalorder %s116, %s132
      %p134 = scmp.eq.s32.totalorder %s19, 0
      %p135 = por %p133, %p134
      %p136 = scmp.le.s32.totalorder 1, %s13
      %p137 = scmp.lt.s32.totalorder %s13, 3
      %p138 = pnand %p136, %p137
      %p139 = pneg %p138
      // Predicated region
      $region9: #{tpu_custom_call.1} parent=5 // pred_check
        _
      $region10: #{tpu_custom_call.1} parent=5 // pred_check_branch
        %141 = sbr.rel (%p138) target = $region12
      $region11: #{tpu_custom_call.1} parent=5 // pred_region
        %s142 = ssub.s32 %s13, 1
        // Predicated region
        $region13: #{tpu_custom_call.1} parent=11 // pred_check
          %p143 = pneg %p60
        $region14: #{tpu_custom_call.1} parent=11 // pred_check_branch
          %145 = sbr.rel (%p143) target = $region16
        $region15: #{tpu_custom_call.1} parent=11 // pred_region
          _
        $region16: #{tpu_custom_call.1} parent=11 // pred_fallthru
          _
        // Predicated region
        $region17: #{tpu_custom_call.1} parent=11 // pred_check
          %p146 = pneg %p81
        $region18: #{tpu_custom_call.1} parent=11 // pred_check_branch
          %148 = sbr.rel (%p146) target = $region20
        $region19: #{tpu_custom_call.1} parent=11 // pred_region
          _
        $region20: #{tpu_custom_call.1} parent=11 // pred_fallthru
          _
        // Predicated region
        $region21: #{tpu_custom_call.1} parent=11 // pred_check
          %p149 = pneg %p102
        $region22: #{tpu_custom_call.1} parent=11 // pred_check_branch
          %151 = sbr.rel (%p149) target = $region24
        $region23: #{tpu_custom_call.1} parent=11 // pred_region
          _
        $region24: #{tpu_custom_call.1} parent=11 // pred_fallthru
          _
      $region12: #{tpu_custom_call.1} parent=5 // pred_fallthru
        _
      %p152 = scmp.lt.s32.totalorder %s13, 2
      // Predicated region
      $region25: #{tpu_custom_call.1} parent=5 // pred_check
        %p153 = pneg %p152
      $region26: #{tpu_custom_call.1} parent=5 // pred_check_branch
        %155 = sbr.rel (%p153) target = $region28
      $region27: #{tpu_custom_call.1} parent=5 // pred_region
        // Predicated region
        $region29: #{tpu_custom_call.1} parent=27 // pred_check
          %p156 = pneg %p33
        $region30: #{tpu_custom_call.1} parent=27 // pred_check_branch
          %158 = sbr.rel (%p156) target = $region32
        $region31: #{tpu_custom_call.1} parent=27 // pred_region
          %p159 = scmp.lt.s32.totalorder %s13, 1
          %s160 = scalar_select %p159, %s13, 1
          %s161 = smul.addr %s160, 2
          %s162 = smul.addr %s161, 8
          %s163 = scalar_lea.vmem %s0, %s162
        $region32: #{tpu_custom_call.1} parent=27 // pred_fallthru
          _
      $region28: #{tpu_custom_call.1} parent=5 // pred_fallthru
        _
      %p164 = scmp.le.s32.totalorder 1, %s13
      %p165 = scmp.lt.s32.totalorder %s13, 3
      %p166 = pnand %p164, %p165
      %p167 = pneg %p166
      // Predicated region
      $region33: #{tpu_custom_call.1} parent=5 // pred_check
        _
      $region34: #{tpu_custom_call.1} parent=5 // pred_check_branch
        %169 = sbr.rel (%p166) target = $region36
      $region35: #{tpu_custom_call.1} parent=5 // pred_region
        %s170 = ssub.s32 %s13, 1
        %p171 = scmp.lt.s32.totalorder %s18, 1
        %s172 = scalar_select %p171, %s18, 1
        %s173 = smul.addr %s172, 2
        %s174 = smul.addr %s173, 8
        %s175 = scalar_lea.vmem %s0, %s174
        %p176 = pneg %p39
        %p177 = pneg %p36
        %p178 = pneg %p60
        %p179 = pneg %p57
        %p180 = pneg %p81
        %p181 = pneg %p78
        %p182 = pneg %p102
        %p183 = pneg %p99
        %p184 = pneg %p128
        %p185 = pneg %p125
        %s186 = sand.u32 %s115, 1
        %s187 = scalar_lea.sflag [#allocation3], %s186
        %s188 = sand.u32 %s115, 1
        %s189 = smul.addr %s188, 16
        %s190 = scalar_lea.vmem [#allocation2], %s189
        %p191 = scmp.lt.s32.totalorder %s18, 1
        %s192 = scalar_select %p191, %s18, 1
        %s193 = smul.addr %s192, 2
        %s194 = smul.addr %s193, 8
        %s195 = scalar_lea.vmem %s0, %s194
        %v196 = vld [vmem:[%s195] sm:$0xff]
        %v197 = vld [vmem:[%s195 + $0x8] sm:$0xff]
        %v198 = vld [vmem:[%s1] sm:$0xff]
        %v199 = vld [vmem:[%s1 + $0x8] sm:$0xff]
        %v200 = vld [vmem:[%s1 + $0x10] sm:$0xff]
        %v201 = vld [vmem:[%s1 + $0x18] sm:$0xff]
        %v202 = vld [vmem:[%s1 + $0x20] sm:$0xff]
        %v203 = vld [vmem:[%s1 + $0x28] sm:$0xff]
        %v204 = vld [vmem:[%s1 + $0x30] sm:$0xff]
        %v205 = vld [vmem:[%s1 + $0x38] sm:$0xff]
        %v206 = vld [vmem:[%s1 + $0x40] sm:$0xff]
        %vm207 = vcmask 64512
        %v209 = vsel %vm207, %v198, 0
        %v212 = vsel %vm207, %v199, 0
        %v215 = vsel %vm207, %v200, 0
        %v218 = vsel %vm207, %v201, 0
        %v221 = vsel %vm207, %v202, 0
        %v224 = vsel %vm207, %v203, 0
        %v227 = vsel %vm207, %v204, 0
        %v230 = vsel %vm207, %v205, 0
        %v233 = vsel %vm207, %v206, 0
        %235 = vmatprep.subr.mxu0 0.0
        %236 = vmatpush1.msra.mxu0 0.0
        %237 = vmatprep.subr.mxu0 0.0
        %238 = vmatpush1.msra.mxu0 0.0
        %239 = vmatprep.subr.mxu0 0.0
        %240 = vmatpush1.msra.mxu0 0.0
        %241 = vmatprep.subr.mxu0 0.0
        %242 = vmatpush1.msra.mxu0 0.0
        %243 = vmatprep.subr.mxu0 0.0
        %244 = vmatpush1.msra.mxu0 0.0
        %245 = vmatprep.subr.mxu0 0.0
        %246 = vmatpush1.msra.mxu0 0.0
        %247 = vmatprep.subr.mxu0 0.0
        %248 = vmatpush1.msra.mxu0 0.0
        %249 = vmatprep.subr.mxu0 0.0
        %250 = vmatpush1.msra.mxu0 0.0
        %251 = vmatprep.subr.mxu0 0.0
        %252 = vmatpush1.msra.mxu0 0.0
        %253 = vmatprep.subr.mxu0 0.0
        %254 = vmatpush1.msra.mxu0 0.0
        %255 = vmatprep.subr.mxu0 0.0
        %256 = vmatpush1.msra.mxu0 0.0
        %257 = vmatprep.subr.mxu0 0.0
        %258 = vmatpush1.msra.mxu0 0.0
        %259 = vmatprep.subr.mxu0 0.0
        %260 = vmatpush1.msra.mxu0 0.0
        %261 = vmatprep.subr.mxu0 0.0
        %262 = vmatpush1.msra.mxu0 0.0
        %263 = vmatprep.subr.mxu0 0.0
        %264 = vmatpush1.msra.mxu0 0.0
        %265 = vmatprep.subr.mxu0 %v197
        %266 = vmatpush1.msra.mxu0 %v196
        %267 = vmatprep.subr.mxu0 0.0
        %268 = vmatpush2.msra.mxu0 0.0
        %269 = vmatprep.subr.mxu0 0.0
        %270 = vmatpush2.msra.mxu0 0.0
        %271 = vmatprep.subr.mxu0 0.0
        %272 = vmatpush2.msra.mxu0 0.0
        %273 = vmatprep.subr.mxu0 0.0
        %274 = vmatpush2.msra.mxu0 0.0
        %275 = vmatprep.subr.mxu0 0.0
        %276 = vmatpush2.msra.mxu0 0.0
        %277 = vmatprep.subr.mxu0 0.0
        %278 = vmatpush2.msra.mxu0 0.0
        %279 = vmatprep.subr.mxu0 0.0
        %280 = vmatpush2.msra.mxu0 0.0
        %281 = vmatprep.subr.mxu0 0.0
        %282 = vmatpush2.msra.mxu0 0.0
        %283 = vmatprep.subr.mxu0 0.0
        %284 = vmatpush2.msra.mxu0 0.0
        %285 = vmatprep.subr.mxu0 0.0
        %286 = vmatpush2.msra.mxu0 0.0
        %287 = vmatprep.subr.mxu0 0.0
        %288 = vmatpush2.msra.mxu0 0.0
        %289 = vmatprep.subr.mxu0 0.0
        %290 = vmatpush2.msra.mxu0 0.0
        %291 = vmatprep.subr.mxu0 0.0
        %292 = vmatpush2.msra.mxu0 0.0
        %293 = vmatprep.subr.mxu0 0.0
        %294 = vmatpush2.msra.mxu0 0.0
        %295 = vmatprep.subr.mxu0 0.0
        %296 = vmatpush2.msra.mxu0 0.0
        %297 = vmatprep.subr.mxu0 0.0
        %298 = vmatpush2.msra.mxu0 0.0
        %299 = vmatprep.mubr.f32.mxu0 0.0
        %300 = vmatmul.mubr.f32.gmra.mxu0 %v209
        %v301 = vpop.f32.mrf.mxu0
        %v302 = vadd.f32 0.0, %v301
        %v303 = vpop.f32.mrf.mxu0
        %v304 = vadd.f32 0.0, %v303
        %305 = vmatprep.mubr.f32.mxu0 0.0
        %306 = vmatmul.mubr.f32.gmra.mxu0 %v212
        %v307 = vpop.f32.mrf.mxu0
        %v308 = vadd.f32 0.0, %v307
        %v309 = vpop.f32.mrf.mxu0
        %v310 = vadd.f32 0.0, %v309
        %311 = vmatprep.mubr.f32.mxu0 0.0
        %312 = vmatmul.mubr.f32.gmra.mxu0 %v215
        %v313 = vpop.f32.mrf.mxu0
        %v314 = vadd.f32 0.0, %v313
        %v315 = vpop.f32.mrf.mxu0
        %v316 = vadd.f32 0.0, %v315
        %317 = vmatprep.mubr.f32.mxu0 0.0
        %318 = vmatmul.mubr.f32.gmra.mxu0 %v218
        %v319 = vpop.f32.mrf.mxu0
        %v320 = vadd.f32 0.0, %v319
        %v321 = vpop.f32.mrf.mxu0
        %v322 = vadd.f32 0.0, %v321
        %323 = vmatprep.mubr.f32.mxu0 0.0
        %324 = vmatmul.mubr.f32.gmra.mxu0 %v221
        %v325 = vpop.f32.mrf.mxu0
        %v326 = vadd.f32 0.0, %v325
        %v327 = vpop.f32.mrf.mxu0
        %v328 = vadd.f32 0.0, %v327
        %329 = vmatprep.mubr.f32.mxu0 0.0
        %330 = vmatmul.mubr.f32.gmra.mxu0 %v224
        %v331 = vpop.f32.mrf.mxu0
        %v332 = vadd.f32 0.0, %v331
        %v333 = vpop.f32.mrf.mxu0
        %v334 = vadd.f32 0.0, %v333
        %335 = vmatprep.mubr.f32.mxu0 0.0
        %336 = vmatmul.mubr.f32.gmra.mxu0 %v227
        %v337 = vpop.f32.mrf.mxu0
        %v338 = vadd.f32 0.0, %v337
        %v339 = vpop.f32.mrf.mxu0
        %v340 = vadd.f32 0.0, %v339
        %341 = vmatprep.mubr.f32.mxu0 0.0
        %342 = vmatmul.mubr.f32.gmra.mxu0 %v230
        %v343 = vpop.f32.mrf.mxu0
        %v344 = vadd.f32 0.0, %v343
        %v345 = vpop.f32.mrf.mxu0
        %v346 = vadd.f32 0.0, %v345
        %347 = vmatprep.mubr.f32.mxu0 0.0
        %348 = vmatmul.mubr.f32.gmra.mxu0 %v233
        %v349 = vpop.f32.mrf.mxu0
        %v350 = vadd.f32 0.0, %v349
        %v351 = vpop.f32.mrf.mxu0
        %v352 = vadd.f32 0.0, %v351
        %353 = vdwg.mxu0
        %354 = vrot.lane.b32.xlu0 %v302, 17
        %v355 = vpop.permute.xlu0 %354
        %356 = vrot.lane.b32.xlu0 %v304, 17
        %v357 = vpop.permute.xlu0 %356
        %v358 = vlaneseq
        %v359 = vand.u32 %v358, 127
        %vm360 = vcmp.lt.s32.totalorder %v359, 17
        %v361 = vsel %vm360, %v355, %v357
        %v362 = vsel %vm360, %v357, %v355
        %v363 = vld [vmem:[%s3] sm:$0xff]
        %v364 = vld [vmem:[%s3 + $0x8] sm:$0xff]
        %v365 = vmul.f32 %v362, %v363
        %v366 = vmul.f32 %v361, %v364
        %367 = vrot.lane.b32.xlu0 %v308, 16
        %v368 = vpop.permute.xlu0 %367
        %369 = vrot.lane.b32.xlu0 %v310, 16
        %v370 = vpop.permute.xlu0 %369
        %vm371 = vcmp.lt.s32.totalorder %v359, 16
        %v372 = vsel %vm371, %v368, %v370
        %v373 = vsel %vm371, %v370, %v368
        %s374 = scalar_lea.vmem %s3, 16
        %v375 = vld [vmem:[%s374] sm:$0xff]
        %v376 = vld [vmem:[%s374 + $0x8] sm:$0xff]
        %v377 = vmul.f32 %v373, %v375
        %v378 = vmul.f32 %v372, %v376
        %v379 = vadd.f32 %v365, %v377
        %v380 = vadd.f32 %v366, %v378
        %381 = vrot.lane.b32.xlu0 %v314, 15
        %v382 = vpop.permute.xlu0 %381
        %383 = vrot.lane.b32.xlu0 %v316, 15
        %v384 = vpop.permute.xlu0 %383
        %vm385 = vcmp.lt.s32.totalorder %v359, 15
        %v386 = vsel %vm385, %v382, %v384
        %v387 = vsel %vm385, %v384, %v382
        %s388 = scalar_lea.vmem %s3, 32
        %v389 = vld [vmem:[%s388] sm:$0xff]
        %v390 = vld [vmem:[%s388 + $0x8] sm:$0xff]
        %v391 = vmul.f32 %v387, %v389
        %v392 = vmul.f32 %v386, %v390
        %v393 = vadd.f32 %v379, %v391
        %v394 = vadd.f32 %v380, %v392
        %395 = vrot.lane.b32.xlu0 %v320, 1
        %v396 = vpop.permute.xlu0 %395
        %397 = vrot.lane.b32.xlu0 %v322, 1
        %v398 = vpop.permute.xlu0 %397
        %vm399 = vcmp.lt.s32.totalorder %v359, 1
        %v400 = vsel %vm399, %v396, %v398
        %v401 = vsel %vm399, %v398, %v396
        %s402 = scalar_lea.vmem %s3, 48
        %v403 = vld [vmem:[%s402] sm:$0xff]
        %v404 = vld [vmem:[%s402 + $0x8] sm:$0xff]
        %v405 = vmul.f32 %v401, %v403
        %v406 = vmul.f32 %v400, %v404
        %v407 = vadd.f32 %v393, %v405
        %v408 = vadd.f32 %v394, %v406
        %v409 = vadd.f32 %v407, %v326
        %v410 = vadd.f32 %v408, %v328
        %411 = vrot.lane.b32.xlu0 %v332, 127
        %v412 = vpop.permute.xlu0 %411
        %413 = vrot.lane.b32.xlu0 %v334, 127
        %v414 = vpop.permute.xlu0 %413
        %vm415 = vcmp.lt.s32.totalorder %v359, 127
        %v416 = vsel %vm415, %v412, %v414
        %v417 = vsel %vm415, %v414, %v412
        %s418 = scalar_lea.vmem %s3, 80
        %v419 = vld [vmem:[%s418] sm:$0xff]
        %v420 = vld [vmem:[%s418 + $0x8] sm:$0xff]
        %v421 = vmul.f32 %v416, %v419
        %v422 = vmul.f32 %v417, %v420
        %v423 = vadd.f32 %v409, %v421
        %v424 = vadd.f32 %v410, %v422
        %425 = vrot.lane.b32.xlu0 %v338, 113
        %v426 = vpop.permute.xlu0 %425
        %427 = vrot.lane.b32.xlu0 %v340, 113
        %v428 = vpop.permute.xlu0 %427
        %vm429 = vcmp.lt.s32.totalorder %v359, 113
        %v430 = vsel %vm429, %v426, %v428
        %v431 = vsel %vm429, %v428, %v426
        %s432 = scalar_lea.vmem %s3, 96
        %v433 = vld [vmem:[%s432] sm:$0xff]
        %v434 = vld [vmem:[%s432 + $0x8] sm:$0xff]
        %v435 = vmul.f32 %v430, %v433
        %v436 = vmul.f32 %v431, %v434
        %v437 = vadd.f32 %v423, %v435
        %v438 = vadd.f32 %v424, %v436
        %439 = vrot.lane.b32.xlu0 %v344, 112
        %v440 = vpop.permute.xlu0 %439
        %441 = vrot.lane.b32.xlu0 %v346, 112
        %v442 = vpop.permute.xlu0 %441
        %vm443 = vcmp.lt.s32.totalorder %v359, 112
        %v444 = vsel %vm443, %v440, %v442
        %v445 = vsel %vm443, %v442, %v440
        %s446 = scalar_lea.vmem %s3, 112
        %v447 = vld [vmem:[%s446] sm:$0xff]
        %v448 = vld [vmem:[%s446 + $0x8] sm:$0xff]
        %v449 = vmul.f32 %v444, %v447
        %v450 = vmul.f32 %v445, %v448
        %v451 = vadd.f32 %v437, %v449
        %v452 = vadd.f32 %v438, %v450
        %453 = vrot.lane.b32.xlu0 %v350, 111
        %v454 = vpop.permute.xlu0 %453
        %455 = vrot.lane.b32.xlu0 %v352, 111
        %v456 = vpop.permute.xlu0 %455
        %vm457 = vcmp.lt.s32.totalorder %v359, 111
        %v458 = vsel %vm457, %v454, %v456
        %v459 = vsel %vm457, %v456, %v454
        %s460 = scalar_lea.vmem %s3, 128
        %v461 = vld [vmem:[%s460] sm:$0xff]
        %v462 = vld [vmem:[%s460 + $0x8] sm:$0xff]
        %v463 = vmul.f32 %v458, %v461
        %v464 = vmul.f32 %v459, %v462
        %v465 = vadd.f32 %v451, %v463
        %v466 = vadd.f32 %v452, %v464
        %v467 = vld [vmem:[%s2] sm:$0xff]
        %469 = vset.pattern.permute.xlu0 0
        %470 = vperm.xlu0 %469, %v467
        %v471 = vpop.permute.xlu0 %470
        %v473 = vadd.f32 %v465, %v471
        %v474 = vadd.f32 %v466, %v471
        %v475 = vmax.f32 %v473, 0.0
        %v476 = vmax.f32 %v474, 0.0
        %s477 = scalar_lea.vmem %s1, 72
        %v478 = vld [vmem:[%s477] sm:$0xff]
        %v479 = vld [vmem:[%s477 + $0x8] sm:$0xff]
        %v480 = vld [vmem:[%s477 + $0x10] sm:$0xff]
        %v481 = vld [vmem:[%s477 + $0x18] sm:$0xff]
        %v482 = vld [vmem:[%s477 + $0x20] sm:$0xff]
        %v483 = vld [vmem:[%s477 + $0x28] sm:$0xff]
        %v484 = vld [vmem:[%s477 + $0x30] sm:$0xff]
        %v485 = vld [vmem:[%s477 + $0x38] sm:$0xff]
        %v486 = vld [vmem:[%s477 + $0x40] sm:$0xff]
        %v488 = vsel %vm207, %v478, 0
        %v491 = vsel %vm207, %v479, 0
        %v494 = vsel %vm207, %v480, 0
        %v497 = vsel %vm207, %v481, 0
        %v500 = vsel %vm207, %v482, 0
        %v503 = vsel %vm207, %v483, 0
        %v506 = vsel %vm207, %v484, 0
        %v509 = vsel %vm207, %v485, 0
        %v512 = vsel %vm207, %v486, 0
        %514 = vmatprep.subr.mxu0 0.0
        %515 = vmatpush1.msra.mxu0 0.0
        %516 = vmatprep.subr.mxu0 0.0
        %517 = vmatpush1.msra.mxu0 0.0
        %518 = vmatprep.subr.mxu0 0.0
        %519 = vmatpush1.msra.mxu0 0.0
        %520 = vmatprep.subr.mxu0 0.0
        %521 = vmatpush1.msra.mxu0 0.0
        %522 = vmatprep.subr.mxu0 0.0
        %523 = vmatpush1.msra.mxu0 0.0
        %524 = vmatprep.subr.mxu0 0.0
        %525 = vmatpush1.msra.mxu0 0.0
        %526 = vmatprep.subr.mxu0 0.0
        %527 = vmatpush1.msra.mxu0 0.0
        %528 = vmatprep.subr.mxu0 0.0
        %529 = vmatpush1.msra.mxu0 0.0
        %530 = vmatprep.subr.mxu0 0.0
        %531 = vmatpush1.msra.mxu0 0.0
        %532 = vmatprep.subr.mxu0 0.0
        %533 = vmatpush1.msra.mxu0 0.0
        %534 = vmatprep.subr.mxu0 0.0
        %535 = vmatpush1.msra.mxu0 0.0
        %536 = vmatprep.subr.mxu0 0.0
        %537 = vmatpush1.msra.mxu0 0.0
        %538 = vmatprep.subr.mxu0 0.0
        %539 = vmatpush1.msra.mxu0 0.0
        %540 = vmatprep.subr.mxu0 0.0
        %541 = vmatpush1.msra.mxu0 0.0
        %542 = vmatprep.subr.mxu0 0.0
        %543 = vmatpush1.msra.mxu0 0.0
        %544 = vmatprep.subr.mxu0 %v476
        %545 = vmatpush1.msra.mxu0 %v475
        %546 = vmatprep.subr.mxu0 0.0
        %547 = vmatpush2.msra.mxu0 0.0
        %548 = vmatprep.subr.mxu0 0.0
        %549 = vmatpush2.msra.mxu0 0.0
        %550 = vmatprep.subr.mxu0 0.0
        %551 = vmatpush2.msra.mxu0 0.0
        %552 = vmatprep.subr.mxu0 0.0
        %553 = vmatpush2.msra.mxu0 0.0
        %554 = vmatprep.subr.mxu0 0.0
        %555 = vmatpush2.msra.mxu0 0.0
        %556 = vmatprep.subr.mxu0 0.0
        %557 = vmatpush2.msra.mxu0 0.0
        %558 = vmatprep.subr.mxu0 0.0
        %559 = vmatpush2.msra.mxu0 0.0
        %560 = vmatprep.subr.mxu0 0.0
        %561 = vmatpush2.msra.mxu0 0.0
        %562 = vmatprep.subr.mxu0 0.0
        %563 = vmatpush2.msra.mxu0 0.0
        %564 = vmatprep.subr.mxu0 0.0
        %565 = vmatpush2.msra.mxu0 0.0
        %566 = vmatprep.subr.mxu0 0.0
        %567 = vmatpush2.msra.mxu0 0.0
        %568 = vmatprep.subr.mxu0 0.0
        %569 = vmatpush2.msra.mxu0 0.0
        %570 = vmatprep.subr.mxu0 0.0
        %571 = vmatpush2.msra.mxu0 0.0
        %572 = vmatprep.subr.mxu0 0.0
        %573 = vmatpush2.msra.mxu0 0.0
        %574 = vmatprep.subr.mxu0 0.0
        %575 = vmatpush2.msra.mxu0 0.0
        %576 = vmatprep.subr.mxu0 0.0
        %577 = vmatpush2.msra.mxu0 0.0
        %578 = vmatprep.mubr.f32.mxu0 0.0
        %579 = vmatmul.mubr.f32.gmra.mxu0 %v488
        %v580 = vpop.f32.mrf.mxu0
        %v581 = vadd.f32 0.0, %v580
        %v582 = vpop.f32.mrf.mxu0
        %v583 = vadd.f32 0.0, %v582
        %584 = vmatprep.mubr.f32.mxu0 0.0
        %585 = vmatmul.mubr.f32.gmra.mxu0 %v491
        %v586 = vpop.f32.mrf.mxu0
        %v587 = vadd.f32 0.0, %v586
        %v588 = vpop.f32.mrf.mxu0
        %v589 = vadd.f32 0.0, %v588
        %590 = vmatprep.mubr.f32.mxu0 0.0
        %591 = vmatmul.mubr.f32.gmra.mxu0 %v494
        %v592 = vpop.f32.mrf.mxu0
        %v593 = vadd.f32 0.0, %v592
        %v594 = vpop.f32.mrf.mxu0
        %v595 = vadd.f32 0.0, %v594
        %596 = vmatprep.mubr.f32.mxu0 0.0
        %597 = vmatmul.mubr.f32.gmra.mxu0 %v497
        %v598 = vpop.f32.mrf.mxu0
        %v599 = vadd.f32 0.0, %v598
        %v600 = vpop.f32.mrf.mxu0
        %v601 = vadd.f32 0.0, %v600
        %602 = vmatprep.mubr.f32.mxu0 0.0
        %603 = vmatmul.mubr.f32.gmra.mxu0 %v500
        %v604 = vpop.f32.mrf.mxu0
        %v605 = vadd.f32 0.0, %v604
        %v606 = vpop.f32.mrf.mxu0
        %v607 = vadd.f32 0.0, %v606
        %608 = vmatprep.mubr.f32.mxu0 0.0
        %609 = vmatmul.mubr.f32.gmra.mxu0 %v503
        %v610 = vpop.f32.mrf.mxu0
        %v611 = vadd.f32 0.0, %v610
        %v612 = vpop.f32.mrf.mxu0
        %v613 = vadd.f32 0.0, %v612
        %614 = vmatprep.mubr.f32.mxu0 0.0
        %615 = vmatmul.mubr.f32.gmra.mxu0 %v506
        %v616 = vpop.f32.mrf.mxu0
        %v617 = vadd.f32 0.0, %v616
        %v618 = vpop.f32.mrf.mxu0
        %v619 = vadd.f32 0.0, %v618
        %620 = vmatprep.mubr.f32.mxu0 0.0
        %621 = vmatmul.mubr.f32.gmra.mxu0 %v509
        %v622 = vpop.f32.mrf.mxu0
        %v623 = vadd.f32 0.0, %v622
        %v624 = vpop.f32.mrf.mxu0
        %v625 = vadd.f32 0.0, %v624
        %626 = vmatprep.mubr.f32.mxu0 0.0
        %627 = vmatmul.mubr.f32.gmra.mxu0 %v512
        %v628 = vpop.f32.mrf.mxu0
        %v629 = vadd.f32 0.0, %v628
        %v630 = vpop.f32.mrf.mxu0
        %v631 = vadd.f32 0.0, %v630
        %632 = vdwg.mxu0
        %633 = vrot.lane.b32.xlu0 %v581, 17
        %v634 = vpop.permute.xlu0 %633
        %635 = vrot.lane.b32.xlu0 %v583, 17
        %v636 = vpop.permute.xlu0 %635
        %v637 = vsel %vm360, %v634, %v636
        %v638 = vsel %vm360, %v636, %v634
        %v639 = vmul.f32 %v638, %v363
        %v640 = vmul.f32 %v637, %v364
        %641 = vrot.lane.b32.xlu0 %v587, 16
        %v642 = vpop.permute.xlu0 %641
        %643 = vrot.lane.b32.xlu0 %v589, 16
        %v644 = vpop.permute.xlu0 %643
        %v645 = vsel %vm371, %v642, %v644
        %v646 = vsel %vm371, %v644, %v642
        %v647 = vmul.f32 %v646, %v375
        %v648 = vmul.f32 %v645, %v376
        %v649 = vadd.f32 %v639, %v647
        %v650 = vadd.f32 %v640, %v648
        %651 = vrot.lane.b32.xlu0 %v593, 15
        %v652 = vpop.permute.xlu0 %651
        %653 = vrot.lane.b32.xlu0 %v595, 15
        %v654 = vpop.permute.xlu0 %653
        %v655 = vsel %vm385, %v652, %v654
        %v656 = vsel %vm385, %v654, %v652
        %v657 = vmul.f32 %v656, %v389
        %v658 = vmul.f32 %v655, %v390
        %v659 = vadd.f32 %v649, %v657
        %v660 = vadd.f32 %v650, %v658
        %661 = vrot.lane.b32.xlu0 %v599, 1
        %v662 = vpop.permute.xlu0 %661
        %663 = vrot.lane.b32.xlu0 %v601, 1
        %v664 = vpop.permute.xlu0 %663
        %v665 = vsel %vm399, %v662, %v664
        %v666 = vsel %vm399, %v664, %v662
        %v667 = vmul.f32 %v666, %v403
        %v668 = vmul.f32 %v665, %v404
        %v669 = vadd.f32 %v659, %v667
        %v670 = vadd.f32 %v660, %v668
        %v671 = vadd.f32 %v669, %v605
        %v672 = vadd.f32 %v670, %v607
        %673 = vrot.lane.b32.xlu0 %v611, 127
        %v674 = vpop.permute.xlu0 %673
        %675 = vrot.lane.b32.xlu0 %v613, 127
        %v676 = vpop.permute.xlu0 %675
        %v677 = vsel %vm415, %v674, %v676
        %v678 = vsel %vm415, %v676, %v674
        %v679 = vmul.f32 %v677, %v419
        %v680 = vmul.f32 %v678, %v420
        %v681 = vadd.f32 %v671, %v679
        %v682 = vadd.f32 %v672, %v680
        %683 = vrot.lane.b32.xlu0 %v617, 113
        %v684 = vpop.permute.xlu0 %683
        %685 = vrot.lane.b32.xlu0 %v619, 113
        %v686 = vpop.permute.xlu0 %685
        %v687 = vsel %vm429, %v684, %v686
        %v688 = vsel %vm429, %v686, %v684
        %v689 = vmul.f32 %v687, %v433
        %v690 = vmul.f32 %v688, %v434
        %v691 = vadd.f32 %v681, %v689
        %v692 = vadd.f32 %v682, %v690
        %693 = vrot.lane.b32.xlu0 %v623, 112
        %v694 = vpop.permute.xlu0 %693
        %695 = vrot.lane.b32.xlu0 %v625, 112
        %v696 = vpop.permute.xlu0 %695
        %v697 = vsel %vm443, %v694, %v696
        %v698 = vsel %vm443, %v696, %v694
        %v699 = vmul.f32 %v697, %v447
        %v700 = vmul.f32 %v698, %v448
        %v701 = vadd.f32 %v691, %v699
        %v702 = vadd.f32 %v692, %v700
        %703 = vrot.lane.b32.xlu0 %v629, 111
        %v704 = vpop.permute.xlu0 %703
        %705 = vrot.lane.b32.xlu0 %v631, 111
        %v706 = vpop.permute.xlu0 %705
        %v707 = vsel %vm457, %v704, %v706
        %v708 = vsel %vm457, %v706, %v704
        %v709 = vmul.f32 %v707, %v461
        %v710 = vmul.f32 %v708, %v462
        %v711 = vadd.f32 %v701, %v709
        %v712 = vadd.f32 %v702, %v710
        %s713 = scalar_lea.vmem %s2, 8
        %v714 = vld [vmem:[%s713] sm:$0xff]
        %716 = vset.pattern.permute.xlu0 0
        %717 = vperm.xlu0 %716, %v714
        %v718 = vpop.permute.xlu0 %717
        %v720 = vadd.f32 %v711, %v718
        %v721 = vadd.f32 %v712, %v718
        %v722 = vmax.f32 %v720, 0.0
        %v723 = vmax.f32 %v721, 0.0
        %s724 = scalar_lea.vmem %s1, 144
        %v725 = vld [vmem:[%s724] sm:$0xff]
        %v726 = vld [vmem:[%s724 + $0x8] sm:$0xff]
        %v727 = vld [vmem:[%s724 + $0x10] sm:$0xff]
        %v728 = vld [vmem:[%s724 + $0x18] sm:$0xff]
        %v729 = vld [vmem:[%s724 + $0x20] sm:$0xff]
        %v730 = vld [vmem:[%s724 + $0x28] sm:$0xff]
        %v731 = vld [vmem:[%s724 + $0x30] sm:$0xff]
        %v732 = vld [vmem:[%s724 + $0x38] sm:$0xff]
        %v733 = vld [vmem:[%s724 + $0x40] sm:$0xff]
        %v735 = vsel %vm207, %v725, 0
        %v738 = vsel %vm207, %v726, 0
        %v741 = vsel %vm207, %v727, 0
        %v744 = vsel %vm207, %v728, 0
        %v747 = vsel %vm207, %v729, 0
        %v750 = vsel %vm207, %v730, 0
        %v753 = vsel %vm207, %v731, 0
        %v756 = vsel %vm207, %v732, 0
        %v759 = vsel %vm207, %v733, 0
        %761 = vmatprep.subr.mxu0 0.0
        %762 = vmatpush1.msra.mxu0 0.0
        %763 = vmatprep.subr.mxu0 0.0
        %764 = vmatpush1.msra.mxu0 0.0
        %765 = vmatprep.subr.mxu0 0.0
        %766 = vmatpush1.msra.mxu0 0.0
        %767 = vmatprep.subr.mxu0 0.0
        %768 = vmatpush1.msra.mxu0 0.0
        %769 = vmatprep.subr.mxu0 0.0
        %770 = vmatpush1.msra.mxu0 0.0
        %771 = vmatprep.subr.mxu0 0.0
        %772 = vmatpush1.msra.mxu0 0.0
        %773 = vmatprep.subr.mxu0 0.0
        %774 = vmatpush1.msra.mxu0 0.0
        %775 = vmatprep.subr.mxu0 0.0
        %776 = vmatpush1.msra.mxu0 0.0
        %777 = vmatprep.subr.mxu0 0.0
        %778 = vmatpush1.msra.mxu0 0.0
        %779 = vmatprep.subr.mxu0 0.0
        %780 = vmatpush1.msra.mxu0 0.0
        %781 = vmatprep.subr.mxu0 0.0
        %782 = vmatpush1.msra.mxu0 0.0
        %783 = vmatprep.subr.mxu0 0.0
        %784 = vmatpush1.msra.mxu0 0.0
        %785 = vmatprep.subr.mxu0 0.0
        %786 = vmatpush1.msra.mxu0 0.0
        %787 = vmatprep.subr.mxu0 0.0
        %788 = vmatpush1.msra.mxu0 0.0
        %789 = vmatprep.subr.mxu0 0.0
        %790 = vmatpush1.msra.mxu0 0.0
        %791 = vmatprep.subr.mxu0 %v723
        %792 = vmatpush1.msra.mxu0 %v722
        %793 = vmatprep.subr.mxu0 0.0
        %794 = vmatpush2.msra.mxu0 0.0
        %795 = vmatprep.subr.mxu0 0.0
        %796 = vmatpush2.msra.mxu0 0.0
        %797 = vmatprep.subr.mxu0 0.0
        %798 = vmatpush2.msra.mxu0 0.0
        %799 = vmatprep.subr.mxu0 0.0
        %800 = vmatpush2.msra.mxu0 0.0
        %801 = vmatprep.subr.mxu0 0.0
        %802 = vmatpush2.msra.mxu0 0.0
        %803 = vmatprep.subr.mxu0 0.0
        %804 = vmatpush2.msra.mxu0 0.0
        %805 = vmatprep.subr.mxu0 0.0
        %806 = vmatpush2.msra.mxu0 0.0
        %807 = vmatprep.subr.mxu0 0.0
        %808 = vmatpush2.msra.mxu0 0.0
        %809 = vmatprep.subr.mxu0 0.0
        %810 = vmatpush2.msra.mxu0 0.0
        %811 = vmatprep.subr.mxu0 0.0
        %812 = vmatpush2.msra.mxu0 0.0
        %813 = vmatprep.subr.mxu0 0.0
        %814 = vmatpush2.msra.mxu0 0.0
        %815 = vmatprep.subr.mxu0 0.0
        %816 = vmatpush2.msra.mxu0 0.0
        %817 = vmatprep.subr.mxu0 0.0
        %818 = vmatpush2.msra.mxu0 0.0
        %819 = vmatprep.subr.mxu0 0.0
        %820 = vmatpush2.msra.mxu0 0.0
        %821 = vmatprep.subr.mxu0 0.0
        %822 = vmatpush2.msra.mxu0 0.0
        %823 = vmatprep.subr.mxu0 0.0
        %824 = vmatpush2.msra.mxu0 0.0
        %825 = vmatprep.mubr.f32.mxu0 0.0
        %826 = vmatmul.mubr.f32.gmra.mxu0 %v735
        %v827 = vpop.f32.mrf.mxu0
        %v828 = vadd.f32 0.0, %v827
        %v829 = vpop.f32.mrf.mxu0
        %v830 = vadd.f32 0.0, %v829
        %831 = vmatprep.mubr.f32.mxu0 0.0
        %832 = vmatmul.mubr.f32.gmra.mxu0 %v738
        %v833 = vpop.f32.mrf.mxu0
        %v834 = vadd.f32 0.0, %v833
        %v835 = vpop.f32.mrf.mxu0
        %v836 = vadd.f32 0.0, %v835
        %837 = vmatprep.mubr.f32.mxu0 0.0
        %838 = vmatmul.mubr.f32.gmra.mxu0 %v741
        %v839 = vpop.f32.mrf.mxu0
        %v840 = vadd.f32 0.0, %v839
        %v841 = vpop.f32.mrf.mxu0
        %v842 = vadd.f32 0.0, %v841
        %843 = vmatprep.mubr.f32.mxu0 0.0
        %844 = vmatmul.mubr.f32.gmra.mxu0 %v744
        %v845 = vpop.f32.mrf.mxu0
        %v846 = vadd.f32 0.0, %v845
        %v847 = vpop.f32.mrf.mxu0
        %v848 = vadd.f32 0.0, %v847
        %849 = vmatprep.mubr.f32.mxu0 0.0
        %850 = vmatmul.mubr.f32.gmra.mxu0 %v747
        %v851 = vpop.f32.mrf.mxu0
        %v852 = vadd.f32 0.0, %v851
        %v853 = vpop.f32.mrf.mxu0
        %v854 = vadd.f32 0.0, %v853
        %855 = vmatprep.mubr.f32.mxu0 0.0
        %856 = vmatmul.mubr.f32.gmra.mxu0 %v750
        %v857 = vpop.f32.mrf.mxu0
        %v858 = vadd.f32 0.0, %v857
        %v859 = vpop.f32.mrf.mxu0
        %v860 = vadd.f32 0.0, %v859
        %861 = vmatprep.mubr.f32.mxu0 0.0
        %862 = vmatmul.mubr.f32.gmra.mxu0 %v753
        %v863 = vpop.f32.mrf.mxu0
        %v864 = vadd.f32 0.0, %v863
        %v865 = vpop.f32.mrf.mxu0
        %v866 = vadd.f32 0.0, %v865
        %867 = vmatprep.mubr.f32.mxu0 0.0
        %868 = vmatmul.mubr.f32.gmra.mxu0 %v756
        %v869 = vpop.f32.mrf.mxu0
        %v870 = vadd.f32 0.0, %v869
        %v871 = vpop.f32.mrf.mxu0
        %v872 = vadd.f32 0.0, %v871
        %873 = vmatprep.mubr.f32.mxu0 0.0
        %874 = vmatmul.mubr.f32.gmra.mxu0 %v759
        %v875 = vpop.f32.mrf.mxu0
        %v876 = vadd.f32 0.0, %v875
        %v877 = vpop.f32.mrf.mxu0
        %v878 = vadd.f32 0.0, %v877
        %879 = vdwg.mxu0
        %880 = vrot.lane.b32.xlu0 %v828, 17
        %v881 = vpop.permute.xlu0 %880
        %882 = vrot.lane.b32.xlu0 %v830, 17
        %v883 = vpop.permute.xlu0 %882
        %v884 = vsel %vm360, %v881, %v883
        %v885 = vsel %vm360, %v883, %v881
        %v886 = vmul.f32 %v885, %v363
        %v887 = vmul.f32 %v884, %v364
        %888 = vrot.lane.b32.xlu0 %v834, 16
        %v889 = vpop.permute.xlu0 %888
        %890 = vrot.lane.b32.xlu0 %v836, 16
        %v891 = vpop.permute.xlu0 %890
        %v892 = vsel %vm371, %v889, %v891
        %v893 = vsel %vm371, %v891, %v889
        %v894 = vmul.f32 %v893, %v375
        %v895 = vmul.f32 %v892, %v376
        %v896 = vadd.f32 %v886, %v894
        %v897 = vadd.f32 %v887, %v895
        %898 = vrot.lane.b32.xlu0 %v840, 15
        %v899 = vpop.permute.xlu0 %898
        %900 = vrot.lane.b32.xlu0 %v842, 15
        %v901 = vpop.permute.xlu0 %900
        %v902 = vsel %vm385, %v899, %v901
        %v903 = vsel %vm385, %v901, %v899
        %v904 = vmul.f32 %v903, %v389
        %v905 = vmul.f32 %v902, %v390
        %v906 = vadd.f32 %v896, %v904
        %v907 = vadd.f32 %v897, %v905
        %908 = vrot.lane.b32.xlu0 %v846, 1
        %v909 = vpop.permute.xlu0 %908
        %910 = vrot.lane.b32.xlu0 %v848, 1
        %v911 = vpop.permute.xlu0 %910
        %v912 = vsel %vm399, %v909, %v911
        %v913 = vsel %vm399, %v911, %v909
        %v914 = vmul.f32 %v913, %v403
        %v915 = vmul.f32 %v912, %v404
        %v916 = vadd.f32 %v906, %v914
        %v917 = vadd.f32 %v907, %v915
        %v918 = vadd.f32 %v916, %v852
        %v919 = vadd.f32 %v917, %v854
        %920 = vrot.lane.b32.xlu0 %v858, 127
        %v921 = vpop.permute.xlu0 %920
        %922 = vrot.lane.b32.xlu0 %v860, 127
        %v923 = vpop.permute.xlu0 %922
        %v924 = vsel %vm415, %v921, %v923
        %v925 = vsel %vm415, %v923, %v921
        %v926 = vmul.f32 %v924, %v419
        %v927 = vmul.f32 %v925, %v420
        %v928 = vadd.f32 %v918, %v926
        %v929 = vadd.f32 %v919, %v927
        %930 = vrot.lane.b32.xlu0 %v864, 113
        %v931 = vpop.permute.xlu0 %930
        %932 = vrot.lane.b32.xlu0 %v866, 113
        %v933 = vpop.permute.xlu0 %932
        %v934 = vsel %vm429, %v931, %v933
        %v935 = vsel %vm429, %v933, %v931
        %v936 = vmul.f32 %v934, %v433
        %v937 = vmul.f32 %v935, %v434
        %v938 = vadd.f32 %v928, %v936
        %v939 = vadd.f32 %v929, %v937
        %940 = vrot.lane.b32.xlu0 %v870, 112
        %v941 = vpop.permute.xlu0 %940
        %942 = vrot.lane.b32.xlu0 %v872, 112
        %v943 = vpop.permute.xlu0 %942
        %v944 = vsel %vm443, %v941, %v943
        %v945 = vsel %vm443, %v943, %v941
        %v946 = vmul.f32 %v944, %v447
        %v947 = vmul.f32 %v945, %v448
        %v948 = vadd.f32 %v938, %v946
        %v949 = vadd.f32 %v939, %v947
        %950 = vrot.lane.b32.xlu0 %v876, 111
        %v951 = vpop.permute.xlu0 %950
        %952 = vrot.lane.b32.xlu0 %v878, 111
        %v953 = vpop.permute.xlu0 %952
        %v954 = vsel %vm457, %v951, %v953
        %v955 = vsel %vm457, %v953, %v951
        %v956 = vmul.f32 %v954, %v461
        %v957 = vmul.f32 %v955, %v462
        %v958 = vadd.f32 %v948, %v956
        %v959 = vadd.f32 %v949, %v957
        %s960 = scalar_lea.vmem %s2, 16
        %v961 = vld [vmem:[%s960] sm:$0xff]
        %963 = vset.pattern.permute.xlu0 0
        %964 = vperm.xlu0 %963, %v961
        %v965 = vpop.permute.xlu0 %964
        %v967 = vadd.f32 %v958, %v965
        %v968 = vadd.f32 %v959, %v965
        %v969 = vmax.f32 %v967, 0.0
        %v970 = vmax.f32 %v968, 0.0
        %s971 = scalar_lea.vmem %s1, 216
        %v972 = vld [vmem:[%s971] sm:$0xff]
        %v973 = vld [vmem:[%s971 + $0x8] sm:$0xff]
        %v974 = vld [vmem:[%s971 + $0x10] sm:$0xff]
        %v975 = vld [vmem:[%s971 + $0x18] sm:$0xff]
        %v976 = vld [vmem:[%s971 + $0x20] sm:$0xff]
        %v977 = vld [vmem:[%s971 + $0x28] sm:$0xff]
        %v978 = vld [vmem:[%s971 + $0x30] sm:$0xff]
        %v979 = vld [vmem:[%s971 + $0x38] sm:$0xff]
        %v980 = vld [vmem:[%s971 + $0x40] sm:$0xff]
        %v982 = vsel %vm207, %v972, 0
        %v985 = vsel %vm207, %v973, 0
        %v988 = vsel %vm207, %v974, 0
        %v991 = vsel %vm207, %v975, 0
        %v994 = vsel %vm207, %v976, 0
        %v997 = vsel %vm207, %v977, 0
        %v1000 = vsel %vm207, %v978, 0
        %v1003 = vsel %vm207, %v979, 0
        %v1006 = vsel %vm207, %v980, 0
        %1008 = vmatprep.subr.mxu0 0.0
        %1009 = vmatpush1.msra.mxu0 0.0
        %1010 = vmatprep.subr.mxu0 0.0
        %1011 = vmatpush1.msra.mxu0 0.0
        %1012 = vmatprep.subr.mxu0 0.0
        %1013 = vmatpush1.msra.mxu0 0.0
        %1014 = vmatprep.subr.mxu0 0.0
        %1015 = vmatpush1.msra.mxu0 0.0
        %1016 = vmatprep.subr.mxu0 0.0
        %1017 = vmatpush1.msra.mxu0 0.0
        %1018 = vmatprep.subr.mxu0 0.0
        %1019 = vmatpush1.msra.mxu0 0.0
        %1020 = vmatprep.subr.mxu0 0.0
        %1021 = vmatpush1.msra.mxu0 0.0
        %1022 = vmatprep.subr.mxu0 0.0
        %1023 = vmatpush1.msra.mxu0 0.0
        %1024 = vmatprep.subr.mxu0 0.0
        %1025 = vmatpush1.msra.mxu0 0.0
        %1026 = vmatprep.subr.mxu0 0.0
        %1027 = vmatpush1.msra.mxu0 0.0
        %1028 = vmatprep.subr.mxu0 0.0
        %1029 = vmatpush1.msra.mxu0 0.0
        %1030 = vmatprep.subr.mxu0 0.0
        %1031 = vmatpush1.msra.mxu0 0.0
        %1032 = vmatprep.subr.mxu0 0.0
        %1033 = vmatpush1.msra.mxu0 0.0
        %1034 = vmatprep.subr.mxu0 0.0
        %1035 = vmatpush1.msra.mxu0 0.0
        %1036 = vmatprep.subr.mxu0 0.0
        %1037 = vmatpush1.msra.mxu0 0.0
        %1038 = vmatprep.subr.mxu0 %v970
        %1039 = vmatpush1.msra.mxu0 %v969
        %1040 = vmatprep.subr.mxu0 0.0
        %1041 = vmatpush2.msra.mxu0 0.0
        %1042 = vmatprep.subr.mxu0 0.0
        %1043 = vmatpush2.msra.mxu0 0.0
        %1044 = vmatprep.subr.mxu0 0.0
        %1045 = vmatpush2.msra.mxu0 0.0
        %1046 = vmatprep.subr.mxu0 0.0
        %1047 = vmatpush2.msra.mxu0 0.0
        %1048 = vmatprep.subr.mxu0 0.0
        %1049 = vmatpush2.msra.mxu0 0.0
        %1050 = vmatprep.subr.mxu0 0.0
        %1051 = vmatpush2.msra.mxu0 0.0
        %1052 = vmatprep.subr.mxu0 0.0
        %1053 = vmatpush2.msra.mxu0 0.0
        %1054 = vmatprep.subr.mxu0 0.0
        %1055 = vmatpush2.msra.mxu0 0.0
        %1056 = vmatprep.subr.mxu0 0.0
        %1057 = vmatpush2.msra.mxu0 0.0
        %1058 = vmatprep.subr.mxu0 0.0
        %1059 = vmatpush2.msra.mxu0 0.0
        %1060 = vmatprep.subr.mxu0 0.0
        %1061 = vmatpush2.msra.mxu0 0.0
        %1062 = vmatprep.subr.mxu0 0.0
        %1063 = vmatpush2.msra.mxu0 0.0
        %1064 = vmatprep.subr.mxu0 0.0
        %1065 = vmatpush2.msra.mxu0 0.0
        %1066 = vmatprep.subr.mxu0 0.0
        %1067 = vmatpush2.msra.mxu0 0.0
        %1068 = vmatprep.subr.mxu0 0.0
        %1069 = vmatpush2.msra.mxu0 0.0
        %1070 = vmatprep.subr.mxu0 0.0
        %1071 = vmatpush2.msra.mxu0 0.0
        %1072 = vmatprep.mubr.f32.mxu0 0.0
        %1073 = vmatmul.mubr.f32.gmra.mxu0 %v982
        %v1074 = vpop.f32.mrf.mxu0
        %v1075 = vadd.f32 0.0, %v1074
        %v1076 = vpop.f32.mrf.mxu0
        %v1077 = vadd.f32 0.0, %v1076
        %1078 = vmatprep.mubr.f32.mxu0 0.0
        %1079 = vmatmul.mubr.f32.gmra.mxu0 %v985
        %v1080 = vpop.f32.mrf.mxu0
        %v1081 = vadd.f32 0.0, %v1080
        %v1082 = vpop.f32.mrf.mxu0
        %v1083 = vadd.f32 0.0, %v1082
        %1084 = vmatprep.mubr.f32.mxu0 0.0
        %1085 = vmatmul.mubr.f32.gmra.mxu0 %v988
        %v1086 = vpop.f32.mrf.mxu0
        %v1087 = vadd.f32 0.0, %v1086
        %v1088 = vpop.f32.mrf.mxu0
        %v1089 = vadd.f32 0.0, %v1088
        %1090 = vmatprep.mubr.f32.mxu0 0.0
        %1091 = vmatmul.mubr.f32.gmra.mxu0 %v991
        %v1092 = vpop.f32.mrf.mxu0
        %v1093 = vadd.f32 0.0, %v1092
        %v1094 = vpop.f32.mrf.mxu0
        %v1095 = vadd.f32 0.0, %v1094
        %1096 = vmatprep.mubr.f32.mxu0 0.0
        %1097 = vmatmul.mubr.f32.gmra.mxu0 %v994
        %v1098 = vpop.f32.mrf.mxu0
        %v1099 = vadd.f32 0.0, %v1098
        %v1100 = vpop.f32.mrf.mxu0
        %v1101 = vadd.f32 0.0, %v1100
        %1102 = vmatprep.mubr.f32.mxu0 0.0
        %1103 = vmatmul.mubr.f32.gmra.mxu0 %v997
        %v1104 = vpop.f32.mrf.mxu0
        %v1105 = vadd.f32 0.0, %v1104
        %v1106 = vpop.f32.mrf.mxu0
        %v1107 = vadd.f32 0.0, %v1106
        %1108 = vmatprep.mubr.f32.mxu0 0.0
        %1109 = vmatmul.mubr.f32.gmra.mxu0 %v1000
        %v1110 = vpop.f32.mrf.mxu0
        %v1111 = vadd.f32 0.0, %v1110
        %v1112 = vpop.f32.mrf.mxu0
        %v1113 = vadd.f32 0.0, %v1112
        %1114 = vmatprep.mubr.f32.mxu0 0.0
        %1115 = vmatmul.mubr.f32.gmra.mxu0 %v1003
        %v1116 = vpop.f32.mrf.mxu0
        %v1117 = vadd.f32 0.0, %v1116
        %v1118 = vpop.f32.mrf.mxu0
        %v1119 = vadd.f32 0.0, %v1118
        %1120 = vmatprep.mubr.f32.mxu0 0.0
        %1121 = vmatmul.mubr.f32.gmra.mxu0 %v1006
        %v1122 = vpop.f32.mrf.mxu0
        %v1123 = vadd.f32 0.0, %v1122
        %v1124 = vpop.f32.mrf.mxu0
        %v1125 = vadd.f32 0.0, %v1124
        %1126 = vdwg.mxu0
        %1127 = vrot.lane.b32.xlu0 %v1075, 17
        %v1128 = vpop.permute.xlu0 %1127
        %1129 = vrot.lane.b32.xlu0 %v1077, 17
        %v1130 = vpop.permute.xlu0 %1129
        %v1131 = vsel %vm360, %v1128, %v1130
        %v1132 = vsel %vm360, %v1130, %v1128
        %v1133 = vmul.f32 %v1132, %v363
        %v1134 = vmul.f32 %v1131, %v364
        %1135 = vrot.lane.b32.xlu0 %v1081, 16
        %v1136 = vpop.permute.xlu0 %1135
        %1137 = vrot.lane.b32.xlu0 %v1083, 16
        %v1138 = vpop.permute.xlu0 %1137
        %v1139 = vsel %vm371, %v1136, %v1138
        %v1140 = vsel %vm371, %v1138, %v1136
        %v1141 = vmul.f32 %v1140, %v375
        %v1142 = vmul.f32 %v1139, %v376
        %v1143 = vadd.f32 %v1133, %v1141
        %v1144 = vadd.f32 %v1134, %v1142
        %1145 = vrot.lane.b32.xlu0 %v1087, 15
        %v1146 = vpop.permute.xlu0 %1145
        %1147 = vrot.lane.b32.xlu0 %v1089, 15
        %v1148 = vpop.permute.xlu0 %1147
        %v1149 = vsel %vm385, %v1146, %v1148
        %v1150 = vsel %vm385, %v1148, %v1146
        %v1151 = vmul.f32 %v1150, %v389
        %v1152 = vmul.f32 %v1149, %v390
        %v1153 = vadd.f32 %v1143, %v1151
        %v1154 = vadd.f32 %v1144, %v1152
        %1155 = vrot.lane.b32.xlu0 %v1093, 1
        %v1156 = vpop.permute.xlu0 %1155
        %1157 = vrot.lane.b32.xlu0 %v1095, 1
        %v1158 = vpop.permute.xlu0 %1157
        %v1159 = vsel %vm399, %v1156, %v1158
        %v1160 = vsel %vm399, %v1158, %v1156
        %v1161 = vmul.f32 %v1160, %v403
        %v1162 = vmul.f32 %v1159, %v404
        %v1163 = vadd.f32 %v1153, %v1161
        %v1164 = vadd.f32 %v1154, %v1162
        %v1165 = vadd.f32 %v1163, %v1099
        %v1166 = vadd.f32 %v1164, %v1101
        %1167 = vrot.lane.b32.xlu0 %v1105, 127
        %v1168 = vpop.permute.xlu0 %1167
        %1169 = vrot.lane.b32.xlu0 %v1107, 127
        %v1170 = vpop.permute.xlu0 %1169
        %v1171 = vsel %vm415, %v1168, %v1170
        %v1172 = vsel %vm415, %v1170, %v1168
        %v1173 = vmul.f32 %v1171, %v419
        %v1174 = vmul.f32 %v1172, %v420
        %v1175 = vadd.f32 %v1165, %v1173
        %v1176 = vadd.f32 %v1166, %v1174
        %1177 = vrot.lane.b32.xlu0 %v1111, 113
        %v1178 = vpop.permute.xlu0 %1177
        %1179 = vrot.lane.b32.xlu0 %v1113, 113
        %v1180 = vpop.permute.xlu0 %1179
        %v1181 = vsel %vm429, %v1178, %v1180
        %v1182 = vsel %vm429, %v1180, %v1178
        %v1183 = vmul.f32 %v1181, %v433
        %v1184 = vmul.f32 %v1182, %v434
        %v1185 = vadd.f32 %v1175, %v1183
        %v1186 = vadd.f32 %v1176, %v1184
        %1187 = vrot.lane.b32.xlu0 %v1117, 112
        %v1188 = vpop.permute.xlu0 %1187
        %1189 = vrot.lane.b32.xlu0 %v1119, 112
        %v1190 = vpop.permute.xlu0 %1189
        %v1191 = vsel %vm443, %v1188, %v1190
        %v1192 = vsel %vm443, %v1190, %v1188
        %v1193 = vmul.f32 %v1191, %v447
        %v1194 = vmul.f32 %v1192, %v448
        %v1195 = vadd.f32 %v1185, %v1193
        %v1196 = vadd.f32 %v1186, %v1194
        %1197 = vrot.lane.b32.xlu0 %v1123, 111
        %v1198 = vpop.permute.xlu0 %1197
        %1199 = vrot.lane.b32.xlu0 %v1125, 111
        %v1200 = vpop.permute.xlu0 %1199
        %v1201 = vsel %vm457, %v1198, %v1200
        %v1202 = vsel %vm457, %v1200, %v1198
        %v1203 = vmul.f32 %v1201, %v461
        %v1204 = vmul.f32 %v1202, %v462
        %v1205 = vadd.f32 %v1195, %v1203
        %v1206 = vadd.f32 %v1196, %v1204
        %s1207 = scalar_lea.vmem %s2, 24
        %v1208 = vld [vmem:[%s1207] sm:$0xff]
        %1210 = vset.pattern.permute.xlu0 0
        %1211 = vperm.xlu0 %1210, %v1208
        %v1212 = vpop.permute.xlu0 %1211
        %v1214 = vadd.f32 %v1205, %v1212
        %v1215 = vadd.f32 %v1206, %v1212
        %v1216 = vmax.f32 %v1214, 0.0
        %v1217 = vmax.f32 %v1215, 0.0
        %s1218 = scalar_lea.vmem %s1, 288
        %v1219 = vld [vmem:[%s1218] sm:$0xff]
        %v1220 = vld [vmem:[%s1218 + $0x8] sm:$0xff]
        %v1221 = vld [vmem:[%s1218 + $0x10] sm:$0xff]
        %v1222 = vld [vmem:[%s1218 + $0x18] sm:$0xff]
        %v1223 = vld [vmem:[%s1218 + $0x20] sm:$0xff]
        %v1224 = vld [vmem:[%s1218 + $0x28] sm:$0xff]
        %v1225 = vld [vmem:[%s1218 + $0x30] sm:$0xff]
        %v1226 = vld [vmem:[%s1218 + $0x38] sm:$0xff]
        %v1227 = vld [vmem:[%s1218 + $0x40] sm:$0xff]
        %v1229 = vsel %vm207, %v1219, 0
        %v1232 = vsel %vm207, %v1220, 0
        %v1235 = vsel %vm207, %v1221, 0
        %v1238 = vsel %vm207, %v1222, 0
        %v1241 = vsel %vm207, %v1223, 0
        %v1244 = vsel %vm207, %v1224, 0
        %v1247 = vsel %vm207, %v1225, 0
        %v1250 = vsel %vm207, %v1226, 0
        %v1253 = vsel %vm207, %v1227, 0
        %1255 = vmatprep.subr.mxu0 0.0
        %1256 = vmatpush1.msra.mxu0 0.0
        %1257 = vmatprep.subr.mxu0 0.0
        %1258 = vmatpush1.msra.mxu0 0.0
        %1259 = vmatprep.subr.mxu0 0.0
        %1260 = vmatpush1.msra.mxu0 0.0
        %1261 = vmatprep.subr.mxu0 0.0
        %1262 = vmatpush1.msra.mxu0 0.0
        %1263 = vmatprep.subr.mxu0 0.0
        %1264 = vmatpush1.msra.mxu0 0.0
        %1265 = vmatprep.subr.mxu0 0.0
        %1266 = vmatpush1.msra.mxu0 0.0
        %1267 = vmatprep.subr.mxu0 0.0
        %1268 = vmatpush1.msra.mxu0 0.0
        %1269 = vmatprep.subr.mxu0 0.0
        %1270 = vmatpush1.msra.mxu0 0.0
        %1271 = vmatprep.subr.mxu0 0.0
        %1272 = vmatpush1.msra.mxu0 0.0
        %1273 = vmatprep.subr.mxu0 0.0
        %1274 = vmatpush1.msra.mxu0 0.0
        %1275 = vmatprep.subr.mxu0 0.0
        %1276 = vmatpush1.msra.mxu0 0.0
        %1277 = vmatprep.subr.mxu0 0.0
        %1278 = vmatpush1.msra.mxu0 0.0
        %1279 = vmatprep.subr.mxu0 0.0
        %1280 = vmatpush1.msra.mxu0 0.0
        %1281 = vmatprep.subr.mxu0 0.0
        %1282 = vmatpush1.msra.mxu0 0.0
        %1283 = vmatprep.subr.mxu0 0.0
        %1284 = vmatpush1.msra.mxu0 0.0
        %1285 = vmatprep.subr.mxu0 %v1217
        %1286 = vmatpush1.msra.mxu0 %v1216
        %1287 = vmatprep.subr.mxu0 0.0
        %1288 = vmatpush2.msra.mxu0 0.0
        %1289 = vmatprep.subr.mxu0 0.0
        %1290 = vmatpush2.msra.mxu0 0.0
        %1291 = vmatprep.subr.mxu0 0.0
        %1292 = vmatpush2.msra.mxu0 0.0
        %1293 = vmatprep.subr.mxu0 0.0
        %1294 = vmatpush2.msra.mxu0 0.0
        %1295 = vmatprep.subr.mxu0 0.0
        %1296 = vmatpush2.msra.mxu0 0.0
        %1297 = vmatprep.subr.mxu0 0.0
        %1298 = vmatpush2.msra.mxu0 0.0
        %1299 = vmatprep.subr.mxu0 0.0
        %1300 = vmatpush2.msra.mxu0 0.0
        %1301 = vmatprep.subr.mxu0 0.0
        %1302 = vmatpush2.msra.mxu0 0.0
        %1303 = vmatprep.subr.mxu0 0.0
        %1304 = vmatpush2.msra.mxu0 0.0
        %1305 = vmatprep.subr.mxu0 0.0
        %1306 = vmatpush2.msra.mxu0 0.0
        %1307 = vmatprep.subr.mxu0 0.0
        %1308 = vmatpush2.msra.mxu0 0.0
        %1309 = vmatprep.subr.mxu0 0.0
        %1310 = vmatpush2.msra.mxu0 0.0
        %1311 = vmatprep.subr.mxu0 0.0
        %1312 = vmatpush2.msra.mxu0 0.0
        %1313 = vmatprep.subr.mxu0 0.0
        %1314 = vmatpush2.msra.mxu0 0.0
        %1315 = vmatprep.subr.mxu0 0.0
        %1316 = vmatpush2.msra.mxu0 0.0
        %1317 = vmatprep.subr.mxu0 0.0
        %1318 = vmatpush2.msra.mxu0 0.0
        %1319 = vmatprep.mubr.f32.mxu0 0.0
        %1320 = vmatmul.mubr.f32.gmra.mxu0 %v1229
        %v1321 = vpop.f32.mrf.mxu0
        %v1322 = vadd.f32 0.0, %v1321
        %v1323 = vpop.f32.mrf.mxu0
        %v1324 = vadd.f32 0.0, %v1323
        %1325 = vmatprep.mubr.f32.mxu0 0.0
        %1326 = vmatmul.mubr.f32.gmra.mxu0 %v1232
        %v1327 = vpop.f32.mrf.mxu0
        %v1328 = vadd.f32 0.0, %v1327
        %v1329 = vpop.f32.mrf.mxu0
        %v1330 = vadd.f32 0.0, %v1329
        %1331 = vmatprep.mubr.f32.mxu0 0.0
        %1332 = vmatmul.mubr.f32.gmra.mxu0 %v1235
        %v1333 = vpop.f32.mrf.mxu0
        %v1334 = vadd.f32 0.0, %v1333
        %v1335 = vpop.f32.mrf.mxu0
        %v1336 = vadd.f32 0.0, %v1335
        %1337 = vmatprep.mubr.f32.mxu0 0.0
        %1338 = vmatmul.mubr.f32.gmra.mxu0 %v1238
        %v1339 = vpop.f32.mrf.mxu0
        %v1340 = vadd.f32 0.0, %v1339
        %v1341 = vpop.f32.mrf.mxu0
        %v1342 = vadd.f32 0.0, %v1341
        %1343 = vmatprep.mubr.f32.mxu0 0.0
        %1344 = vmatmul.mubr.f32.gmra.mxu0 %v1241
        %v1345 = vpop.f32.mrf.mxu0
        %v1346 = vadd.f32 0.0, %v1345
        %v1347 = vpop.f32.mrf.mxu0
        %v1348 = vadd.f32 0.0, %v1347
        %1349 = vmatprep.mubr.f32.mxu0 0.0
        %1350 = vmatmul.mubr.f32.gmra.mxu0 %v1244
        %v1351 = vpop.f32.mrf.mxu0
        %v1352 = vadd.f32 0.0, %v1351
        %v1353 = vpop.f32.mrf.mxu0
        %v1354 = vadd.f32 0.0, %v1353
        %1355 = vmatprep.mubr.f32.mxu0 0.0
        %1356 = vmatmul.mubr.f32.gmra.mxu0 %v1247
        %v1357 = vpop.f32.mrf.mxu0
        %v1358 = vadd.f32 0.0, %v1357
        %v1359 = vpop.f32.mrf.mxu0
        %v1360 = vadd.f32 0.0, %v1359
        %1361 = vmatprep.mubr.f32.mxu0 0.0
        %1362 = vmatmul.mubr.f32.gmra.mxu0 %v1250
        %v1363 = vpop.f32.mrf.mxu0
        %v1364 = vadd.f32 0.0, %v1363
        %v1365 = vpop.f32.mrf.mxu0
        %v1366 = vadd.f32 0.0, %v1365
        %1367 = vmatprep.mubr.f32.mxu0 0.0
        %1368 = vmatmul.mubr.f32.gmra.mxu0 %v1253
        %v1369 = vpop.f32.mrf.mxu0
        %v1370 = vadd.f32 0.0, %v1369
        %v1371 = vpop.f32.mrf.mxu0
        %v1372 = vadd.f32 0.0, %v1371
        %1373 = vdwg.mxu0
        %1374 = vrot.lane.b32.xlu0 %v1322, 17
        %v1375 = vpop.permute.xlu0 %1374
        %1376 = vrot.lane.b32.xlu0 %v1324, 17
        %v1377 = vpop.permute.xlu0 %1376
        %v1378 = vsel %vm360, %v1375, %v1377
        %v1379 = vsel %vm360, %v1377, %v1375
        %v1380 = vmul.f32 %v1379, %v363
        %v1381 = vmul.f32 %v1378, %v364
        %1382 = vrot.lane.b32.xlu0 %v1328, 16
        %v1383 = vpop.permute.xlu0 %1382
        %1384 = vrot.lane.b32.xlu0 %v1330, 16
        %v1385 = vpop.permute.xlu0 %1384
        %v1386 = vsel %vm371, %v1383, %v1385
        %v1387 = vsel %vm371, %v1385, %v1383
        %v1388 = vmul.f32 %v1387, %v375
        %v1389 = vmul.f32 %v1386, %v376
        %v1390 = vadd.f32 %v1380, %v1388
        %v1391 = vadd.f32 %v1381, %v1389
        %1392 = vrot.lane.b32.xlu0 %v1334, 15
        %v1393 = vpop.permute.xlu0 %1392
        %1394 = vrot.lane.b32.xlu0 %v1336, 15
        %v1395 = vpop.permute.xlu0 %1394
        %v1396 = vsel %vm385, %v1393, %v1395
        %v1397 = vsel %vm385, %v1395, %v1393
        %v1398 = vmul.f32 %v1397, %v389
        %v1399 = vmul.f32 %v1396, %v390
        %v1400 = vadd.f32 %v1390, %v1398
        %v1401 = vadd.f32 %v1391, %v1399
        %1402 = vrot.lane.b32.xlu0 %v1340, 1
        %v1403 = vpop.permute.xlu0 %1402
        %1404 = vrot.lane.b32.xlu0 %v1342, 1
        %v1405 = vpop.permute.xlu0 %1404
        %v1406 = vsel %vm399, %v1403, %v1405
        %v1407 = vsel %vm399, %v1405, %v1403
        %v1408 = vmul.f32 %v1407, %v403
        %v1409 = vmul.f32 %v1406, %v404
        %v1410 = vadd.f32 %v1400, %v1408
        %v1411 = vadd.f32 %v1401, %v1409
        %v1412 = vadd.f32 %v1410, %v1346
        %v1413 = vadd.f32 %v1411, %v1348
        %1414 = vrot.lane.b32.xlu0 %v1352, 127
        %v1415 = vpop.permute.xlu0 %1414
        %1416 = vrot.lane.b32.xlu0 %v1354, 127
        %v1417 = vpop.permute.xlu0 %1416
        %v1418 = vsel %vm415, %v1415, %v1417
        %v1419 = vsel %vm415, %v1417, %v1415
        %v1420 = vmul.f32 %v1418, %v419
        %v1421 = vmul.f32 %v1419, %v420
        %v1422 = vadd.f32 %v1412, %v1420
        %v1423 = vadd.f32 %v1413, %v1421
        %1424 = vrot.lane.b32.xlu0 %v1358, 113
        %v1425 = vpop.permute.xlu0 %1424
        %1426 = vrot.lane.b32.xlu0 %v1360, 113
        %v1427 = vpop.permute.xlu0 %1426
        %v1428 = vsel %vm429, %v1425, %v1427
        %v1429 = vsel %vm429, %v1427, %v1425
        %v1430 = vmul.f32 %v1428, %v433
        %v1431 = vmul.f32 %v1429, %v434
        %v1432 = vadd.f32 %v1422, %v1430
        %v1433 = vadd.f32 %v1423, %v1431
        %1434 = vrot.lane.b32.xlu0 %v1364, 112
        %v1435 = vpop.permute.xlu0 %1434
        %1436 = vrot.lane.b32.xlu0 %v1366, 112
        %v1437 = vpop.permute.xlu0 %1436
        %v1438 = vsel %vm443, %v1435, %v1437
        %v1439 = vsel %vm443, %v1437, %v1435
        %v1440 = vmul.f32 %v1438, %v447
        %v1441 = vmul.f32 %v1439, %v448
        %v1442 = vadd.f32 %v1432, %v1440
        %v1443 = vadd.f32 %v1433, %v1441
        %1444 = vrot.lane.b32.xlu0 %v1370, 111
        %v1445 = vpop.permute.xlu0 %1444
        %1446 = vrot.lane.b32.xlu0 %v1372, 111
        %v1447 = vpop.permute.xlu0 %1446
        %v1448 = vsel %vm457, %v1445, %v1447
        %v1449 = vsel %vm457, %v1447, %v1445
        %v1450 = vmul.f32 %v1448, %v461
        %v1451 = vmul.f32 %v1449, %v462
        %v1452 = vadd.f32 %v1442, %v1450
        %v1453 = vadd.f32 %v1443, %v1451
        %s1454 = scalar_lea.vmem %s2, 32
        %v1455 = vld [vmem:[%s1454] sm:$0xff]
        %1457 = vset.pattern.permute.xlu0 0
        %1458 = vperm.xlu0 %1457, %v1455
        %v1459 = vpop.permute.xlu0 %1458
        %v1461 = vadd.f32 %v1452, %v1459
        %v1462 = vadd.f32 %v1453, %v1459
        %v1463 = vmax.f32 %v1461, 0.0
        %v1464 = vmax.f32 %v1462, 0.0
        %s1465 = scalar_lea.vmem %s1, 360
        %v1466 = vld [vmem:[%s1465] sm:$0xff]
        %v1467 = vld [vmem:[%s1465 + $0x8] sm:$0xff]
        %v1468 = vld [vmem:[%s1465 + $0x10] sm:$0xff]
        %v1469 = vld [vmem:[%s1465 + $0x18] sm:$0xff]
        %v1470 = vld [vmem:[%s1465 + $0x20] sm:$0xff]
        %v1471 = vld [vmem:[%s1465 + $0x28] sm:$0xff]
        %v1472 = vld [vmem:[%s1465 + $0x30] sm:$0xff]
        %v1473 = vld [vmem:[%s1465 + $0x38] sm:$0xff]
        %v1474 = vld [vmem:[%s1465 + $0x40] sm:$0xff]
        %v1476 = vsel %vm207, %v1466, 0
        %v1479 = vsel %vm207, %v1467, 0
        %v1482 = vsel %vm207, %v1468, 0
        %v1485 = vsel %vm207, %v1469, 0
        %v1488 = vsel %vm207, %v1470, 0
        %v1491 = vsel %vm207, %v1471, 0
        %v1494 = vsel %vm207, %v1472, 0
        %v1497 = vsel %vm207, %v1473, 0
        %v1500 = vsel %vm207, %v1474, 0
        %1502 = vmatprep.subr.mxu0 0.0
        %1503 = vmatpush1.msra.mxu0 0.0
        %1504 = vmatprep.subr.mxu0 0.0
        %1505 = vmatpush1.msra.mxu0 0.0
        %1506 = vmatprep.subr.mxu0 0.0
        %1507 = vmatpush1.msra.mxu0 0.0
        %1508 = vmatprep.subr.mxu0 0.0
        %1509 = vmatpush1.msra.mxu0 0.0
        %1510 = vmatprep.subr.mxu0 0.0
        %1511 = vmatpush1.msra.mxu0 0.0
        %1512 = vmatprep.subr.mxu0 0.0
        %1513 = vmatpush1.msra.mxu0 0.0
        %1514 = vmatprep.subr.mxu0 0.0
        %1515 = vmatpush1.msra.mxu0 0.0
        %1516 = vmatprep.subr.mxu0 0.0
        %1517 = vmatpush1.msra.mxu0 0.0
        %1518 = vmatprep.subr.mxu0 0.0
        %1519 = vmatpush1.msra.mxu0 0.0
        %1520 = vmatprep.subr.mxu0 0.0
        %1521 = vmatpush1.msra.mxu0 0.0
        %1522 = vmatprep.subr.mxu0 0.0
        %1523 = vmatpush1.msra.mxu0 0.0
        %1524 = vmatprep.subr.mxu0 0.0
        %1525 = vmatpush1.msra.mxu0 0.0
        %1526 = vmatprep.subr.mxu0 0.0
        %1527 = vmatpush1.msra.mxu0 0.0
        %1528 = vmatprep.subr.mxu0 0.0
        %1529 = vmatpush1.msra.mxu0 0.0
        %1530 = vmatprep.subr.mxu0 0.0
        %1531 = vmatpush1.msra.mxu0 0.0
        %1532 = vmatprep.subr.mxu0 %v1464
        %1533 = vmatpush1.msra.mxu0 %v1463
        %1534 = vmatprep.subr.mxu0 0.0
        %1535 = vmatpush2.msra.mxu0 0.0
        %1536 = vmatprep.subr.mxu0 0.0
        %1537 = vmatpush2.msra.mxu0 0.0
        %1538 = vmatprep.subr.mxu0 0.0
        %1539 = vmatpush2.msra.mxu0 0.0
        %1540 = vmatprep.subr.mxu0 0.0
        %1541 = vmatpush2.msra.mxu0 0.0
        %1542 = vmatprep.subr.mxu0 0.0
        %1543 = vmatpush2.msra.mxu0 0.0
        %1544 = vmatprep.subr.mxu0 0.0
        %1545 = vmatpush2.msra.mxu0 0.0
        %1546 = vmatprep.subr.mxu0 0.0
        %1547 = vmatpush2.msra.mxu0 0.0
        %1548 = vmatprep.subr.mxu0 0.0
        %1549 = vmatpush2.msra.mxu0 0.0
        %1550 = vmatprep.subr.mxu0 0.0
        %1551 = vmatpush2.msra.mxu0 0.0
        %1552 = vmatprep.subr.mxu0 0.0
        %1553 = vmatpush2.msra.mxu0 0.0
        %1554 = vmatprep.subr.mxu0 0.0
        %1555 = vmatpush2.msra.mxu0 0.0
        %1556 = vmatprep.subr.mxu0 0.0
        %1557 = vmatpush2.msra.mxu0 0.0
        %1558 = vmatprep.subr.mxu0 0.0
        %1559 = vmatpush2.msra.mxu0 0.0
        %1560 = vmatprep.subr.mxu0 0.0
        %1561 = vmatpush2.msra.mxu0 0.0
        %1562 = vmatprep.subr.mxu0 0.0
        %1563 = vmatpush2.msra.mxu0 0.0
        %1564 = vmatprep.subr.mxu0 0.0
        %1565 = vmatpush2.msra.mxu0 0.0
        %1566 = vmatprep.mubr.f32.mxu0 0.0
        %1567 = vmatmul.mubr.f32.gmra.mxu0 %v1476
        %v1568 = vpop.f32.mrf.mxu0
        %v1569 = vadd.f32 0.0, %v1568
        %v1570 = vpop.f32.mrf.mxu0
        %v1571 = vadd.f32 0.0, %v1570
        %1572 = vmatprep.mubr.f32.mxu0 0.0
        %1573 = vmatmul.mubr.f32.gmra.mxu0 %v1479
        %v1574 = vpop.f32.mrf.mxu0
        %v1575 = vadd.f32 0.0, %v1574
        %v1576 = vpop.f32.mrf.mxu0
        %v1577 = vadd.f32 0.0, %v1576
        %1578 = vmatprep.mubr.f32.mxu0 0.0
        %1579 = vmatmul.mubr.f32.gmra.mxu0 %v1482
        %v1580 = vpop.f32.mrf.mxu0
        %v1581 = vadd.f32 0.0, %v1580
        %v1582 = vpop.f32.mrf.mxu0
        %v1583 = vadd.f32 0.0, %v1582
        %1584 = vmatprep.mubr.f32.mxu0 0.0
        %1585 = vmatmul.mubr.f32.gmra.mxu0 %v1485
        %v1586 = vpop.f32.mrf.mxu0
        %v1587 = vadd.f32 0.0, %v1586
        %v1588 = vpop.f32.mrf.mxu0
        %v1589 = vadd.f32 0.0, %v1588
        %1590 = vmatprep.mubr.f32.mxu0 0.0
        %1591 = vmatmul.mubr.f32.gmra.mxu0 %v1488
        %v1592 = vpop.f32.mrf.mxu0
        %v1593 = vadd.f32 0.0, %v1592
        %v1594 = vpop.f32.mrf.mxu0
        %v1595 = vadd.f32 0.0, %v1594
        %1596 = vmatprep.mubr.f32.mxu0 0.0
        %1597 = vmatmul.mubr.f32.gmra.mxu0 %v1491
        %v1598 = vpop.f32.mrf.mxu0
        %v1599 = vadd.f32 0.0, %v1598
        %v1600 = vpop.f32.mrf.mxu0
        %v1601 = vadd.f32 0.0, %v1600
        %1602 = vmatprep.mubr.f32.mxu0 0.0
        %1603 = vmatmul.mubr.f32.gmra.mxu0 %v1494
        %v1604 = vpop.f32.mrf.mxu0
        %v1605 = vadd.f32 0.0, %v1604
        %v1606 = vpop.f32.mrf.mxu0
        %v1607 = vadd.f32 0.0, %v1606
        %1608 = vmatprep.mubr.f32.mxu0 0.0
        %1609 = vmatmul.mubr.f32.gmra.mxu0 %v1497
        %v1610 = vpop.f32.mrf.mxu0
        %v1611 = vadd.f32 0.0, %v1610
        %v1612 = vpop.f32.mrf.mxu0
        %v1613 = vadd.f32 0.0, %v1612
        %1614 = vmatprep.mubr.f32.mxu0 0.0
        %1615 = vmatmul.mubr.f32.gmra.mxu0 %v1500
        %v1616 = vpop.f32.mrf.mxu0
        %v1617 = vadd.f32 0.0, %v1616
        %v1618 = vpop.f32.mrf.mxu0
        %v1619 = vadd.f32 0.0, %v1618
        %1620 = vdwg.mxu0
        %1621 = vrot.lane.b32.xlu0 %v1569, 17
        %v1622 = vpop.permute.xlu0 %1621
        %1623 = vrot.lane.b32.xlu0 %v1571, 17
        %v1624 = vpop.permute.xlu0 %1623
        %v1625 = vsel %vm360, %v1622, %v1624
        %v1626 = vsel %vm360, %v1624, %v1622
        %v1627 = vmul.f32 %v1626, %v363
        %v1628 = vmul.f32 %v1625, %v364
        %1629 = vrot.lane.b32.xlu0 %v1575, 16
        %v1630 = vpop.permute.xlu0 %1629
        %1631 = vrot.lane.b32.xlu0 %v1577, 16
        %v1632 = vpop.permute.xlu0 %1631
        %v1633 = vsel %vm371, %v1630, %v1632
        %v1634 = vsel %vm371, %v1632, %v1630
        %v1635 = vmul.f32 %v1634, %v375
        %v1636 = vmul.f32 %v1633, %v376
        %v1637 = vadd.f32 %v1627, %v1635
        %v1638 = vadd.f32 %v1628, %v1636
        %1639 = vrot.lane.b32.xlu0 %v1581, 15
        %v1640 = vpop.permute.xlu0 %1639
        %1641 = vrot.lane.b32.xlu0 %v1583, 15
        %v1642 = vpop.permute.xlu0 %1641
        %v1643 = vsel %vm385, %v1640, %v1642
        %v1644 = vsel %vm385, %v1642, %v1640
        %v1645 = vmul.f32 %v1644, %v389
        %v1646 = vmul.f32 %v1643, %v390
        %v1647 = vadd.f32 %v1637, %v1645
        %v1648 = vadd.f32 %v1638, %v1646
        %1649 = vrot.lane.b32.xlu0 %v1587, 1
        %v1650 = vpop.permute.xlu0 %1649
        %1651 = vrot.lane.b32.xlu0 %v1589, 1
        %v1652 = vpop.permute.xlu0 %1651
        %v1653 = vsel %vm399, %v1650, %v1652
        %v1654 = vsel %vm399, %v1652, %v1650
        %v1655 = vmul.f32 %v1654, %v403
        %v1656 = vmul.f32 %v1653, %v404
        %v1657 = vadd.f32 %v1647, %v1655
        %v1658 = vadd.f32 %v1648, %v1656
        %v1659 = vadd.f32 %v1657, %v1593
        %v1660 = vadd.f32 %v1658, %v1595
        %1661 = vrot.lane.b32.xlu0 %v1599, 127
        %v1662 = vpop.permute.xlu0 %1661
        %1663 = vrot.lane.b32.xlu0 %v1601, 127
        %v1664 = vpop.permute.xlu0 %1663
        %v1665 = vsel %vm415, %v1662, %v1664
        %v1666 = vsel %vm415, %v1664, %v1662
        %v1667 = vmul.f32 %v1665, %v419
        %v1668 = vmul.f32 %v1666, %v420
        %v1669 = vadd.f32 %v1659, %v1667
        %v1670 = vadd.f32 %v1660, %v1668
        %1671 = vrot.lane.b32.xlu0 %v1605, 113
        %v1672 = vpop.permute.xlu0 %1671
        %1673 = vrot.lane.b32.xlu0 %v1607, 113
        %v1674 = vpop.permute.xlu0 %1673
        %v1675 = vsel %vm429, %v1672, %v1674
        %v1676 = vsel %vm429, %v1674, %v1672
        %v1677 = vmul.f32 %v1675, %v433
        %v1678 = vmul.f32 %v1676, %v434
        %v1679 = vadd.f32 %v1669, %v1677
        %v1680 = vadd.f32 %v1670, %v1678
        %1681 = vrot.lane.b32.xlu0 %v1611, 112
        %v1682 = vpop.permute.xlu0 %1681
        %1683 = vrot.lane.b32.xlu0 %v1613, 112
        %v1684 = vpop.permute.xlu0 %1683
        %v1685 = vsel %vm443, %v1682, %v1684
        %v1686 = vsel %vm443, %v1684, %v1682
        %v1687 = vmul.f32 %v1685, %v447
        %v1688 = vmul.f32 %v1686, %v448
        %v1689 = vadd.f32 %v1679, %v1687
        %v1690 = vadd.f32 %v1680, %v1688
        %1691 = vrot.lane.b32.xlu0 %v1617, 111
        %v1692 = vpop.permute.xlu0 %1691
        %1693 = vrot.lane.b32.xlu0 %v1619, 111
        %v1694 = vpop.permute.xlu0 %1693
        %v1695 = vsel %vm457, %v1692, %v1694
        %v1696 = vsel %vm457, %v1694, %v1692
        %v1697 = vmul.f32 %v1695, %v461
        %v1698 = vmul.f32 %v1696, %v462
        %v1699 = vadd.f32 %v1689, %v1697
        %v1700 = vadd.f32 %v1690, %v1698
        %s1701 = scalar_lea.vmem %s2, 40
        %v1702 = vld [vmem:[%s1701] sm:$0xff]
        %1704 = vset.pattern.permute.xlu0 0
        %1705 = vperm.xlu0 %1704, %v1702
        %v1706 = vpop.permute.xlu0 %1705
        %v1708 = vadd.f32 %v1699, %v1706
        %v1709 = vadd.f32 %v1700, %v1706
        %v1710 = vmax.f32 %v1708, 0.0
        %v1711 = vmax.f32 %v1709, 0.0
        %s1712 = scalar_lea.vmem %s1, 432
        %v1713 = vld [vmem:[%s1712] sm:$0xff]
        %v1714 = vld [vmem:[%s1712 + $0x8] sm:$0xff]
        %v1715 = vld [vmem:[%s1712 + $0x10] sm:$0xff]
        %v1716 = vld [vmem:[%s1712 + $0x18] sm:$0xff]
        %v1717 = vld [vmem:[%s1712 + $0x20] sm:$0xff]
        %v1718 = vld [vmem:[%s1712 + $0x28] sm:$0xff]
        %v1719 = vld [vmem:[%s1712 + $0x30] sm:$0xff]
        %v1720 = vld [vmem:[%s1712 + $0x38] sm:$0xff]
        %v1721 = vld [vmem:[%s1712 + $0x40] sm:$0xff]
        %v1723 = vsel %vm207, %v1713, 0
        %v1726 = vsel %vm207, %v1714, 0
        %v1729 = vsel %vm207, %v1715, 0
        %v1732 = vsel %vm207, %v1716, 0
        %v1735 = vsel %vm207, %v1717, 0
        %v1738 = vsel %vm207, %v1718, 0
        %v1741 = vsel %vm207, %v1719, 0
        %v1744 = vsel %vm207, %v1720, 0
        %v1747 = vsel %vm207, %v1721, 0
        %1749 = vmatprep.subr.mxu0 0.0
        %1750 = vmatpush1.msra.mxu0 0.0
        %1751 = vmatprep.subr.mxu0 0.0
        %1752 = vmatpush1.msra.mxu0 0.0
        %1753 = vmatprep.subr.mxu0 0.0
        %1754 = vmatpush1.msra.mxu0 0.0
        %1755 = vmatprep.subr.mxu0 0.0
        %1756 = vmatpush1.msra.mxu0 0.0
        %1757 = vmatprep.subr.mxu0 0.0
        %1758 = vmatpush1.msra.mxu0 0.0
        %1759 = vmatprep.subr.mxu0 0.0
        %1760 = vmatpush1.msra.mxu0 0.0
        %1761 = vmatprep.subr.mxu0 0.0
        %1762 = vmatpush1.msra.mxu0 0.0
        %1763 = vmatprep.subr.mxu0 0.0
        %1764 = vmatpush1.msra.mxu0 0.0
        %1765 = vmatprep.subr.mxu0 0.0
        %1766 = vmatpush1.msra.mxu0 0.0
        %1767 = vmatprep.subr.mxu0 0.0
        %1768 = vmatpush1.msra.mxu0 0.0
        %1769 = vmatprep.subr.mxu0 0.0
        %1770 = vmatpush1.msra.mxu0 0.0
        %1771 = vmatprep.subr.mxu0 0.0
        %1772 = vmatpush1.msra.mxu0 0.0
        %1773 = vmatprep.subr.mxu0 0.0
        %1774 = vmatpush1.msra.mxu0 0.0
        %1775 = vmatprep.subr.mxu0 0.0
        %1776 = vmatpush1.msra.mxu0 0.0
        %1777 = vmatprep.subr.mxu0 0.0
        %1778 = vmatpush1.msra.mxu0 0.0
        %1779 = vmatprep.subr.mxu0 %v1711
        %1780 = vmatpush1.msra.mxu0 %v1710
        %1781 = vmatprep.subr.mxu0 0.0
        %1782 = vmatpush2.msra.mxu0 0.0
        %1783 = vmatprep.subr.mxu0 0.0
        %1784 = vmatpush2.msra.mxu0 0.0
        %1785 = vmatprep.subr.mxu0 0.0
        %1786 = vmatpush2.msra.mxu0 0.0
        %1787 = vmatprep.subr.mxu0 0.0
        %1788 = vmatpush2.msra.mxu0 0.0
        %1789 = vmatprep.subr.mxu0 0.0
        %1790 = vmatpush2.msra.mxu0 0.0
        %1791 = vmatprep.subr.mxu0 0.0
        %1792 = vmatpush2.msra.mxu0 0.0
        %1793 = vmatprep.subr.mxu0 0.0
        %1794 = vmatpush2.msra.mxu0 0.0
        %1795 = vmatprep.subr.mxu0 0.0
        %1796 = vmatpush2.msra.mxu0 0.0
        %1797 = vmatprep.subr.mxu0 0.0
        %1798 = vmatpush2.msra.mxu0 0.0
        %1799 = vmatprep.subr.mxu0 0.0
        %1800 = vmatpush2.msra.mxu0 0.0
        %1801 = vmatprep.subr.mxu0 0.0
        %1802 = vmatpush2.msra.mxu0 0.0
        %1803 = vmatprep.subr.mxu0 0.0
        %1804 = vmatpush2.msra.mxu0 0.0
        %1805 = vmatprep.subr.mxu0 0.0
        %1806 = vmatpush2.msra.mxu0 0.0
        %1807 = vmatprep.subr.mxu0 0.0
        %1808 = vmatpush2.msra.mxu0 0.0
        %1809 = vmatprep.subr.mxu0 0.0
        %1810 = vmatpush2.msra.mxu0 0.0
        %1811 = vmatprep.subr.mxu0 0.0
        %1812 = vmatpush2.msra.mxu0 0.0
        %1813 = vmatprep.mubr.f32.mxu0 0.0
        %1814 = vmatmul.mubr.f32.gmra.mxu0 %v1723
        %v1815 = vpop.f32.mrf.mxu0
        %v1816 = vadd.f32 0.0, %v1815
        %v1817 = vpop.f32.mrf.mxu0
        %v1818 = vadd.f32 0.0, %v1817
        %1819 = vmatprep.mubr.f32.mxu0 0.0
        %1820 = vmatmul.mubr.f32.gmra.mxu0 %v1726
        %v1821 = vpop.f32.mrf.mxu0
        %v1822 = vadd.f32 0.0, %v1821
        %v1823 = vpop.f32.mrf.mxu0
        %v1824 = vadd.f32 0.0, %v1823
        %1825 = vmatprep.mubr.f32.mxu0 0.0
        %1826 = vmatmul.mubr.f32.gmra.mxu0 %v1729
        %v1827 = vpop.f32.mrf.mxu0
        %v1828 = vadd.f32 0.0, %v1827
        %v1829 = vpop.f32.mrf.mxu0
        %v1830 = vadd.f32 0.0, %v1829
        %1831 = vmatprep.mubr.f32.mxu0 0.0
        %1832 = vmatmul.mubr.f32.gmra.mxu0 %v1732
        %v1833 = vpop.f32.mrf.mxu0
        %v1834 = vadd.f32 0.0, %v1833
        %v1835 = vpop.f32.mrf.mxu0
        %v1836 = vadd.f32 0.0, %v1835
        %1837 = vmatprep.mubr.f32.mxu0 0.0
        %1838 = vmatmul.mubr.f32.gmra.mxu0 %v1735
        %v1839 = vpop.f32.mrf.mxu0
        %v1840 = vadd.f32 0.0, %v1839
        %v1841 = vpop.f32.mrf.mxu0
        %v1842 = vadd.f32 0.0, %v1841
        %1843 = vmatprep.mubr.f32.mxu0 0.0
        %1844 = vmatmul.mubr.f32.gmra.mxu0 %v1738
        %v1845 = vpop.f32.mrf.mxu0
        %v1846 = vadd.f32 0.0, %v1845
        %v1847 = vpop.f32.mrf.mxu0
        %v1848 = vadd.f32 0.0, %v1847
        %1849 = vmatprep.mubr.f32.mxu0 0.0
        %1850 = vmatmul.mubr.f32.gmra.mxu0 %v1741
        %v1851 = vpop.f32.mrf.mxu0
        %v1852 = vadd.f32 0.0, %v1851
        %v1853 = vpop.f32.mrf.mxu0
        %v1854 = vadd.f32 0.0, %v1853
        %1855 = vmatprep.mubr.f32.mxu0 0.0
        %1856 = vmatmul.mubr.f32.gmra.mxu0 %v1744
        %v1857 = vpop.f32.mrf.mxu0
        %v1858 = vadd.f32 0.0, %v1857
        %v1859 = vpop.f32.mrf.mxu0
        %v1860 = vadd.f32 0.0, %v1859
        %1861 = vmatprep.mubr.f32.mxu0 0.0
        %1862 = vmatmul.mubr.f32.gmra.mxu0 %v1747
        %v1863 = vpop.f32.mrf.mxu0
        %v1864 = vadd.f32 0.0, %v1863
        %v1865 = vpop.f32.mrf.mxu0
        %v1866 = vadd.f32 0.0, %v1865
        %1867 = vdwg.mxu0
        %1868 = vrot.lane.b32.xlu0 %v1816, 17
        %v1869 = vpop.permute.xlu0 %1868
        %1870 = vrot.lane.b32.xlu0 %v1818, 17
        %v1871 = vpop.permute.xlu0 %1870
        %v1872 = vsel %vm360, %v1869, %v1871
        %v1873 = vsel %vm360, %v1871, %v1869
        %v1874 = vmul.f32 %v1873, %v363
        %v1875 = vmul.f32 %v1872, %v364
        %1876 = vrot.lane.b32.xlu0 %v1822, 16
        %v1877 = vpop.permute.xlu0 %1876
        %1878 = vrot.lane.b32.xlu0 %v1824, 16
        %v1879 = vpop.permute.xlu0 %1878
        %v1880 = vsel %vm371, %v1877, %v1879
        %v1881 = vsel %vm371, %v1879, %v1877
        %v1882 = vmul.f32 %v1881, %v375
        %v1883 = vmul.f32 %v1880, %v376
        %v1884 = vadd.f32 %v1874, %v1882
        %v1885 = vadd.f32 %v1875, %v1883
        %1886 = vrot.lane.b32.xlu0 %v1828, 15
        %v1887 = vpop.permute.xlu0 %1886
        %1888 = vrot.lane.b32.xlu0 %v1830, 15
        %v1889 = vpop.permute.xlu0 %1888
        %v1890 = vsel %vm385, %v1887, %v1889
        %v1891 = vsel %vm385, %v1889, %v1887
        %v1892 = vmul.f32 %v1891, %v389
        %v1893 = vmul.f32 %v1890, %v390
        %v1894 = vadd.f32 %v1884, %v1892
        %v1895 = vadd.f32 %v1885, %v1893
        %1896 = vrot.lane.b32.xlu0 %v1834, 1
        %v1897 = vpop.permute.xlu0 %1896
        %1898 = vrot.lane.b32.xlu0 %v1836, 1
        %v1899 = vpop.permute.xlu0 %1898
        %v1900 = vsel %vm399, %v1897, %v1899
        %v1901 = vsel %vm399, %v1899, %v1897
        %v1902 = vmul.f32 %v1901, %v403
        %v1903 = vmul.f32 %v1900, %v404
        %v1904 = vadd.f32 %v1894, %v1902
        %v1905 = vadd.f32 %v1895, %v1903
        %v1906 = vadd.f32 %v1904, %v1840
        %v1907 = vadd.f32 %v1905, %v1842
        %1908 = vrot.lane.b32.xlu0 %v1846, 127
        %v1909 = vpop.permute.xlu0 %1908
        %1910 = vrot.lane.b32.xlu0 %v1848, 127
        %v1911 = vpop.permute.xlu0 %1910
        %v1912 = vsel %vm415, %v1909, %v1911
        %v1913 = vsel %vm415, %v1911, %v1909
        %v1914 = vmul.f32 %v1912, %v419
        %v1915 = vmul.f32 %v1913, %v420
        %v1916 = vadd.f32 %v1906, %v1914
        %v1917 = vadd.f32 %v1907, %v1915
        %1918 = vrot.lane.b32.xlu0 %v1852, 113
        %v1919 = vpop.permute.xlu0 %1918
        %1920 = vrot.lane.b32.xlu0 %v1854, 113
        %v1921 = vpop.permute.xlu0 %1920
        %v1922 = vsel %vm429, %v1919, %v1921
        %v1923 = vsel %vm429, %v1921, %v1919
        %v1924 = vmul.f32 %v1922, %v433
        %v1925 = vmul.f32 %v1923, %v434
        %v1926 = vadd.f32 %v1916, %v1924
        %v1927 = vadd.f32 %v1917, %v1925
        %1928 = vrot.lane.b32.xlu0 %v1858, 112
        %v1929 = vpop.permute.xlu0 %1928
        %1930 = vrot.lane.b32.xlu0 %v1860, 112
        %v1931 = vpop.permute.xlu0 %1930
        %v1932 = vsel %vm443, %v1929, %v1931
        %v1933 = vsel %vm443, %v1931, %v1929
        %v1934 = vmul.f32 %v1932, %v447
        %v1935 = vmul.f32 %v1933, %v448
        %v1936 = vadd.f32 %v1926, %v1934
        %v1937 = vadd.f32 %v1927, %v1935
        %1938 = vrot.lane.b32.xlu0 %v1864, 111
        %v1939 = vpop.permute.xlu0 %1938
        %1940 = vrot.lane.b32.xlu0 %v1866, 111
        %v1941 = vpop.permute.xlu0 %1940
        %v1942 = vsel %vm457, %v1939, %v1941
        %v1943 = vsel %vm457, %v1941, %v1939
        %v1944 = vmul.f32 %v1942, %v461
        %v1945 = vmul.f32 %v1943, %v462
        %v1946 = vadd.f32 %v1936, %v1944
        %v1947 = vadd.f32 %v1937, %v1945
        %s1948 = scalar_lea.vmem %s2, 48
        %v1949 = vld [vmem:[%s1948] sm:$0xff]
        %1951 = vset.pattern.permute.xlu0 0
        %1952 = vperm.xlu0 %1951, %v1949
        %v1953 = vpop.permute.xlu0 %1952
        %v1955 = vadd.f32 %v1946, %v1953
        %v1956 = vadd.f32 %v1947, %v1953
        %v1957 = vmax.f32 %v1955, 0.0
        %v1958 = vmax.f32 %v1956, 0.0
        %s1959 = scalar_lea.vmem %s1, 504
        %v1960 = vld [vmem:[%s1959] sm:$0xff]
        %v1961 = vld [vmem:[%s1959 + $0x8] sm:$0xff]
        %v1962 = vld [vmem:[%s1959 + $0x10] sm:$0xff]
        %v1963 = vld [vmem:[%s1959 + $0x18] sm:$0xff]
        %v1964 = vld [vmem:[%s1959 + $0x20] sm:$0xff]
        %v1965 = vld [vmem:[%s1959 + $0x28] sm:$0xff]
        %v1966 = vld [vmem:[%s1959 + $0x30] sm:$0xff]
        %v1967 = vld [vmem:[%s1959 + $0x38] sm:$0xff]
        %v1968 = vld [vmem:[%s1959 + $0x40] sm:$0xff]
        %v1970 = vsel %vm207, %v1960, 0
        %v1973 = vsel %vm207, %v1961, 0
        %v1976 = vsel %vm207, %v1962, 0
        %v1979 = vsel %vm207, %v1963, 0
        %v1982 = vsel %vm207, %v1964, 0
        %v1985 = vsel %vm207, %v1965, 0
        %v1988 = vsel %vm207, %v1966, 0
        %v1991 = vsel %vm207, %v1967, 0
        %v1994 = vsel %vm207, %v1968, 0
        %1996 = vmatprep.subr.mxu0 0.0
        %1997 = vmatpush1.msra.mxu0 0.0
        %1998 = vmatprep.subr.mxu0 0.0
        %1999 = vmatpush1.msra.mxu0 0.0
        %2000 = vmatprep.subr.mxu0 0.0
        %2001 = vmatpush1.msra.mxu0 0.0
        %2002 = vmatprep.subr.mxu0 0.0
        %2003 = vmatpush1.msra.mxu0 0.0
        %2004 = vmatprep.subr.mxu0 0.0
        %2005 = vmatpush1.msra.mxu0 0.0
        %2006 = vmatprep.subr.mxu0 0.0
        %2007 = vmatpush1.msra.mxu0 0.0
        %2008 = vmatprep.subr.mxu0 0.0
        %2009 = vmatpush1.msra.mxu0 0.0
        %2010 = vmatprep.subr.mxu0 0.0
        %2011 = vmatpush1.msra.mxu0 0.0
        %2012 = vmatprep.subr.mxu0 0.0
        %2013 = vmatpush1.msra.mxu0 0.0
        %2014 = vmatprep.subr.mxu0 0.0
        %2015 = vmatpush1.msra.mxu0 0.0
        %2016 = vmatprep.subr.mxu0 0.0
        %2017 = vmatpush1.msra.mxu0 0.0
        %2018 = vmatprep.subr.mxu0 0.0
        %2019 = vmatpush1.msra.mxu0 0.0
        %2020 = vmatprep.subr.mxu0 0.0
        %2021 = vmatpush1.msra.mxu0 0.0
        %2022 = vmatprep.subr.mxu0 0.0
        %2023 = vmatpush1.msra.mxu0 0.0
        %2024 = vmatprep.subr.mxu0 0.0
        %2025 = vmatpush1.msra.mxu0 0.0
        %2026 = vmatprep.subr.mxu0 %v1958
        %2027 = vmatpush1.msra.mxu0 %v1957
        %2028 = vmatprep.subr.mxu0 0.0
        %2029 = vmatpush2.msra.mxu0 0.0
        %2030 = vmatprep.subr.mxu0 0.0
        %2031 = vmatpush2.msra.mxu0 0.0
        %2032 = vmatprep.subr.mxu0 0.0
        %2033 = vmatpush2.msra.mxu0 0.0
        %2034 = vmatprep.subr.mxu0 0.0
        %2035 = vmatpush2.msra.mxu0 0.0
        %2036 = vmatprep.subr.mxu0 0.0
        %2037 = vmatpush2.msra.mxu0 0.0
        %2038 = vmatprep.subr.mxu0 0.0
        %2039 = vmatpush2.msra.mxu0 0.0
        %2040 = vmatprep.subr.mxu0 0.0
        %2041 = vmatpush2.msra.mxu0 0.0
        %2042 = vmatprep.subr.mxu0 0.0
        %2043 = vmatpush2.msra.mxu0 0.0
        %2044 = vmatprep.subr.mxu0 0.0
        %2045 = vmatpush2.msra.mxu0 0.0
        %2046 = vmatprep.subr.mxu0 0.0
        %2047 = vmatpush2.msra.mxu0 0.0
        %2048 = vmatprep.subr.mxu0 0.0
        %2049 = vmatpush2.msra.mxu0 0.0
        %2050 = vmatprep.subr.mxu0 0.0
        %2051 = vmatpush2.msra.mxu0 0.0
        %2052 = vmatprep.subr.mxu0 0.0
        %2053 = vmatpush2.msra.mxu0 0.0
        %2054 = vmatprep.subr.mxu0 0.0
        %2055 = vmatpush2.msra.mxu0 0.0
        %2056 = vmatprep.subr.mxu0 0.0
        %2057 = vmatpush2.msra.mxu0 0.0
        %2058 = vmatprep.subr.mxu0 0.0
        %2059 = vmatpush2.msra.mxu0 0.0
        %2060 = vmatprep.mubr.f32.mxu0 0.0
        %2061 = vmatmul.mubr.f32.gmra.mxu0 %v1970
        %v2062 = vpop.f32.mrf.mxu0
        %v2063 = vadd.f32 0.0, %v2062
        %v2064 = vpop.f32.mrf.mxu0
        %v2065 = vadd.f32 0.0, %v2064
        %2066 = vmatprep.mubr.f32.mxu0 0.0
        %2067 = vmatmul.mubr.f32.gmra.mxu0 %v1973
        %v2068 = vpop.f32.mrf.mxu0
        %v2069 = vadd.f32 0.0, %v2068
        %v2070 = vpop.f32.mrf.mxu0
        %v2071 = vadd.f32 0.0, %v2070
        %2072 = vmatprep.mubr.f32.mxu0 0.0
        %2073 = vmatmul.mubr.f32.gmra.mxu0 %v1976
        %v2074 = vpop.f32.mrf.mxu0
        %v2075 = vadd.f32 0.0, %v2074
        %v2076 = vpop.f32.mrf.mxu0
        %v2077 = vadd.f32 0.0, %v2076
        %2078 = vmatprep.mubr.f32.mxu0 0.0
        %2079 = vmatmul.mubr.f32.gmra.mxu0 %v1979
        %v2080 = vpop.f32.mrf.mxu0
        %v2081 = vadd.f32 0.0, %v2080
        %v2082 = vpop.f32.mrf.mxu0
        %v2083 = vadd.f32 0.0, %v2082
        %2084 = vmatprep.mubr.f32.mxu0 0.0
        %2085 = vmatmul.mubr.f32.gmra.mxu0 %v1982
        %v2086 = vpop.f32.mrf.mxu0
        %v2087 = vadd.f32 0.0, %v2086
        %v2088 = vpop.f32.mrf.mxu0
        %v2089 = vadd.f32 0.0, %v2088
        %2090 = vmatprep.mubr.f32.mxu0 0.0
        %2091 = vmatmul.mubr.f32.gmra.mxu0 %v1985
        %v2092 = vpop.f32.mrf.mxu0
        %v2093 = vadd.f32 0.0, %v2092
        %v2094 = vpop.f32.mrf.mxu0
        %v2095 = vadd.f32 0.0, %v2094
        %2096 = vmatprep.mubr.f32.mxu0 0.0
        %2097 = vmatmul.mubr.f32.gmra.mxu0 %v1988
        %v2098 = vpop.f32.mrf.mxu0
        %v2099 = vadd.f32 0.0, %v2098
        %v2100 = vpop.f32.mrf.mxu0
        %v2101 = vadd.f32 0.0, %v2100
        %2102 = vmatprep.mubr.f32.mxu0 0.0
        %2103 = vmatmul.mubr.f32.gmra.mxu0 %v1991
        %v2104 = vpop.f32.mrf.mxu0
        %v2105 = vadd.f32 0.0, %v2104
        %v2106 = vpop.f32.mrf.mxu0
        %v2107 = vadd.f32 0.0, %v2106
        %2108 = vmatprep.mubr.f32.mxu0 0.0
        %2109 = vmatmul.mubr.f32.gmra.mxu0 %v1994
        %v2110 = vpop.f32.mrf.mxu0
        %v2111 = vadd.f32 0.0, %v2110
        %v2112 = vpop.f32.mrf.mxu0
        %v2113 = vadd.f32 0.0, %v2112
        %2114 = vdwg.mxu0
        %2115 = vrot.lane.b32.xlu0 %v2063, 17
        %v2116 = vpop.permute.xlu0 %2115
        %2117 = vrot.lane.b32.xlu0 %v2065, 17
        %v2118 = vpop.permute.xlu0 %2117
        %v2119 = vsel %vm360, %v2116, %v2118
        %v2120 = vsel %vm360, %v2118, %v2116
        %v2121 = vmul.f32 %v2120, %v363
        %v2122 = vmul.f32 %v2119, %v364
        %2123 = vrot.lane.b32.xlu0 %v2069, 16
        %v2124 = vpop.permute.xlu0 %2123
        %2125 = vrot.lane.b32.xlu0 %v2071, 16
        %v2126 = vpop.permute.xlu0 %2125
        %v2127 = vsel %vm371, %v2124, %v2126
        %v2128 = vsel %vm371, %v2126, %v2124
        %v2129 = vmul.f32 %v2128, %v375
        %v2130 = vmul.f32 %v2127, %v376
        %v2131 = vadd.f32 %v2121, %v2129
        %v2132 = vadd.f32 %v2122, %v2130
        %2133 = vrot.lane.b32.xlu0 %v2075, 15
        %v2134 = vpop.permute.xlu0 %2133
        %2135 = vrot.lane.b32.xlu0 %v2077, 15
        %v2136 = vpop.permute.xlu0 %2135
        %v2137 = vsel %vm385, %v2134, %v2136
        %v2138 = vsel %vm385, %v2136, %v2134
        %v2139 = vmul.f32 %v2138, %v389
        %v2140 = vmul.f32 %v2137, %v390
        %v2141 = vadd.f32 %v2131, %v2139
        %v2142 = vadd.f32 %v2132, %v2140
        %2143 = vrot.lane.b32.xlu0 %v2081, 1
        %v2144 = vpop.permute.xlu0 %2143
        %2145 = vrot.lane.b32.xlu0 %v2083, 1
        %v2146 = vpop.permute.xlu0 %2145
        %v2147 = vsel %vm399, %v2144, %v2146
        %v2148 = vsel %vm399, %v2146, %v2144
        %v2149 = vmul.f32 %v2148, %v403
        %v2150 = vmul.f32 %v2147, %v404
        %v2151 = vadd.f32 %v2141, %v2149
        %v2152 = vadd.f32 %v2142, %v2150
        %v2153 = vadd.f32 %v2151, %v2087
        %v2154 = vadd.f32 %v2152, %v2089
        %2155 = vrot.lane.b32.xlu0 %v2093, 127
        %v2156 = vpop.permute.xlu0 %2155
        %2157 = vrot.lane.b32.xlu0 %v2095, 127
        %v2158 = vpop.permute.xlu0 %2157
        %v2159 = vsel %vm415, %v2156, %v2158
        %v2160 = vsel %vm415, %v2158, %v2156
        %v2161 = vmul.f32 %v2159, %v419
        %v2162 = vmul.f32 %v2160, %v420
        %v2163 = vadd.f32 %v2153, %v2161
        %v2164 = vadd.f32 %v2154, %v2162
        %2165 = vrot.lane.b32.xlu0 %v2099, 113
        %v2166 = vpop.permute.xlu0 %2165
        %2167 = vrot.lane.b32.xlu0 %v2101, 113
        %v2168 = vpop.permute.xlu0 %2167
        %v2169 = vsel %vm429, %v2166, %v2168
        %v2170 = vsel %vm429, %v2168, %v2166
        %v2171 = vmul.f32 %v2169, %v433
        %v2172 = vmul.f32 %v2170, %v434
        %v2173 = vadd.f32 %v2163, %v2171
        %v2174 = vadd.f32 %v2164, %v2172
        %2175 = vrot.lane.b32.xlu0 %v2105, 112
        %v2176 = vpop.permute.xlu0 %2175
        %2177 = vrot.lane.b32.xlu0 %v2107, 112
        %v2178 = vpop.permute.xlu0 %2177
        %v2179 = vsel %vm443, %v2176, %v2178
        %v2180 = vsel %vm443, %v2178, %v2176
        %v2181 = vmul.f32 %v2179, %v447
        %v2182 = vmul.f32 %v2180, %v448
        %v2183 = vadd.f32 %v2173, %v2181
        %v2184 = vadd.f32 %v2174, %v2182
        %2185 = vrot.lane.b32.xlu0 %v2111, 111
        %v2186 = vpop.permute.xlu0 %2185
        %2187 = vrot.lane.b32.xlu0 %v2113, 111
        %v2188 = vpop.permute.xlu0 %2187
        %v2189 = vsel %vm457, %v2186, %v2188
        %v2190 = vsel %vm457, %v2188, %v2186
        %v2191 = vmul.f32 %v2189, %v461
        %v2192 = vmul.f32 %v2190, %v462
        %v2193 = vadd.f32 %v2183, %v2191
        %v2194 = vadd.f32 %v2184, %v2192
        %s2195 = scalar_lea.vmem %s2, 56
        %v2196 = vld [vmem:[%s2195] sm:$0xff]
        %2198 = vset.pattern.permute.xlu0 0
        %2199 = vperm.xlu0 %2198, %v2196
        %v2200 = vpop.permute.xlu0 %2199
        %v2202 = vadd.f32 %v2193, %v2200
        %v2203 = vadd.f32 %v2194, %v2200
        %v2204 = vmax.f32 %v2202, 0.0
        %v2205 = vmax.f32 %v2203, 0.0
        %s2206 = scalar_lea.vmem %s1, 576
        %v2207 = vld [vmem:[%s2206] sm:$0xff]
        %v2208 = vld [vmem:[%s2206 + $0x8] sm:$0xff]
        %v2209 = vld [vmem:[%s2206 + $0x10] sm:$0xff]
        %v2210 = vld [vmem:[%s2206 + $0x18] sm:$0xff]
        %v2211 = vld [vmem:[%s2206 + $0x20] sm:$0xff]
        %v2212 = vld [vmem:[%s2206 + $0x28] sm:$0xff]
        %v2213 = vld [vmem:[%s2206 + $0x30] sm:$0xff]
        %v2214 = vld [vmem:[%s2206 + $0x38] sm:$0xff]
        %v2215 = vld [vmem:[%s2206 + $0x40] sm:$0xff]
        %v2217 = vsel %vm207, %v2207, 0
        %v2220 = vsel %vm207, %v2208, 0
        %v2223 = vsel %vm207, %v2209, 0
        %v2226 = vsel %vm207, %v2210, 0
        %v2229 = vsel %vm207, %v2211, 0
        %v2232 = vsel %vm207, %v2212, 0
        %v2235 = vsel %vm207, %v2213, 0
        %v2238 = vsel %vm207, %v2214, 0
        %v2241 = vsel %vm207, %v2215, 0
        %2243 = vmatprep.subr.mxu0 0.0
        %2244 = vmatpush1.msra.mxu0 0.0
        %2245 = vmatprep.subr.mxu0 0.0
        %2246 = vmatpush1.msra.mxu0 0.0
        %2247 = vmatprep.subr.mxu0 0.0
        %2248 = vmatpush1.msra.mxu0 0.0
        %2249 = vmatprep.subr.mxu0 0.0
        %2250 = vmatpush1.msra.mxu0 0.0
        %2251 = vmatprep.subr.mxu0 0.0
        %2252 = vmatpush1.msra.mxu0 0.0
        %2253 = vmatprep.subr.mxu0 0.0
        %2254 = vmatpush1.msra.mxu0 0.0
        %2255 = vmatprep.subr.mxu0 0.0
        %2256 = vmatpush1.msra.mxu0 0.0
        %2257 = vmatprep.subr.mxu0 0.0
        %2258 = vmatpush1.msra.mxu0 0.0
        %2259 = vmatprep.subr.mxu0 0.0
        %2260 = vmatpush1.msra.mxu0 0.0
        %2261 = vmatprep.subr.mxu0 0.0
        %2262 = vmatpush1.msra.mxu0 0.0
        %2263 = vmatprep.subr.mxu0 0.0
        %2264 = vmatpush1.msra.mxu0 0.0
        %2265 = vmatprep.subr.mxu0 0.0
        %2266 = vmatpush1.msra.mxu0 0.0
        %2267 = vmatprep.subr.mxu0 0.0
        %2268 = vmatpush1.msra.mxu0 0.0
        %2269 = vmatprep.subr.mxu0 0.0
        %2270 = vmatpush1.msra.mxu0 0.0
        %2271 = vmatprep.subr.mxu0 0.0
        %2272 = vmatpush1.msra.mxu0 0.0
        %2273 = vmatprep.subr.mxu0 %v2205
        %2274 = vmatpush1.msra.mxu0 %v2204
        %2275 = vmatprep.subr.mxu0 0.0
        %2276 = vmatpush2.msra.mxu0 0.0
        %2277 = vmatprep.subr.mxu0 0.0
        %2278 = vmatpush2.msra.mxu0 0.0
        %2279 = vmatprep.subr.mxu0 0.0
        %2280 = vmatpush2.msra.mxu0 0.0
        %2281 = vmatprep.subr.mxu0 0.0
        %2282 = vmatpush2.msra.mxu0 0.0
        %2283 = vmatprep.subr.mxu0 0.0
        %2284 = vmatpush2.msra.mxu0 0.0
        %2285 = vmatprep.subr.mxu0 0.0
        %2286 = vmatpush2.msra.mxu0 0.0
        %2287 = vmatprep.subr.mxu0 0.0
        %2288 = vmatpush2.msra.mxu0 0.0
        %2289 = vmatprep.subr.mxu0 0.0
        %2290 = vmatpush2.msra.mxu0 0.0
        %2291 = vmatprep.subr.mxu0 0.0
        %2292 = vmatpush2.msra.mxu0 0.0
        %2293 = vmatprep.subr.mxu0 0.0
        %2294 = vmatpush2.msra.mxu0 0.0
        %2295 = vmatprep.subr.mxu0 0.0
        %2296 = vmatpush2.msra.mxu0 0.0
        %2297 = vmatprep.subr.mxu0 0.0
        %2298 = vmatpush2.msra.mxu0 0.0
        %2299 = vmatprep.subr.mxu0 0.0
        %2300 = vmatpush2.msra.mxu0 0.0
        %2301 = vmatprep.subr.mxu0 0.0
        %2302 = vmatpush2.msra.mxu0 0.0
        %2303 = vmatprep.subr.mxu0 0.0
        %2304 = vmatpush2.msra.mxu0 0.0
        %2305 = vmatprep.subr.mxu0 0.0
        %2306 = vmatpush2.msra.mxu0 0.0
        %2307 = vmatprep.mubr.f32.mxu0 0.0
        %2308 = vmatmul.mubr.f32.gmra.mxu0 %v2217
        %v2309 = vpop.f32.mrf.mxu0
        %v2310 = vadd.f32 0.0, %v2309
        %v2311 = vpop.f32.mrf.mxu0
        %v2312 = vadd.f32 0.0, %v2311
        %2313 = vmatprep.mubr.f32.mxu0 0.0
        %2314 = vmatmul.mubr.f32.gmra.mxu0 %v2220
        %v2315 = vpop.f32.mrf.mxu0
        %v2316 = vadd.f32 0.0, %v2315
        %v2317 = vpop.f32.mrf.mxu0
        %v2318 = vadd.f32 0.0, %v2317
        %2319 = vmatprep.mubr.f32.mxu0 0.0
        %2320 = vmatmul.mubr.f32.gmra.mxu0 %v2223
        %v2321 = vpop.f32.mrf.mxu0
        %v2322 = vadd.f32 0.0, %v2321
        %v2323 = vpop.f32.mrf.mxu0
        %v2324 = vadd.f32 0.0, %v2323
        %2325 = vmatprep.mubr.f32.mxu0 0.0
        %2326 = vmatmul.mubr.f32.gmra.mxu0 %v2226
        %v2327 = vpop.f32.mrf.mxu0
        %v2328 = vadd.f32 0.0, %v2327
        %v2329 = vpop.f32.mrf.mxu0
        %v2330 = vadd.f32 0.0, %v2329
        %2331 = vmatprep.mubr.f32.mxu0 0.0
        %2332 = vmatmul.mubr.f32.gmra.mxu0 %v2229
        %v2333 = vpop.f32.mrf.mxu0
        %v2334 = vadd.f32 0.0, %v2333
        %v2335 = vpop.f32.mrf.mxu0
        %v2336 = vadd.f32 0.0, %v2335
        %2337 = vmatprep.mubr.f32.mxu0 0.0
        %2338 = vmatmul.mubr.f32.gmra.mxu0 %v2232
        %v2339 = vpop.f32.mrf.mxu0
        %v2340 = vadd.f32 0.0, %v2339
        %v2341 = vpop.f32.mrf.mxu0
        %v2342 = vadd.f32 0.0, %v2341
        %2343 = vmatprep.mubr.f32.mxu0 0.0
        %2344 = vmatmul.mubr.f32.gmra.mxu0 %v2235
        %v2345 = vpop.f32.mrf.mxu0
        %v2346 = vadd.f32 0.0, %v2345
        %v2347 = vpop.f32.mrf.mxu0
        %v2348 = vadd.f32 0.0, %v2347
        %2349 = vmatprep.mubr.f32.mxu0 0.0
        %2350 = vmatmul.mubr.f32.gmra.mxu0 %v2238
        %v2351 = vpop.f32.mrf.mxu0
        %v2352 = vadd.f32 0.0, %v2351
        %v2353 = vpop.f32.mrf.mxu0
        %v2354 = vadd.f32 0.0, %v2353
        %2355 = vmatprep.mubr.f32.mxu0 0.0
        %2356 = vmatmul.mubr.f32.gmra.mxu0 %v2241
        %v2357 = vpop.f32.mrf.mxu0
        %v2358 = vadd.f32 0.0, %v2357
        %v2359 = vpop.f32.mrf.mxu0
        %v2360 = vadd.f32 0.0, %v2359
        %2361 = vdwg.mxu0
        %2362 = vrot.lane.b32.xlu0 %v2310, 17
        %v2363 = vpop.permute.xlu0 %2362
        %2364 = vrot.lane.b32.xlu0 %v2312, 17
        %v2365 = vpop.permute.xlu0 %2364
        %v2366 = vsel %vm360, %v2363, %v2365
        %v2367 = vsel %vm360, %v2365, %v2363
        %v2368 = vmul.f32 %v2367, %v363
        %v2369 = vmul.f32 %v2366, %v364
        %2370 = vrot.lane.b32.xlu0 %v2316, 16
        %v2371 = vpop.permute.xlu0 %2370
        %2372 = vrot.lane.b32.xlu0 %v2318, 16
        %v2373 = vpop.permute.xlu0 %2372
        %v2374 = vsel %vm371, %v2371, %v2373
        %v2375 = vsel %vm371, %v2373, %v2371
        %v2376 = vmul.f32 %v2375, %v375
        %v2377 = vmul.f32 %v2374, %v376
        %v2378 = vadd.f32 %v2368, %v2376
        %v2379 = vadd.f32 %v2369, %v2377
        %2380 = vrot.lane.b32.xlu0 %v2322, 15
        %v2381 = vpop.permute.xlu0 %2380
        %2382 = vrot.lane.b32.xlu0 %v2324, 15
        %v2383 = vpop.permute.xlu0 %2382
        %v2384 = vsel %vm385, %v2381, %v2383
        %v2385 = vsel %vm385, %v2383, %v2381
        %v2386 = vmul.f32 %v2385, %v389
        %v2387 = vmul.f32 %v2384, %v390
        %v2388 = vadd.f32 %v2378, %v2386
        %v2389 = vadd.f32 %v2379, %v2387
        %2390 = vrot.lane.b32.xlu0 %v2328, 1
        %v2391 = vpop.permute.xlu0 %2390
        %2392 = vrot.lane.b32.xlu0 %v2330, 1
        %v2393 = vpop.permute.xlu0 %2392
        %v2394 = vsel %vm399, %v2391, %v2393
        %v2395 = vsel %vm399, %v2393, %v2391
        %v2396 = vmul.f32 %v2395, %v403
        %v2397 = vmul.f32 %v2394, %v404
        %v2398 = vadd.f32 %v2388, %v2396
        %v2399 = vadd.f32 %v2389, %v2397
        %v2400 = vadd.f32 %v2398, %v2334
        %v2401 = vadd.f32 %v2399, %v2336
        %2402 = vrot.lane.b32.xlu0 %v2340, 127
        %v2403 = vpop.permute.xlu0 %2402
        %2404 = vrot.lane.b32.xlu0 %v2342, 127
        %v2405 = vpop.permute.xlu0 %2404
        %v2406 = vsel %vm415, %v2403, %v2405
        %v2407 = vsel %vm415, %v2405, %v2403
        %v2408 = vmul.f32 %v2406, %v419
        %v2409 = vmul.f32 %v2407, %v420
        %v2410 = vadd.f32 %v2400, %v2408
        %v2411 = vadd.f32 %v2401, %v2409
        %2412 = vrot.lane.b32.xlu0 %v2346, 113
        %v2413 = vpop.permute.xlu0 %2412
        %2414 = vrot.lane.b32.xlu0 %v2348, 113
        %v2415 = vpop.permute.xlu0 %2414
        %v2416 = vsel %vm429, %v2413, %v2415
        %v2417 = vsel %vm429, %v2415, %v2413
        %v2418 = vmul.f32 %v2416, %v433
        %v2419 = vmul.f32 %v2417, %v434
        %v2420 = vadd.f32 %v2410, %v2418
        %v2421 = vadd.f32 %v2411, %v2419
        %2422 = vrot.lane.b32.xlu0 %v2352, 112
        %v2423 = vpop.permute.xlu0 %2422
        %2424 = vrot.lane.b32.xlu0 %v2354, 112
        %v2425 = vpop.permute.xlu0 %2424
        %v2426 = vsel %vm443, %v2423, %v2425
        %v2427 = vsel %vm443, %v2425, %v2423
        %v2428 = vmul.f32 %v2426, %v447
        %v2429 = vmul.f32 %v2427, %v448
        %v2430 = vadd.f32 %v2420, %v2428
        %v2431 = vadd.f32 %v2421, %v2429
        %2432 = vrot.lane.b32.xlu0 %v2358, 111
        %v2433 = vpop.permute.xlu0 %2432
        %2434 = vrot.lane.b32.xlu0 %v2360, 111
        %v2435 = vpop.permute.xlu0 %2434
        %v2436 = vsel %vm457, %v2433, %v2435
        %v2437 = vsel %vm457, %v2435, %v2433
        %v2438 = vmul.f32 %v2436, %v461
        %v2439 = vmul.f32 %v2437, %v462
        %v2440 = vadd.f32 %v2430, %v2438
        %v2441 = vadd.f32 %v2431, %v2439
        %s2442 = scalar_lea.vmem %s2, 64
        %v2443 = vld [vmem:[%s2442] sm:$0xff]
        %2445 = vset.pattern.permute.xlu0 0
        %2446 = vperm.xlu0 %2445, %v2443
        %v2447 = vpop.permute.xlu0 %2446
        %v2449 = vadd.f32 %v2440, %v2447
        %v2450 = vadd.f32 %v2441, %v2447
        %v2451 = vmax.f32 %v2449, 0.0
        %v2452 = vmax.f32 %v2450, 0.0
        %s2453 = scalar_lea.vmem %s1, 648
        %v2454 = vld [vmem:[%s2453] sm:$0xff]
        %v2455 = vld [vmem:[%s2453 + $0x8] sm:$0xff]
        %v2456 = vld [vmem:[%s2453 + $0x10] sm:$0xff]
        %v2457 = vld [vmem:[%s2453 + $0x18] sm:$0xff]
        %v2458 = vld [vmem:[%s2453 + $0x20] sm:$0xff]
        %v2459 = vld [vmem:[%s2453 + $0x28] sm:$0xff]
        %v2460 = vld [vmem:[%s2453 + $0x30] sm:$0xff]
        %v2461 = vld [vmem:[%s2453 + $0x38] sm:$0xff]
        %v2462 = vld [vmem:[%s2453 + $0x40] sm:$0xff]
        %v2464 = vsel %vm207, %v2454, 0
        %v2467 = vsel %vm207, %v2455, 0
        %v2470 = vsel %vm207, %v2456, 0
        %v2473 = vsel %vm207, %v2457, 0
        %v2476 = vsel %vm207, %v2458, 0
        %v2479 = vsel %vm207, %v2459, 0
        %v2482 = vsel %vm207, %v2460, 0
        %v2485 = vsel %vm207, %v2461, 0
        %v2488 = vsel %vm207, %v2462, 0
        %2490 = vmatprep.subr.mxu0 0.0
        %2491 = vmatpush1.msra.mxu0 0.0
        %2492 = vmatprep.subr.mxu0 0.0
        %2493 = vmatpush1.msra.mxu0 0.0
        %2494 = vmatprep.subr.mxu0 0.0
        %2495 = vmatpush1.msra.mxu0 0.0
        %2496 = vmatprep.subr.mxu0 0.0
        %2497 = vmatpush1.msra.mxu0 0.0
        %2498 = vmatprep.subr.mxu0 0.0
        %2499 = vmatpush1.msra.mxu0 0.0
        %2500 = vmatprep.subr.mxu0 0.0
        %2501 = vmatpush1.msra.mxu0 0.0
        %2502 = vmatprep.subr.mxu0 0.0
        %2503 = vmatpush1.msra.mxu0 0.0
        %2504 = vmatprep.subr.mxu0 0.0
        %2505 = vmatpush1.msra.mxu0 0.0
        %2506 = vmatprep.subr.mxu0 0.0
        %2507 = vmatpush1.msra.mxu0 0.0
        %2508 = vmatprep.subr.mxu0 0.0
        %2509 = vmatpush1.msra.mxu0 0.0
        %2510 = vmatprep.subr.mxu0 0.0
        %2511 = vmatpush1.msra.mxu0 0.0
        %2512 = vmatprep.subr.mxu0 0.0
        %2513 = vmatpush1.msra.mxu0 0.0
        %2514 = vmatprep.subr.mxu0 0.0
        %2515 = vmatpush1.msra.mxu0 0.0
        %2516 = vmatprep.subr.mxu0 0.0
        %2517 = vmatpush1.msra.mxu0 0.0
        %2518 = vmatprep.subr.mxu0 0.0
        %2519 = vmatpush1.msra.mxu0 0.0
        %2520 = vmatprep.subr.mxu0 %v2452
        %2521 = vmatpush1.msra.mxu0 %v2451
        %2522 = vmatprep.subr.mxu0 0.0
        %2523 = vmatpush2.msra.mxu0 0.0
        %2524 = vmatprep.subr.mxu0 0.0
        %2525 = vmatpush2.msra.mxu0 0.0
        %2526 = vmatprep.subr.mxu0 0.0
        %2527 = vmatpush2.msra.mxu0 0.0
        %2528 = vmatprep.subr.mxu0 0.0
        %2529 = vmatpush2.msra.mxu0 0.0
        %2530 = vmatprep.subr.mxu0 0.0
        %2531 = vmatpush2.msra.mxu0 0.0
        %2532 = vmatprep.subr.mxu0 0.0
        %2533 = vmatpush2.msra.mxu0 0.0
        %2534 = vmatprep.subr.mxu0 0.0
        %2535 = vmatpush2.msra.mxu0 0.0
        %2536 = vmatprep.subr.mxu0 0.0
        %2537 = vmatpush2.msra.mxu0 0.0
        %2538 = vmatprep.subr.mxu0 0.0
        %2539 = vmatpush2.msra.mxu0 0.0
        %2540 = vmatprep.subr.mxu0 0.0
        %2541 = vmatpush2.msra.mxu0 0.0
        %2542 = vmatprep.subr.mxu0 0.0
        %2543 = vmatpush2.msra.mxu0 0.0
        %2544 = vmatprep.subr.mxu0 0.0
        %2545 = vmatpush2.msra.mxu0 0.0
        %2546 = vmatprep.subr.mxu0 0.0
        %2547 = vmatpush2.msra.mxu0 0.0
        %2548 = vmatprep.subr.mxu0 0.0
        %2549 = vmatpush2.msra.mxu0 0.0
        %2550 = vmatprep.subr.mxu0 0.0
        %2551 = vmatpush2.msra.mxu0 0.0
        %2552 = vmatprep.subr.mxu0 0.0
        %2553 = vmatpush2.msra.mxu0 0.0
        %2554 = vmatprep.mubr.f32.mxu0 0.0
        %2555 = vmatmul.mubr.f32.gmra.mxu0 %v2464
        %v2556 = vpop.f32.mrf.mxu0
        %v2557 = vadd.f32 0.0, %v2556
        %v2558 = vpop.f32.mrf.mxu0
        %v2559 = vadd.f32 0.0, %v2558
        %2560 = vmatprep.mubr.f32.mxu0 0.0
        %2561 = vmatmul.mubr.f32.gmra.mxu0 %v2467
        %v2562 = vpop.f32.mrf.mxu0
        %v2563 = vadd.f32 0.0, %v2562
        %v2564 = vpop.f32.mrf.mxu0
        %v2565 = vadd.f32 0.0, %v2564
        %2566 = vmatprep.mubr.f32.mxu0 0.0
        %2567 = vmatmul.mubr.f32.gmra.mxu0 %v2470
        %v2568 = vpop.f32.mrf.mxu0
        %v2569 = vadd.f32 0.0, %v2568
        %v2570 = vpop.f32.mrf.mxu0
        %v2571 = vadd.f32 0.0, %v2570
        %2572 = vmatprep.mubr.f32.mxu0 0.0
        %2573 = vmatmul.mubr.f32.gmra.mxu0 %v2473
        %v2574 = vpop.f32.mrf.mxu0
        %v2575 = vadd.f32 0.0, %v2574
        %v2576 = vpop.f32.mrf.mxu0
        %v2577 = vadd.f32 0.0, %v2576
        %2578 = vmatprep.mubr.f32.mxu0 0.0
        %2579 = vmatmul.mubr.f32.gmra.mxu0 %v2476
        %v2580 = vpop.f32.mrf.mxu0
        %v2581 = vadd.f32 0.0, %v2580
        %v2582 = vpop.f32.mrf.mxu0
        %v2583 = vadd.f32 0.0, %v2582
        %2584 = vmatprep.mubr.f32.mxu0 0.0
        %2585 = vmatmul.mubr.f32.gmra.mxu0 %v2479
        %v2586 = vpop.f32.mrf.mxu0
        %v2587 = vadd.f32 0.0, %v2586
        %v2588 = vpop.f32.mrf.mxu0
        %v2589 = vadd.f32 0.0, %v2588
        %2590 = vmatprep.mubr.f32.mxu0 0.0
        %2591 = vmatmul.mubr.f32.gmra.mxu0 %v2482
        %v2592 = vpop.f32.mrf.mxu0
        %v2593 = vadd.f32 0.0, %v2592
        %v2594 = vpop.f32.mrf.mxu0
        %v2595 = vadd.f32 0.0, %v2594
        %2596 = vmatprep.mubr.f32.mxu0 0.0
        %2597 = vmatmul.mubr.f32.gmra.mxu0 %v2485
        %v2598 = vpop.f32.mrf.mxu0
        %v2599 = vadd.f32 0.0, %v2598
        %v2600 = vpop.f32.mrf.mxu0
        %v2601 = vadd.f32 0.0, %v2600
        %2602 = vmatprep.mubr.f32.mxu0 0.0
        %2603 = vmatmul.mubr.f32.gmra.mxu0 %v2488
        %v2604 = vpop.f32.mrf.mxu0
        %v2605 = vadd.f32 0.0, %v2604
        %v2606 = vpop.f32.mrf.mxu0
        %v2607 = vadd.f32 0.0, %v2606
        %2608 = vdwg.mxu0
        %2609 = vrot.lane.b32.xlu0 %v2557, 17
        %v2610 = vpop.permute.xlu0 %2609
        %2611 = vrot.lane.b32.xlu0 %v2559, 17
        %v2612 = vpop.permute.xlu0 %2611
        %v2613 = vsel %vm360, %v2610, %v2612
        %v2614 = vsel %vm360, %v2612, %v2610
        %v2615 = vmul.f32 %v2614, %v363
        %v2616 = vmul.f32 %v2613, %v364
        %2617 = vrot.lane.b32.xlu0 %v2563, 16
        %v2618 = vpop.permute.xlu0 %2617
        %2619 = vrot.lane.b32.xlu0 %v2565, 16
        %v2620 = vpop.permute.xlu0 %2619
        %v2621 = vsel %vm371, %v2618, %v2620
        %v2622 = vsel %vm371, %v2620, %v2618
        %v2623 = vmul.f32 %v2622, %v375
        %v2624 = vmul.f32 %v2621, %v376
        %v2625 = vadd.f32 %v2615, %v2623
        %v2626 = vadd.f32 %v2616, %v2624
        %2627 = vrot.lane.b32.xlu0 %v2569, 15
        %v2628 = vpop.permute.xlu0 %2627
        %2629 = vrot.lane.b32.xlu0 %v2571, 15
        %v2630 = vpop.permute.xlu0 %2629
        %v2631 = vsel %vm385, %v2628, %v2630
        %v2632 = vsel %vm385, %v2630, %v2628
        %v2633 = vmul.f32 %v2632, %v389
        %v2634 = vmul.f32 %v2631, %v390
        %v2635 = vadd.f32 %v2625, %v2633
        %v2636 = vadd.f32 %v2626, %v2634
        %2637 = vrot.lane.b32.xlu0 %v2575, 1
        %v2638 = vpop.permute.xlu0 %2637
        %2639 = vrot.lane.b32.xlu0 %v2577, 1
        %v2640 = vpop.permute.xlu0 %2639
        %v2641 = vsel %vm399, %v2638, %v2640
        %v2642 = vsel %vm399, %v2640, %v2638
        %v2643 = vmul.f32 %v2642, %v403
        %v2644 = vmul.f32 %v2641, %v404
        %v2645 = vadd.f32 %v2635, %v2643
        %v2646 = vadd.f32 %v2636, %v2644
        %v2647 = vadd.f32 %v2645, %v2581
        %v2648 = vadd.f32 %v2646, %v2583
        %2649 = vrot.lane.b32.xlu0 %v2587, 127
        %v2650 = vpop.permute.xlu0 %2649
        %2651 = vrot.lane.b32.xlu0 %v2589, 127
        %v2652 = vpop.permute.xlu0 %2651
        %v2653 = vsel %vm415, %v2650, %v2652
        %v2654 = vsel %vm415, %v2652, %v2650
        %v2655 = vmul.f32 %v2653, %v419
        %v2656 = vmul.f32 %v2654, %v420
        %v2657 = vadd.f32 %v2647, %v2655
        %v2658 = vadd.f32 %v2648, %v2656
        %2659 = vrot.lane.b32.xlu0 %v2593, 113
        %v2660 = vpop.permute.xlu0 %2659
        %2661 = vrot.lane.b32.xlu0 %v2595, 113
        %v2662 = vpop.permute.xlu0 %2661
        %v2663 = vsel %vm429, %v2660, %v2662
        %v2664 = vsel %vm429, %v2662, %v2660
        %v2665 = vmul.f32 %v2663, %v433
        %v2666 = vmul.f32 %v2664, %v434
        %v2667 = vadd.f32 %v2657, %v2665
        %v2668 = vadd.f32 %v2658, %v2666
        %2669 = vrot.lane.b32.xlu0 %v2599, 112
        %v2670 = vpop.permute.xlu0 %2669
        %2671 = vrot.lane.b32.xlu0 %v2601, 112
        %v2672 = vpop.permute.xlu0 %2671
        %v2673 = vsel %vm443, %v2670, %v2672
        %v2674 = vsel %vm443, %v2672, %v2670
        %v2675 = vmul.f32 %v2673, %v447
        %v2676 = vmul.f32 %v2674, %v448
        %v2677 = vadd.f32 %v2667, %v2675
        %v2678 = vadd.f32 %v2668, %v2676
        %2679 = vrot.lane.b32.xlu0 %v2605, 111
        %v2680 = vpop.permute.xlu0 %2679
        %2681 = vrot.lane.b32.xlu0 %v2607, 111
        %v2682 = vpop.permute.xlu0 %2681
        %v2683 = vsel %vm457, %v2680, %v2682
        %v2684 = vsel %vm457, %v2682, %v2680
        %v2685 = vmul.f32 %v2683, %v461
        %v2686 = vmul.f32 %v2684, %v462
        %v2687 = vadd.f32 %v2677, %v2685
        %v2688 = vadd.f32 %v2678, %v2686
        %s2689 = scalar_lea.vmem %s2, 72
        %v2690 = vld [vmem:[%s2689] sm:$0xff]
        %2692 = vset.pattern.permute.xlu0 0
        %2693 = vperm.xlu0 %2692, %v2690
        %v2694 = vpop.permute.xlu0 %2693
        %v2696 = vadd.f32 %v2687, %v2694
        %v2697 = vadd.f32 %v2688, %v2694
        %v2698 = vmax.f32 %v2696, 0.0
        %v2699 = vmax.f32 %v2697, 0.0
        %v2700 = vadd.f32 %v2698, %v196
        %v2701 = vadd.f32 %v2699, %v197
        %2702 = vst [vmem:[%s190] sm:$0xff] %v2700
        %2703 = vst [vmem:[%s190 + $0x8] sm:$0xff] %v2701
        %s2704 = sand.u32 %s115, 1
        %s2705 = scalar_lea.sflag [#allocation3], %s2704
        %s2706 = sand.u32 %s115, 1
        %s2707 = smul.addr %s2706, 16
        %s2708 = scalar_lea.vmem [#allocation2], %s2707
        // Predicated region
        $region37: #{tpu_custom_call.1} parent=35 // pred_check
          %p2709 = pneg %p125
        $region38: #{tpu_custom_call.1} parent=35 // pred_check_branch
          %2711 = sbr.rel (%p2709) target = $region40
        $region39: #{tpu_custom_call.1} parent=35 // pred_region
          %s2713 = ssub.s32 256, 256
          %2714 = vsyncadd %s2705, %s2713
          %s2715 = smul.addr %s18, 2
          %s2716 = smul.addr %s2715, 128
          %s2717 = scalar_lea.hbm %s4, %s2716
          %s2719 = sshll.u32 %s2708, 4
          %s2720 = int_to_ptr.vmem [resolvable:$true] %s2719
          %2722 = dma.vmem_to_hbm [thread:$0]  %s2720, 256, %s2717, %s2705
        $region40: #{tpu_custom_call.1} parent=35 // pred_fallthru
          _
      $region36: #{tpu_custom_call.1} parent=5 // pred_fallthru
        _
      %p2723 = scmp.le.s32.totalorder 2, %s13
      // Predicated region
      $region41: #{tpu_custom_call.1} parent=5 // pred_check
        %p2724 = pneg %p2723
      $region42: #{tpu_custom_call.1} parent=5 // pred_check_branch
        %2726 = sbr.rel (%p2724) target = $region44
      $region43: #{tpu_custom_call.1} parent=5 // pred_region
        %s2727 = ssub.s32 %s13, 2
        // Predicated region
        $region45: #{tpu_custom_call.1} parent=43 // pred_check
          %p2728 = pneg %p131
        $region46: #{tpu_custom_call.1} parent=43 // pred_check_branch
          %2730 = sbr.rel (%p2728) target = $region48
        $region47: #{tpu_custom_call.1} parent=43 // pred_region
          %s2731 = sand.u32 %s116, 1
          %s2732 = scalar_lea.sflag [#allocation3], %s2731
          %s2733 = sand.u32 %s116, 1
          %s2734 = smul.addr %s2733, 16
          %s2735 = scalar_lea.vmem [#allocation2], %s2734
          %2736 = dma.done %s2732, 256
        $region48: #{tpu_custom_call.1} parent=43 // pred_fallthru
          _
      $region44: #{tpu_custom_call.1} parent=5 // pred_fallthru
        _
    $region6: #{tpu_custom_call.1} parent=1 // loop_footer
      %s17 = sadd.s32 1, %s13
    $region7: #{tpu_custom_call.1} parent=1 // loop_footer_branch
      %12 = sbr.rel target = $region3
    $region8: #{tpu_custom_call.1} parent=1 // loop_exit
      _
    %2737 = vsyncpa [#allocation3], 1
    %s2738 = scalar_lea.sflag [#allocation3], 1
    %2739 = vsyncpa %s2738, 1

</llo_original>
